<compile_context>
chip_gen: v5e
topology: v5e:2x2
jax: 0.10.0
libtpu: 0.0.40
codegen_flags: <defaults>
</compile_context>

<pallas_src>
import functools

import jax
import jax.numpy as jnp
from jax.experimental import pallas as pl
from jax.experimental.pallas import tpu as pltpu

N_ATOM_EMBED = 128   # fixed in DistNN.__init__
N_RDF_EMBED = 128
N_BDF_EMBED = 128
BN_EPS = 1e-5

ROW_BLOCK = 256                  # row tile; <=512 keeps v7x's 64 MiB VMEM comfortable
VMEM_LIMIT = 48 * 1024 * 1024    # explicit scoped-VMEM cap (v5e default is only 16 MiB)


def _round_up(x, m):
    return ((x + m - 1) // m) * m


def _pad_rows(a, n_pad):
    n = a.shape[0]
    if n == n_pad:
        return a
    pad = [(0, n_pad - n)] + [(0, 0)] * (a.ndim - 1)
    return jnp.pad(a, pad)


# ---------------------------------------------------------------------------
# Pallas kernels
# ---------------------------------------------------------------------------
def _apply_act(z, act):
    if act == "relu":
        return jnp.maximum(z, 0.0)
    if act == "relu6":
        return jnp.clip(z, 0.0, 6.0)
    return z


def _linear_act_kernel(x_ref, w_ref, b_ref, o_ref, *, act):
    z = jnp.dot(x_ref[...], w_ref[...], preferred_element_type=jnp.float32)
    o_ref[...] = _apply_act(z + b_ref[...], act).astype(o_ref.dtype)


def linear_act(x, w, b, act="none", mxu_dtype=jnp.bfloat16):
    """y = act(x @ w + b); row-tiled, bf16 MXU inputs (f32 accumulate)."""
    m, k = x.shape
    n = w.shape[1]
    bm = min(ROW_BLOCK, _round_up(m, 8))
    m_pad = _round_up(m, bm)
    xp = _pad_rows(x, m_pad).astype(mxu_dtype)
    out = pl.pallas_call(
        functools.partial(_linear_act_kernel, act=act),
        out_shape=jax.ShapeDtypeStruct((m_pad, n), jnp.float32),
        grid=(m_pad // bm,),
        in_specs=[
            pl.BlockSpec((bm, k), lambda i: (i, 0)),
            pl.BlockSpec((k, n), lambda i: (0, 0)),
            pl.BlockSpec((1, n), lambda i: (0, 0)),
        ],
        out_specs=pl.BlockSpec((bm, n), lambda i: (i, 0)),
        compiler_params=pltpu.CompilerParams(
            dimension_semantics=("parallel",), vmem_limit_bytes=VMEM_LIMIT),
    )(xp, w.astype(mxu_dtype), b.reshape(1, n).astype(jnp.float32))
    return out[:m]


def _linear_act2_kernel(x1_ref, x2_ref, w1_ref, w2_ref, b_ref, o_ref, *, act):
    z = jnp.dot(x1_ref[...], w1_ref[...], preferred_element_type=jnp.float32)
    z = z + jnp.dot(x2_ref[...], w2_ref[...], preferred_element_type=jnp.float32)
    o_ref[...] = _apply_act(z + b_ref[...], act).astype(o_ref.dtype)


def linear_act2(x1, x2, w1, w2, b, act="none", mxu_dtype=jnp.bfloat16):
    """y = act(x1 @ w1 + x2 @ w2 + b): fused 'concat-then-Linear' without the concat."""
    m, k1 = x1.shape
    k2 = x2.shape[1]
    n = w1.shape[1]
    bm = min(ROW_BLOCK, _round_up(m, 8))
    m_pad = _round_up(m, bm)
    x1p = _pad_rows(x1, m_pad).astype(mxu_dtype)
    x2p = _pad_rows(x2, m_pad).astype(mxu_dtype)
    out = pl.pallas_call(
        functools.partial(_linear_act2_kernel, act=act),
        out_shape=jax.ShapeDtypeStruct((m_pad, n), jnp.float32),
        grid=(m_pad // bm,),
        in_specs=[
            pl.BlockSpec((bm, k1), lambda i: (i, 0)),
            pl.BlockSpec((bm, k2), lambda i: (i, 0)),
            pl.BlockSpec((k1, n), lambda i: (0, 0)),
            pl.BlockSpec((k2, n), lambda i: (0, 0)),
            pl.BlockSpec((1, n), lambda i: (0, 0)),
        ],
        out_specs=pl.BlockSpec((bm, n), lambda i: (i, 0)),
        compiler_params=pltpu.CompilerParams(
            dimension_semantics=("parallel",), vmem_limit_bytes=VMEM_LIMIT),
    )(x1p, x2p, w1.astype(mxu_dtype), w2.astype(mxu_dtype),
      b.reshape(1, n).astype(jnp.float32))
    return out[:m]


def _dist_layer_kernel(atom_ref, nbr_ref, x_ref, w1s_ref, w1n_ref, b1_ref,
                       s2_ref, t2_ref, o_ref, zself_ref, acc_ref):
    # grid = (row_blocks [parallel], n_nbr [arbitrary / reduction])
    j = pl.program_id(1)
    half = acc_ref.shape[-1]

    @pl.when(j == 0)
    def _init():
        # Self half of fc1 (+ folded bias & bn1 shift): computed ONCE per row block.
        zself_ref[...] = (
            jnp.dot(atom_ref[...], w1s_ref[...],
                    preferred_element_type=jnp.float32) + b1_ref[...])
        acc_ref[...] = jnp.zeros_like(acc_ref)

    # Neighbor half of fc1, then relu(bn1(fc1(h)))  (bn1 scale/shift folded in).
    z = zself_ref[...] + jnp.dot(nbr_ref[...], w1n_ref[...],
                                 preferred_element_type=jnp.float32)
    z = jnp.maximum(z, 0.0)
    h1 = z[:, :half]
    h2 = z[:, half:]
    m = jnp.max(h1, axis=-1, keepdims=True)               # softmax over channel dim
    e = jnp.exp(h1 - m)
    sm = e * pl.reciprocal(jnp.sum(e, axis=-1, keepdims=True), approx=True)
    sp = jnp.maximum(h2, 0.0) + jnp.log1p(jnp.exp(-jnp.abs(h2)))   # softplus
    acc_ref[...] += sm * sp                                # sum over neighbors

    @pl.when(j == pl.num_programs(1) - 1)
    def _finalize():
        y = acc_ref[...] * s2_ref[...] + t2_ref[...] + x_ref[...]   # bn2 (eval) + residual
        o_ref[...] = jnp.maximum(y, 0.0).astype(o_ref.dtype)


def dist_layer_core(atom_feat, nbr_feat3, x, p):
    """atom_feat (n_data, fin), nbr_feat3 (n_nbr, n_data, fin), x (n_data, 2*n_ae)."""
    n_nbr, n_data, fin = nbr_feat3.shape
    nout = p["w1s"].shape[1]
    half = x.shape[1]
    bm = min(ROW_BLOCK, _round_up(n_data, 8))
    n_pad = _round_up(n_data, bm)
    nblk = n_pad // bm

    atom_p = _pad_rows(atom_feat, n_pad).astype(jnp.bfloat16)
    x_p = _pad_rows(x, n_pad).astype(jnp.float32)
    nbr_p = jnp.pad(nbr_feat3, ((0, 0), (0, n_pad - n_data), (0, 0)))
    nbr_flat = nbr_p.reshape(n_nbr * n_pad, fin).astype(jnp.bfloat16)   # neighbor-major

    out = pl.pallas_call(
        _dist_layer_kernel,
        out_shape=jax.ShapeDtypeStruct((n_pad, half), jnp.float32),
        grid=(nblk, n_nbr),
        in_specs=[
            pl.BlockSpec((bm, fin), lambda i, j: (i, 0)),              # atom (resident over j)
            pl.BlockSpec((bm, fin), lambda i, j: (j * nblk + i, 0)),   # this neighbor's rows
            pl.BlockSpec((bm, half), lambda i, j: (i, 0)),             # residual x
            pl.BlockSpec((fin, nout), lambda i, j: (0, 0)),            # w1 self-half (bn1 folded)
            pl.BlockSpec((fin, nout), lambda i, j: (0, 0)),            # w1 nbr-half  (bn1 folded)
            pl.BlockSpec((1, nout), lambda i, j: (0, 0)),              # folded bias
            pl.BlockSpec((1, half), lambda i, j: (0, 0)),              # bn2 scale
            pl.BlockSpec((1, half), lambda i, j: (0, 0)),              # bn2 shift
        ],
        out_specs=pl.BlockSpec((bm, half), lambda i, j: (i, 0)),
        scratch_shapes=[pltpu.VMEM((bm, nout), jnp.float32),           # z_self
                        pltpu.VMEM((bm, half), jnp.float32)],          # neighbor accumulator
        compiler_params=pltpu.CompilerParams(
            dimension_semantics=("parallel", "arbitrary"),
            vmem_limit_bytes=VMEM_LIMIT),
    )(atom_p, nbr_flat, x_p, p["w1s"], p["w1n"], p["b1"], p["s2"], p["t2"])
    return out[:n_data]


# ---------------------------------------------------------------------------
# Deterministic parameter construction (synthetic; no checkpoints)
# ---------------------------------------------------------------------------
def _linear_params(key, fan_in, fan_out):
    kw, kb = jax.random.split(key)
    bound = 1.0 / float(fan_in) ** 0.5
    w = jax.random.uniform(kw, (fan_in, fan_out), jnp.float32, -bound, bound)
    b = jax.random.uniform(kb, (fan_out,), jnp.float32, -bound, bound)
    return w, b


def _bn_params(key, n):
    k1, k2, k3, k4 = jax.random.split(key, 4)
    gamma = 1.0 + 0.1 * jax.random.normal(k1, (n,), jnp.float32)
    beta = 0.1 * jax.random.normal(k2, (n,), jnp.float32)
    mean = 0.1 * jax.random.normal(k3, (n,), jnp.float32)
    var = 1.0 + 0.1 * jnp.abs(jax.random.normal(k4, (n,), jnp.float32))
    scale = gamma / jnp.sqrt(var + BN_EPS)
    shift = beta - mean * scale
    return scale, shift


def _dist_layer_params(key, n_de, n_ae):
    """fc1 with bn1 (eval) folded in; weight split into self / neighbor halves, bf16."""
    k1, k2, k3 = jax.random.split(key, 3)
    fin_half = n_ae * 2 + n_de
    nout = n_ae * 4
    w1, b1 = _linear_params(k1, fin_half * 2, nout)
    s1, t1 = _bn_params(k2, nout)
    s2, t2 = _bn_params(k3, n_ae * 2)
    w1f = w1 * s1[None, :]           # fold bn1 scale into fc1 weights (f32 math, then bf16)
    b1f = b1 * s1 + t1
    return dict(
        w1s=w1f[:fin_half].astype(jnp.bfloat16),
        w1n=w1f[fin_half:].astype(jnp.bfloat16),
        b1=b1f.reshape(1, nout),
        s2=s2.reshape(1, n_ae * 2),
        t2=t2.reshape(1, n_ae * 2),
    )


def _module_dist_layers_params(key, n_ae, n_re, n_be):
    k1, k2, k3 = jax.random.split(key, 3)
    return dict(
        rdf=_dist_layer_params(k1, n_re, n_ae),
        bdf=_dist_layer_params(k2, n_be, n_ae),
        fc1=_linear_params(k3, n_ae * 4, n_ae * 2),
    )


def init_distnn_params(key, n_af, n_rf, n_bf):
    keys = jax.random.split(key, 8)
    return dict(
        embed_atom=_linear_params(keys[0], n_af, N_ATOM_EMBED),
        embed_rdf=_linear_params(keys[1], n_rf, N_RDF_EMBED),
        embed_bdf=_linear_params(keys[2], n_bf, N_BDF_EMBED),
        dist1=_module_dist_layers_params(keys[3], N_ATOM_EMBED, N_RDF_EMBED, N_BDF_EMBED),
        dist2=_module_dist_layers_params(keys[4], N_ATOM_EMBED, N_RDF_EMBED, N_BDF_EMBED),
        fc1=_linear_params(keys[5], N_ATOM_EMBED * 2 + 1, 16),
        fc2=_linear_params(keys[6], 16, 1),
        fc3=_linear_params(keys[7], 16, 1),   # defined in __init__, unused in forward
    )


# ---------------------------------------------------------------------------
# Forward pass (glue in plain JAX, hot paths in Pallas)
# ---------------------------------------------------------------------------
def _dist_layer_forward(p, x, dist_feat, atom_idx, ele_idx, nbr_idx, n_ele, n_atoms):
    n_ae = N_ATOM_EMBED
    # global_max_pool over element index, gathered back per row (plain-JAX glue)
    ele_pool = jax.ops.segment_max(x[:, n_ae:], ele_idx, num_segments=n_ele)
    ele_pool = jnp.where(jnp.isfinite(ele_pool), ele_pool, 0.0)   # empty-segment guard
    atom_feat = jnp.concatenate([x[:, :n_ae], ele_pool[ele_idx], dist_feat], axis=1)
    atom_pool = jax.ops.segment_max(atom_feat, atom_idx, num_segments=n_atoms)
    atom_pool = jnp.where(jnp.isfinite(atom_pool), atom_pool, 0.0)
    # neighbor features, neighbor-major: nbr_feat3[j, r] = atom_pool[nbr_idx[r, j]]
    nbr_feat3 = atom_pool[nbr_idx.T]                              # (n_nbr, n_data, 2*n_ae+n_de)
    # NOTE: the (n_data, n_nbr, 4*n_ae+2*n_de) tensor `h` of the reference is never
    # materialized; the kernel consumes atom_feat + nbr_feat with fc1 split in two.
    return dist_layer_core(atom_feat, nbr_feat3, x, p)


def _module_dist_layers_forward(p, x, rdf, bdf, atom_idx, ele_idx, nbr_idx, n_ele, n_atoms):
    x1 = _dist_layer_forward(p["rdf"], x, rdf, atom_idx, ele_idx, nbr_idx, n_ele, n_atoms)
    x2 = _dist_layer_forward(p["bdf"], x, bdf, atom_idx, ele_idx, nbr_idx, n_ele, n_atoms)
    w, b = p["fc1"]
    half = x1.shape[1]
    # relu(fc1(cat([x1, x2]))) without materializing the concat: two dots, one accumulator.
    return linear_act2(x1, x2, w[:half], w[half:], b, act="relu")


def distnn_forward(params, atom_feat, rdf_feat, bdf_feat, atom_idx, ele2_idx,
                   nbr_idx, graph_idx, ref_feat, n_ele, n_atoms, n_graphs, n_af):
    w_ea, b_ea = params["embed_atom"]
    w_er, b_er = params["embed_rdf"]
    w_eb, b_eb = params["embed_bdf"]
    atom_1 = linear_act(atom_feat[:, :n_af], w_ea, b_ea, act="relu")
    atom_2 = linear_act(atom_feat[:, n_af:], w_ea, b_ea, act="relu")
    x_rdf = linear_act(rdf_feat, w_er, b_er, act="relu6")
    x_bdf = linear_act(bdf_feat, w_eb, b_eb, act="relu6")
    h = jnp.concatenate([atom_1, atom_2], axis=1)               # (n_data, 2*n_ae)
    h = _module_dist_layers_forward(params["dist1"], h, x_rdf, x_bdf,
                                    atom_idx, ele2_idx, nbr_idx, n_ele, n_atoms)
    h = _module_dist_layers_forward(params["dist2"], h, x_rdf, x_bdf,
                                    atom_idx, ele2_idx, nbr_idx, n_ele, n_atoms)
    # global_mean_pool(h[:-1], graph_idx) — plain-JAX segment mean (glue)
    hm = h[:-1]
    sums = jax.ops.segment_sum(hm, graph_idx, num_segments=n_graphs)
    cnts = jax.ops.segment_sum(jnp.ones((hm.shape[0], 1), jnp.float32),
                               graph_idx, num_segments=n_graphs)
    pooled = sums / jnp.maximum(cnts, 1.0)                      # empty-graph guard
    w1, b1 = params["fc1"]
    w2, b2 = params["fc2"]
    # Tiny head layers kept in f32 (negligible cost; odd shapes K=257 / N=1).
    # TODO(synk): verify the reference head really applies relu to the regression output.
    h = linear_act(jnp.concatenate([pooled, ref_feat], axis=1), w1, b1,
                   act="relu", mxu_dtype=jnp.float32)
    out = linear_act(h, w2, b2, act="relu", mxu_dtype=jnp.float32)
    return out


# ---------------------------------------------------------------------------
if __name__ == "__main__":
    key = jax.random.PRNGKey(0)
    n_af, n_rf, n_bf = 8, 8, 8
    n_data, n_nbr = 32, 4
    n_atoms, n_ele, n_graphs = 8, 3, 2

    pkey, dkey = jax.random.split(key)
    params = init_distnn_params(pkey, n_af, n_rf, n_bf)

    ks = jax.random.split(dkey, 6)
    atom_feat = jax.random.normal(ks[0], (n_data, 2 * n_af), jnp.float32)
    rdf_feat = jax.random.normal(ks[1], (n_data, n_rf), jnp.float32)
    bdf_feat = jax.random.normal(ks[2], (n_data, n_bf), jnp.float32)
    atom_idx = jnp.arange(n_data, dtype=jnp.int32) % n_atoms       # segment ids
    ele2_idx = jnp.arange(n_data, dtype=jnp.int32) % n_ele
    nbr_idx = jax.random.randint(ks[3], (n_data, n_nbr), 0, n_atoms, dtype=jnp.int32)
    graph_idx = jnp.arange(n_data - 1, dtype=jnp.int32) % n_graphs
    ref_feat = jax.random.normal(ks[4], (n_graphs, 1), jnp.float32)

    fwd = jax.jit(distnn_forward, static_argnums=(9, 10, 11, 12))
    out = fwd(params, atom_feat, rdf_feat, bdf_feat, atom_idx, ele2_idx,
              nbr_idx, graph_idx, ref_feat, n_ele, n_atoms, n_graphs, n_af)
    jax.block_until_ready(out)
    assert out.shape == (n_graphs, 1)
    assert bool(jnp.all(jnp.isfinite(out)))
    print("KERNEL_OK")
</pallas_src>

<mosaic_0001>
module attributes {stable_mosaic.version = 11 : i64} {
  func.func @_linear_act_kernel(%arg0: i32, %arg1: memref<32x8xbf16, #tpu.memory_space<vmem>>, %arg2: memref<8x128xbf16, #tpu.memory_space<vmem>>, %arg3: memref<1x128xf32, #tpu.memory_space<vmem>>, %arg4: memref<32x128xf32, #tpu.memory_space<vmem>>) attributes {dimension_semantics = [#tpu.dimension_semantics<parallel>], iteration_bounds = array<i64: 1>, scalar_prefetch = 0 : i64, scratch_operands = 0 : i64, tpu.core_type = #tpu.core_type<tc>, window_params = [{transform_indices = @transform_0, window_bounds = array<i64: 32, 8>}, {pipeline_mode = #tpu.pipeline_mode<synchronous>, transform_indices = @transform_1, window_bounds = array<i64: 8, 128>}, {pipeline_mode = #tpu.pipeline_mode<synchronous>, transform_indices = @transform_2, window_bounds = array<i64: 1, 128>}, {transform_indices = @transform_3, window_bounds = array<i64: 32, 128>}]} {
    %c0 = arith.constant 0 : index
    %c0_0 = arith.constant 0 : index
    %0 = vector.load %arg1[%c0, %c0_0] : memref<32x8xbf16, #tpu.memory_space<vmem>>, vector<32x8xbf16>
    %c0_1 = arith.constant 0 : index
    %c0_2 = arith.constant 0 : index
    %1 = vector.load %arg2[%c0_1, %c0_2] : memref<8x128xbf16, #tpu.memory_space<vmem>>, vector<8x128xbf16>
    %cst = arith.constant dense<0.000000e+00> : vector<32x128xf32>
    %2 = tpu.matmul %0, %1, %cst {dimension_numbers = #tpu.dot_dimension_numbers<[1], [0], [0], [1], [0, 0, 1, 1], [], []>} : vector<32x8xbf16>, vector<8x128xbf16>, vector<32x128xf32> -> vector<32x128xf32>
    %c0_3 = arith.constant 0 : index
    %c0_4 = arith.constant 0 : index
    %3 = vector.load %arg3[%c0_3, %c0_4] : memref<1x128xf32, #tpu.memory_space<vmem>>, vector<1x128xf32>
    %4 = vector.broadcast %3 : vector<1x128xf32> to vector<32x128xf32>
    %5 = arith.addf %2, %4 : vector<32x128xf32>
    %cst_5 = arith.constant 0.000000e+00 : f32
    %6 = vector.broadcast %cst_5 : f32 to vector<32x128xf32>
    %7 = arith.maximumf %5, %6 : vector<32x128xf32>
    %c0_6 = arith.constant 0 : index
    %c0_7 = arith.constant 0 : index
    %8 = vector.load %arg4[%c0_6, %c0_7] : memref<32x128xf32, #tpu.memory_space<vmem>>, vector<32x128xf32>
    tpu.vector_store %arg4[%c0_6, %c0_7], %7 {strides = array<i32>} : memref<32x128xf32, #tpu.memory_space<vmem>>, vector<32x128xf32>,
    return
  }
  func.func @transform_0(%arg0: i32) -> (i32, i32) {
    %c0_i32 = arith.constant 0 : i32
    %c0_i32_0 = arith.constant 0 : i32
    return %arg0, %c0_i32 : i32, i32
  }
  func.func @transform_1(%arg0: i32) -> (i32, i32) {
    %c0_i32 = arith.constant 0 : i32
    %c0_i32_0 = arith.constant 0 : i32
    %c0_i32_1 = arith.constant 0 : i32
    return %c0_i32, %c0_i32_0 : i32, i32
  }
  func.func @transform_2(%arg0: i32) -> (i32, i32) {
    %c0_i32 = arith.constant 0 : i32
    %c0_i32_0 = arith.constant 0 : i32
    %c0_i32_1 = arith.constant 0 : i32
    return %c0_i32, %c0_i32_0 : i32, i32
  }
  func.func @transform_3(%arg0: i32) -> (i32, i32) {
    %c0_i32 = arith.constant 0 : i32
    %c0_i32_0 = arith.constant 0 : i32
    return %arg0, %c0_i32 : i32, i32
  }
}

module attributes {stable_mosaic.version = 11 : i64} {
  func.func @_linear_act_kernel(%arg0: i32, %arg1: memref<32x8xbf16, #tpu.memory_space<vmem>>, %arg2: memref<8x128xbf16, #tpu.memory_space<vmem>>, %arg3: memref<1x128xf32, #tpu.memory_space<vmem>>, %arg4: memref<32x128xf32, #tpu.memory_space<vmem>>) attributes {dimension_semantics = [#tpu.dimension_semantics<parallel>], iteration_bounds = array<i64: 1>, scalar_prefetch = 0 : i64, scratch_operands = 0 : i64, tpu.core_type = #tpu.core_type<tc>, window_params = [{transform_indices = @transform_0, window_bounds = array<i64: 32, 8>}, {pipeline_mode = #tpu.pipeline_mode<synchronous>, transform_indices = @transform_1, window_bounds = array<i64: 8, 128>}, {pipeline_mode = #tpu.pipeline_mode<synchronous>, transform_indices = @transform_2, window_bounds = array<i64: 1, 128>}, {transform_indices = @transform_3, window_bounds = array<i64: 32, 128>}]} {
    %c0 = arith.constant 0 : index
    %c0_0 = arith.constant 0 : index
    %0 = vector.load %arg1[%c0, %c0_0] : memref<32x8xbf16, #tpu.memory_space<vmem>>, vector<32x8xbf16>
    %c0_1 = arith.constant 0 : index
    %c0_2 = arith.constant 0 : index
    %1 = vector.load %arg2[%c0_1, %c0_2] : memref<8x128xbf16, #tpu.memory_space<vmem>>, vector<8x128xbf16>
    %cst = arith.constant dense<0.000000e+00> : vector<32x128xf32>
    %2 = tpu.matmul %0, %1, %cst {dimension_numbers = #tpu.dot_dimension_numbers<[1], [0], [0], [1], [0, 0, 1, 1], [], []>} : vector<32x8xbf16>, vector<8x128xbf16>, vector<32x128xf32> -> vector<32x128xf32>
    %c0_3 = arith.constant 0 : index
    %c0_4 = arith.constant 0 : index
    %3 = vector.load %arg3[%c0_3, %c0_4] : memref<1x128xf32, #tpu.memory_space<vmem>>, vector<1x128xf32>
    %4 = vector.broadcast %3 : vector<1x128xf32> to vector<32x128xf32>
    %5 = arith.addf %2, %4 : vector<32x128xf32>
    %cst_5 = arith.constant 0.000000e+00 : f32
    %cst_6 = arith.constant 6.000000e+00 : f32
    %6 = vector.broadcast %cst_5 : f32 to vector<32x128xf32>
    %7 = arith.maximumf %6, %5 : vector<32x128xf32>
    %8 = vector.broadcast %cst_6 : f32 to vector<32x128xf32>
    %9 = arith.minimumf %8, %7 : vector<32x128xf32>
    %c0_7 = arith.constant 0 : index
    %c0_8 = arith.constant 0 : index
    %10 = vector.load %arg4[%c0_7, %c0_8] : memref<32x128xf32, #tpu.memory_space<vmem>>, vector<32x128xf32>
    tpu.vector_store %arg4[%c0_7, %c0_8], %9 {strides = array<i32>} : memref<32x128xf32, #tpu.memory_space<vmem>>, vector<32x128xf32>,
    return
  }
  func.func @transform_0(%arg0: i32) -> (i32, i32) {
    %c0_i32 = arith.constant 0 : i32
    %c0_i32_0 = arith.constant 0 : i32
    return %arg0, %c0_i32 : i32, i32
  }
  func.func @transform_1(%arg0: i32) -> (i32, i32) {
    %c0_i32 = arith.constant 0 : i32
    %c0_i32_0 = arith.constant 0 : i32
    %c0_i32_1 = arith.constant 0 : i32
    return %c0_i32, %c0_i32_0 : i32, i32
  }
  func.func @transform_2(%arg0: i32) -> (i32, i32) {
    %c0_i32 = arith.constant 0 : i32
    %c0_i32_0 = arith.constant 0 : i32
    %c0_i32_1 = arith.constant 0 : i32
    return %c0_i32, %c0_i32_0 : i32, i32
  }
  func.func @transform_3(%arg0: i32) -> (i32, i32) {
    %c0_i32 = arith.constant 0 : i32
    %c0_i32_0 = arith.constant 0 : i32
    return %arg0, %c0_i32 : i32, i32
  }
}

module attributes {stable_mosaic.version = 11 : i64} {
  func.func @_dist_layer_kernel(%arg0: i32, %arg1: i32, %arg2: memref<32x384xbf16, #tpu.memory_space<vmem>>, %arg3: memref<32x384xbf16, #tpu.memory_space<vmem>>, %arg4: memref<32x256xf32, #tpu.memory_space<vmem>>, %arg5: memref<384x512xbf16, #tpu.memory_space<vmem>>, %arg6: memref<384x512xbf16, #tpu.memory_space<vmem>>, %arg7: memref<1x512xf32, #tpu.memory_space<vmem>>, %arg8: memref<1x256xf32, #tpu.memory_space<vmem>>, %arg9: memref<1x256xf32, #tpu.memory_space<vmem>>, %arg10: memref<32x256xf32, #tpu.memory_space<vmem>>, %arg11: memref<32x512xf32, #tpu.memory_space<vmem>>, %arg12: memref<32x256xf32, #tpu.memory_space<vmem>>) attributes {dimension_semantics = [#tpu.dimension_semantics<parallel>, #tpu.dimension_semantics<arbitrary>], iteration_bounds = array<i64: 1, 4>, scalar_prefetch = 0 : i64, scratch_operands = 2 : i64, tpu.core_type = #tpu.core_type<tc>, window_params = [{transform_indices = @transform_0, window_bounds = array<i64: 32, 384>}, {transform_indices = @transform_1, window_bounds = array<i64: 32, 384>}, {transform_indices = @transform_2, window_bounds = array<i64: 32, 256>}, {pipeline_mode = #tpu.pipeline_mode<synchronous>, transform_indices = @transform_3, window_bounds = array<i64: 384, 512>}, {pipeline_mode = #tpu.pipeline_mode<synchronous>, transform_indices = @transform_4, window_bounds = array<i64: 384, 512>}, {pipeline_mode = #tpu.pipeline_mode<synchronous>, transform_indices = @transform_5, window_bounds = array<i64: 1, 512>}, {pipeline_mode = #tpu.pipeline_mode<synchronous>, transform_indices = @transform_6, window_bounds = array<i64: 1, 256>}, {pipeline_mode = #tpu.pipeline_mode<synchronous>, transform_indices = @transform_7, window_bounds = array<i64: 1, 256>}, {transform_indices = @transform_8, window_bounds = array<i64: 32, 256>}]} {
    %c0_i32 = arith.constant 0 : i32
    %0 = arith.cmpi eq, %arg1, %c0_i32 : i32
    %1 = arith.extui %0 : i1 to i32
    %c0_i32_0 = arith.constant 0 : i32
    %2 = arith.cmpi ne, %1, %c0_i32_0 : i32
    scf.if %2 {
      %c0_16 = arith.constant 0 : index
      %c0_17 = arith.constant 0 : index
      %37 = vector.load %arg2[%c0_16, %c0_17] : memref<32x384xbf16, #tpu.memory_space<vmem>>, vector<32x384xbf16>
      %c0_18 = arith.constant 0 : index
      %c0_19 = arith.constant 0 : index
      %38 = vector.load %arg5[%c0_18, %c0_19] : memref<384x512xbf16, #tpu.memory_space<vmem>>, vector<384x512xbf16>
      %cst_20 = arith.constant dense<0.000000e+00> : vector<32x512xf32>
      %39 = tpu.matmul %37, %38, %cst_20 {dimension_numbers = #tpu.dot_dimension_numbers<[1], [0], [0], [1], [0, 0, 1, 1], [], []>} : vector<32x384xbf16>, vector<384x512xbf16>, vector<32x512xf32> -> vector<32x512xf32>
      %c0_21 = arith.constant 0 : index
      %c0_22 = arith.constant 0 : index
      %40 = vector.load %arg7[%c0_21, %c0_22] : memref<1x512xf32, #tpu.memory_space<vmem>>, vector<1x512xf32>
      %41 = vector.broadcast %40 : vector<1x512xf32> to vector<32x512xf32>
      %42 = arith.addf %39, %41 : vector<32x512xf32>
      %c0_23 = arith.constant 0 : index
      %c0_24 = arith.constant 0 : index
      %43 = vector.load %arg11[%c0_23, %c0_24] : memref<32x512xf32, #tpu.memory_space<vmem>>, vector<32x512xf32>
      tpu.vector_store %arg11[%c0_23, %c0_24], %42 {strides = array<i32>} : memref<32x512xf32, #tpu.memory_space<vmem>>, vector<32x512xf32>,
      %cst_25 = arith.constant 0.000000e+00 : f32
      %44 = vector.broadcast %cst_25 : f32 to vector<32x256xf32>
      %c0_26 = arith.constant 0 : index
      %c0_27 = arith.constant 0 : index
      %45 = vector.load %arg12[%c0_26, %c0_27] : memref<32x256xf32, #tpu.memory_space<vmem>>, vector<32x256xf32>
      tpu.vector_store %arg12[%c0_26, %c0_27], %44 {strides = array<i32>} : memref<32x256xf32, #tpu.memory_space<vmem>>, vector<32x256xf32>,
    } else {
    }
    %c0 = arith.constant 0 : index
    %c0_1 = arith.constant 0 : index
    %3 = vector.load %arg11[%c0, %c0_1] : memref<32x512xf32, #tpu.memory_space<vmem>>, vector<32x512xf32>
    %c0_2 = arith.constant 0 : index
    %c0_3 = arith.constant 0 : index
    %4 = vector.load %arg3[%c0_2, %c0_3] : memref<32x384xbf16, #tpu.memory_space<vmem>>, vector<32x384xbf16>
    %c0_4 = arith.constant 0 : index
    %c0_5 = arith.constant 0 : index
    %5 = vector.load %arg6[%c0_4, %c0_5] : memref<384x512xbf16, #tpu.memory_space<vmem>>, vector<384x512xbf16>
    %cst = arith.constant dense<0.000000e+00> : vector<32x512xf32>
    %6 = tpu.matmul %4, %5, %cst {dimension_numbers = #tpu.dot_dimension_numbers<[1], [0], [0], [1], [0, 0, 1, 1], [], []>} : vector<32x384xbf16>, vector<384x512xbf16>, vector<32x512xf32> -> vector<32x512xf32>
    %7 = arith.addf %3, %6 : vector<32x512xf32>
    %cst_6 = arith.constant 0.000000e+00 : f32
    %8 = vector.broadcast %cst_6 : f32 to vector<32x512xf32>
    %9 = arith.maximumf %7, %8 : vector<32x512xf32>
    %10 = vector.extract_strided_slice %9 {offsets = [0, 0], sizes = [32, 256], strides = [1, 1]} : vector<32x512xf32> to vector<32x256xf32>
    %11 = vector.extract_strided_slice %9 {offsets = [0, 256], sizes = [32, 256], strides = [1, 1]} : vector<32x512xf32> to vector<32x256xf32>
    %cst_7 = arith.constant dense<0xFF800000> : vector<32xf32>
    %12 = vector.multi_reduction <maximumf>, %10, %cst_7 [1] : vector<32x256xf32> to vector<32xf32>
    %13 = vector.shape_cast %12 : vector<32xf32> to vector<32x1xf32>
    %14 = vector.broadcast %13 : vector<32x1xf32> to vector<32x256xf32>
    %15 = arith.subf %10, %14 : vector<32x256xf32>
    %16 = math.exp %15 : vector<32x256xf32>
    %cst_8 = arith.constant dense<0.000000e+00> : vector<32xf32>
    %17 = vector.multi_reduction <add>, %16, %cst_8 [1] : vector<32x256xf32> to vector<32xf32>
    %18 = vector.shape_cast %17 : vector<32xf32> to vector<32x1xf32>
    %19 = tpu.reciprocal %18 {approx = true} : vector<32x1xf32> -> vector<32x1xf32>
    %20 = vector.broadcast %19 : vector<32x1xf32> to vector<32x256xf32>
    %21 = arith.mulf %16, %20 : vector<32x256xf32>
    %cst_9 = arith.constant 0.000000e+00 : f32
    %22 = vector.broadcast %cst_9 : f32 to vector<32x256xf32>
    %23 = arith.maximumf %11, %22 : vector<32x256xf32>
    %24 = math.absf %11 : vector<32x256xf32>
    %cst_10 = arith.constant 0.000000e+00 : f32
    %25 = vector.broadcast %cst_10 : f32 to vector<32x256xf32>
    %26 = arith.subf %25, %24 : vector<32x256xf32>
    %27 = math.exp %26 : vector<32x256xf32>
    %28 = math.log1p %27 : vector<32x256xf32>
    %29 = arith.addf %23, %28 : vector<32x256xf32>
    %c0_11 = arith.constant 0 : index
    %c0_12 = arith.constant 0 : index
    %30 = vector.load %arg12[%c0_11, %c0_12] : memref<32x256xf32, #tpu.memory_space<vmem>>, vector<32x256xf32>
    %31 = arith.mulf %21, %29 : vector<32x256xf32>
    %32 = arith.addf %30, %31 : vector<32x256xf32>
    %c0_13 = arith.constant 0 : index
    %c0_14 = arith.constant 0 : index
    %33 = vector.load %arg12[%c0_13, %c0_14] : memref<32x256xf32, #tpu.memory_space<vmem>>, vector<32x256xf32>
    tpu.vector_store %arg12[%c0_13, %c0_14], %32 {strides = array<i32>} : memref<32x256xf32, #tpu.memory_space<vmem>>, vector<32x256xf32>,
    %c3_i32 = arith.constant 3 : i32
    %34 = arith.cmpi eq, %arg1, %c3_i32 : i32
    %35 = arith.extui %34 : i1 to i32
    %c0_i32_15 = arith.constant 0 : i32
    %36 = arith.cmpi ne, %35, %c0_i32_15 : i32
    scf.if %36 {
      %c0_16 = arith.constant 0 : index
      %c0_17 = arith.constant 0 : index
      %37 = vector.load %arg12[%c0_16, %c0_17] : memref<32x256xf32, #tpu.memory_space<vmem>>, vector<32x256xf32>
      %c0_18 = arith.constant 0 : index
      %c0_19 = arith.constant 0 : index
      %38 = vector.load %arg8[%c0_18, %c0_19] : memref<1x256xf32, #tpu.memory_space<vmem>>, vector<1x256xf32>
      %39 = vector.broadcast %38 : vector<1x256xf32> to vector<32x256xf32>
      %40 = arith.mulf %37, %39 : vector<32x256xf32>
      %c0_20 = arith.constant 0 : index
      %c0_21 = arith.constant 0 : index
      %41 = vector.load %arg9[%c0_20, %c0_21] : memref<1x256xf32, #tpu.memory_space<vmem>>, vector<1x256xf32>
      %42 = vector.broadcast %41 : vector<1x256xf32> to vector<32x256xf32>
      %43 = arith.addf %40, %42 : vector<32x256xf32>
      %c0_22 = arith.constant 0 : index
      %c0_23 = arith.constant 0 : index
      %44 = vector.load %arg4[%c0_22, %c0_23] : memref<32x256xf32, #tpu.memory_space<vmem>>, vector<32x256xf32>
      %45 = arith.addf %43, %44 : vector<32x256xf32>
      %cst_24 = arith.constant 0.000000e+00 : f32
      %46 = vector.broadcast %cst_24 : f32 to vector<32x256xf32>
      %47 = arith.maximumf %45, %46 : vector<32x256xf32>
      %c0_25 = arith.constant 0 : index
      %c0_26 = arith.constant 0 : index
      %48 = vector.load %arg10[%c0_25, %c0_26] : memref<32x256xf32, #tpu.memory_space<vmem>>, vector<32x256xf32>
      tpu.vector_store %arg10[%c0_25, %c0_26], %47 {strides = array<i32>} : memref<32x256xf32, #tpu.memory_space<vmem>>, vector<32x256xf32>,
    } else {
    }
    return
  }
  func.func @transform_0(%arg0: i32, %arg1: i32) -> (i32, i32) {
    %c0_i32 = arith.constant 0 : i32
    %c0_i32_0 = arith.constant 0 : i32
    return %arg0, %c0_i32 : i32, i32
  }
  func.func @transform_1(%arg0: i32, %arg1: i32) -> (i32, i32) {
    %c1_i32 = arith.constant 1 : i32
    %0 = arith.muli %arg1, %c1_i32 : i32
    %1 = arith.addi %0, %arg0 : i32
    %c0_i32 = arith.constant 0 : i32
    %c0_i32_0 = arith.constant 0 : i32
    return %1, %c0_i32 : i32, i32
  }
  func.func @transform_2(%arg0: i32, %arg1: i32) -> (i32, i32) {
    %c0_i32 = arith.constant 0 : i32
    %c0_i32_0 = arith.constant 0 : i32
    return %arg0, %c0_i32 : i32, i32
  }
  func.func @transform_3(%arg0: i32, %arg1: i32) -> (i32, i32) {
    %c0_i32 = arith.constant 0 : i32
    %c0_i32_0 = arith.constant 0 : i32
    %c0_i32_1 = arith.constant 0 : i32
    return %c0_i32, %c0_i32_0 : i32, i32
  }
  func.func @transform_4(%arg0: i32, %arg1: i32) -> (i32, i32) {
    %c0_i32 = arith.constant 0 : i32
    %c0_i32_0 = arith.constant 0 : i32
    %c0_i32_1 = arith.constant 0 : i32
    return %c0_i32, %c0_i32_0 : i32, i32
  }
  func.func @transform_5(%arg0: i32, %arg1: i32) -> (i32, i32) {
    %c0_i32 = arith.constant 0 : i32
    %c0_i32_0 = arith.constant 0 : i32
    %c0_i32_1 = arith.constant 0 : i32
    return %c0_i32, %c0_i32_0 : i32, i32
  }
  func.func @transform_6(%arg0: i32, %arg1: i32) -> (i32, i32) {
    %c0_i32 = arith.constant 0 : i32
    %c0_i32_0 = arith.constant 0 : i32
    %c0_i32_1 = arith.constant 0 : i32
    return %c0_i32, %c0_i32_0 : i32, i32
  }
  func.func @transform_7(%arg0: i32, %arg1: i32) -> (i32, i32) {
    %c0_i32 = arith.constant 0 : i32
    %c0_i32_0 = arith.constant 0 : i32
    %c0_i32_1 = arith.constant 0 : i32
    return %c0_i32, %c0_i32_0 : i32, i32
  }
  func.func @transform_8(%arg0: i32, %arg1: i32) -> (i32, i32) {
    %c0_i32 = arith.constant 0 : i32
    %c0_i32_0 = arith.constant 0 : i32
    return %arg0, %c0_i32 : i32, i32
  }
}

module attributes {stable_mosaic.version = 11 : i64} {
  func.func @_dist_layer_kernel(%arg0: i32, %arg1: i32, %arg2: memref<32x384xbf16, #tpu.memory_space<vmem>>, %arg3: memref<32x384xbf16, #tpu.memory_space<vmem>>, %arg4: memref<32x256xf32, #tpu.memory_space<vmem>>, %arg5: memref<384x512xbf16, #tpu.memory_space<vmem>>, %arg6: memref<384x512xbf16, #tpu.memory_space<vmem>>, %arg7: memref<1x512xf32, #tpu.memory_space<vmem>>, %arg8: memref<1x256xf32, #tpu.memory_space<vmem>>, %arg9: memref<1x256xf32, #tpu.memory_space<vmem>>, %arg10: memref<32x256xf32, #tpu.memory_space<vmem>>, %arg11: memref<32x512xf32, #tpu.memory_space<vmem>>, %arg12: memref<32x256xf32, #tpu.memory_space<vmem>>) attributes {dimension_semantics = [#tpu.dimension_semantics<parallel>, #tpu.dimension_semantics<arbitrary>], iteration_bounds = array<i64: 1, 4>, scalar_prefetch = 0 : i64, scratch_operands = 2 : i64, tpu.core_type = #tpu.core_type<tc>, window_params = [{transform_indices = @transform_0, window_bounds = array<i64: 32, 384>}, {transform_indices = @transform_1, window_bounds = array<i64: 32, 384>}, {transform_indices = @transform_2, window_bounds = array<i64: 32, 256>}, {pipeline_mode = #tpu.pipeline_mode<synchronous>, transform_indices = @transform_3, window_bounds = array<i64: 384, 512>}, {pipeline_mode = #tpu.pipeline_mode<synchronous>, transform_indices = @transform_4, window_bounds = array<i64: 384, 512>}, {pipeline_mode = #tpu.pipeline_mode<synchronous>, transform_indices = @transform_5, window_bounds = array<i64: 1, 512>}, {pipeline_mode = #tpu.pipeline_mode<synchronous>, transform_indices = @transform_6, window_bounds = array<i64: 1, 256>}, {pipeline_mode = #tpu.pipeline_mode<synchronous>, transform_indices = @transform_7, window_bounds = array<i64: 1, 256>}, {transform_indices = @transform_8, window_bounds = array<i64: 32, 256>}]} {
    %c0_i32 = arith.constant 0 : i32
    %0 = arith.cmpi eq, %arg1, %c0_i32 : i32
    %1 = arith.extui %0 : i1 to i32
    %c0_i32_0 = arith.constant 0 : i32
    %2 = arith.cmpi ne, %1, %c0_i32_0 : i32
    scf.if %2 {
      %c0_16 = arith.constant 0 : index
      %c0_17 = arith.constant 0 : index
      %37 = vector.load %arg2[%c0_16, %c0_17] : memref<32x384xbf16, #tpu.memory_space<vmem>>, vector<32x384xbf16>
      %c0_18 = arith.constant 0 : index
      %c0_19 = arith.constant 0 : index
      %38 = vector.load %arg5[%c0_18, %c0_19] : memref<384x512xbf16, #tpu.memory_space<vmem>>, vector<384x512xbf16>
      %cst_20 = arith.constant dense<0.000000e+00> : vector<32x512xf32>
      %39 = tpu.matmul %37, %38, %cst_20 {dimension_numbers = #tpu.dot_dimension_numbers<[1], [0], [0], [1], [0, 0, 1, 1], [], []>} : vector<32x384xbf16>, vector<384x512xbf16>, vector<32x512xf32> -> vector<32x512xf32>
      %c0_21 = arith.constant 0 : index
      %c0_22 = arith.constant 0 : index
      %40 = vector.load %arg7[%c0_21, %c0_22] : memref<1x512xf32, #tpu.memory_space<vmem>>, vector<1x512xf32>
      %41 = vector.broadcast %40 : vector<1x512xf32> to vector<32x512xf32>
      %42 = arith.addf %39, %41 : vector<32x512xf32>
      %c0_23 = arith.constant 0 : index
      %c0_24 = arith.constant 0 : index
      %43 = vector.load %arg11[%c0_23, %c0_24] : memref<32x512xf32, #tpu.memory_space<vmem>>, vector<32x512xf32>
      tpu.vector_store %arg11[%c0_23, %c0_24], %42 {strides = array<i32>} : memref<32x512xf32, #tpu.memory_space<vmem>>, vector<32x512xf32>,
      %cst_25 = arith.constant 0.000000e+00 : f32
      %44 = vector.broadcast %cst_25 : f32 to vector<32x256xf32>
      %c0_26 = arith.constant 0 : index
      %c0_27 = arith.constant 0 : index
      %45 = vector.load %arg12[%c0_26, %c0_27] : memref<32x256xf32, #tpu.memory_space<vmem>>, vector<32x256xf32>
      tpu.vector_store %arg12[%c0_26, %c0_27], %44 {strides = array<i32>} : memref<32x256xf32, #tpu.memory_space<vmem>>, vector<32x256xf32>,
    } else {
    }
    %c0 = arith.constant 0 : index
    %c0_1 = arith.constant 0 : index
    %3 = vector.load %arg11[%c0, %c0_1] : memref<32x512xf32, #tpu.memory_space<vmem>>, vector<32x512xf32>
    %c0_2 = arith.constant 0 : index
    %c0_3 = arith.constant 0 : index
    %4 = vector.load %arg3[%c0_2, %c0_3] : memref<32x384xbf16, #tpu.memory_space<vmem>>, vector<32x384xbf16>
    %c0_4 = arith.constant 0 : index
    %c0_5 = arith.constant 0 : index
    %5 = vector.load %arg6[%c0_4, %c0_5] : memref<384x512xbf16, #tpu.memory_space<vmem>>, vector<384x512xbf16>
    %cst = arith.constant dense<0.000000e+00> : vector<32x512xf32>
    %6 = tpu.matmul %4, %5, %cst {dimension_numbers = #tpu.dot_dimension_numbers<[1], [0], [0], [1], [0, 0, 1, 1], [], []>} : vector<32x384xbf16>, vector<384x512xbf16>, vector<32x512xf32> -> vector<32x512xf32>
    %7 = arith.addf %3, %6 : vector<32x512xf32>
    %cst_6 = arith.constant 0.000000e+00 : f32
    %8 = vector.broadcast %cst_6 : f32 to vector<32x512xf32>
    %9 = arith.maximumf %7, %8 : vector<32x512xf32>
    %10 = vector.extract_strided_slice %9 {offsets = [0, 0], sizes = [32, 256], strides = [1, 1]} : vector<32x512xf32> to vector<32x256xf32>
    %11 = vector.extract_strided_slice %9 {offsets = [0, 256], sizes = [32, 256], strides = [1, 1]} : vector<32x512xf32> to vector<32x256xf32>
    %cst_7 = arith.constant dense<0xFF800000> : vector<32xf32>
    %12 = vector.multi_reduction <maximumf>, %10, %cst_7 [1] : vector<32x256xf32> to vector<32xf32>
    %13 = vector.shape_cast %12 : vector<32xf32> to vector<32x1xf32>
    %14 = vector.broadcast %13 : vector<32x1xf32> to vector<32x256xf32>
    %15 = arith.subf %10, %14 : vector<32x256xf32>
    %16 = math.exp %15 : vector<32x256xf32>
    %cst_8 = arith.constant dense<0.000000e+00> : vector<32xf32>
    %17 = vector.multi_reduction <add>, %16, %cst_8 [1] : vector<32x256xf32> to vector<32xf32>
    %18 = vector.shape_cast %17 : vector<32xf32> to vector<32x1xf32>
    %19 = tpu.reciprocal %18 {approx = true} : vector<32x1xf32> -> vector<32x1xf32>
    %20 = vector.broadcast %19 : vector<32x1xf32> to vector<32x256xf32>
    %21 = arith.mulf %16, %20 : vector<32x256xf32>
    %cst_9 = arith.constant 0.000000e+00 : f32
    %22 = vector.broadcast %cst_9 : f32 to vector<32x256xf32>
    %23 = arith.maximumf %11, %22 : vector<32x256xf32>
    %24 = math.absf %11 : vector<32x256xf32>
    %cst_10 = arith.constant 0.000000e+00 : f32
    %25 = vector.broadcast %cst_10 : f32 to vector<32x256xf32>
    %26 = arith.subf %25, %24 : vector<32x256xf32>
    %27 = math.exp %26 : vector<32x256xf32>
    %28 = math.log1p %27 : vector<32x256xf32>
    %29 = arith.addf %23, %28 : vector<32x256xf32>
    %c0_11 = arith.constant 0 : index
    %c0_12 = arith.constant 0 : index
    %30 = vector.load %arg12[%c0_11, %c0_12] : memref<32x256xf32, #tpu.memory_space<vmem>>, vector<32x256xf32>
    %31 = arith.mulf %21, %29 : vector<32x256xf32>
    %32 = arith.addf %30, %31 : vector<32x256xf32>
    %c0_13 = arith.constant 0 : index
    %c0_14 = arith.constant 0 : index
    %33 = vector.load %arg12[%c0_13, %c0_14] : memref<32x256xf32, #tpu.memory_space<vmem>>, vector<32x256xf32>
    tpu.vector_store %arg12[%c0_13, %c0_14], %32 {strides = array<i32>} : memref<32x256xf32, #tpu.memory_space<vmem>>, vector<32x256xf32>,
    %c3_i32 = arith.constant 3 : i32
    %34 = arith.cmpi eq, %arg1, %c3_i32 : i32
    %35 = arith.extui %34 : i1 to i32
    %c0_i32_15 = arith.constant 0 : i32
    %36 = arith.cmpi ne, %35, %c0_i32_15 : i32
    scf.if %36 {
      %c0_16 = arith.constant 0 : index
      %c0_17 = arith.constant 0 : index
      %37 = vector.load %arg12[%c0_16, %c0_17] : memref<32x256xf32, #tpu.memory_space<vmem>>, vector<32x256xf32>
      %c0_18 = arith.constant 0 : index
      %c0_19 = arith.constant 0 : index
      %38 = vector.load %arg8[%c0_18, %c0_19] : memref<1x256xf32, #tpu.memory_space<vmem>>, vector<1x256xf32>
      %39 = vector.broadcast %38 : vector<1x256xf32> to vector<32x256xf32>
      %40 = arith.mulf %37, %39 : vector<32x256xf32>
      %c0_20 = arith.constant 0 : index
      %c0_21 = arith.constant 0 : index
      %41 = vector.load %arg9[%c0_20, %c0_21] : memref<1x256xf32, #tpu.memory_space<vmem>>, vector<1x256xf32>
      %42 = vector.broadcast %41 : vector<1x256xf32> to vector<32x256xf32>
      %43 = arith.addf %40, %42 : vector<32x256xf32>
      %c0_22 = arith.constant 0 : index
      %c0_23 = arith.constant 0 : index
      %44 = vector.load %arg4[%c0_22, %c0_23] : memref<32x256xf32, #tpu.memory_space<vmem>>, vector<32x256xf32>
      %45 = arith.addf %43, %44 : vector<32x256xf32>
      %cst_24 = arith.constant 0.000000e+00 : f32
      %46 = vector.broadcast %cst_24 : f32 to vector<32x256xf32>
      %47 = arith.maximumf %45, %46 : vector<32x256xf32>
      %c0_25 = arith.constant 0 : index
      %c0_26 = arith.constant 0 : index
      %48 = vector.load %arg10[%c0_25, %c0_26] : memref<32x256xf32, #tpu.memory_space<vmem>>, vector<32x256xf32>
      tpu.vector_store %arg10[%c0_25, %c0_26], %47 {strides = array<i32>} : memref<32x256xf32, #tpu.memory_space<vmem>>, vector<32x256xf32>,
    } else {
    }
    return
  }
  func.func @transform_0(%arg0: i32, %arg1: i32) -> (i32, i32) {
    %c0_i32 = arith.constant 0 : i32
    %c0_i32_0 = arith.constant 0 : i32
    return %arg0, %c0_i32 : i32, i32
  }
  func.func @transform_1(%arg0: i32, %arg1: i32) -> (i32, i32) {
    %c1_i32 = arith.constant 1 : i32
    %0 = arith.muli %arg1, %c1_i32 : i32
    %1 = arith.addi %0, %arg0 : i32
    %c0_i32 = arith.constant 0 : i32
    %c0_i32_0 = arith.constant 0 : i32
    return %1, %c0_i32 : i32, i32
  }
  func.func @transform_2(%arg0: i32, %arg1: i32) -> (i32, i32) {
    %c0_i32 = arith.constant 0 : i32
    %c0_i32_0 = arith.constant 0 : i32
    return %arg0, %c0_i32 : i32, i32
  }
  func.func @transform_3(%arg0: i32, %arg1: i32) -> (i32, i32) {
    %c0_i32 = arith.constant 0 : i32
    %c0_i32_0 = arith.constant 0 : i32
    %c0_i32_1 = arith.constant 0 : i32
    return %c0_i32, %c0_i32_0 : i32, i32
  }
  func.func @transform_4(%arg0: i32, %arg1: i32) -> (i32, i32) {
    %c0_i32 = arith.constant 0 : i32
    %c0_i32_0 = arith.constant 0 : i32
    %c0_i32_1 = arith.constant 0 : i32
    return %c0_i32, %c0_i32_0 : i32, i32
  }
  func.func @transform_5(%arg0: i32, %arg1: i32) -> (i32, i32) {
    %c0_i32 = arith.constant 0 : i32
    %c0_i32_0 = arith.constant 0 : i32
    %c0_i32_1 = arith.constant 0 : i32
    return %c0_i32, %c0_i32_0 : i32, i32
  }
  func.func @transform_6(%arg0: i32, %arg1: i32) -> (i32, i32) {
    %c0_i32 = arith.constant 0 : i32
    %c0_i32_0 = arith.constant 0 : i32
    %c0_i32_1 = arith.constant 0 : i32
    return %c0_i32, %c0_i32_0 : i32, i32
  }
  func.func @transform_7(%arg0: i32, %arg1: i32) -> (i32, i32) {
    %c0_i32 = arith.constant 0 : i32
    %c0_i32_0 = arith.constant 0 : i32
    %c0_i32_1 = arith.constant 0 : i32
    return %c0_i32, %c0_i32_0 : i32, i32
  }
  func.func @transform_8(%arg0: i32, %arg1: i32) -> (i32, i32) {
    %c0_i32 = arith.constant 0 : i32
    %c0_i32_0 = arith.constant 0 : i32
    return %arg0, %c0_i32 : i32, i32
  }
}

module attributes {stable_mosaic.version = 11 : i64} {
  func.func @_linear_act2_kernel(%arg0: i32, %arg1: memref<32x256xbf16, #tpu.memory_space<vmem>>, %arg2: memref<32x256xbf16, #tpu.memory_space<vmem>>, %arg3: memref<256x256xbf16, #tpu.memory_space<vmem>>, %arg4: memref<256x256xbf16, #tpu.memory_space<vmem>>, %arg5: memref<1x256xf32, #tpu.memory_space<vmem>>, %arg6: memref<32x256xf32, #tpu.memory_space<vmem>>) attributes {dimension_semantics = [#tpu.dimension_semantics<parallel>], iteration_bounds = array<i64: 1>, scalar_prefetch = 0 : i64, scratch_operands = 0 : i64, tpu.core_type = #tpu.core_type<tc>, window_params = [{transform_indices = @transform_0, window_bounds = array<i64: 32, 256>}, {transform_indices = @transform_1, window_bounds = array<i64: 32, 256>}, {pipeline_mode = #tpu.pipeline_mode<synchronous>, transform_indices = @transform_2, window_bounds = array<i64: 256, 256>}, {pipeline_mode = #tpu.pipeline_mode<synchronous>, transform_indices = @transform_3, window_bounds = array<i64: 256, 256>}, {pipeline_mode = #tpu.pipeline_mode<synchronous>, transform_indices = @transform_4, window_bounds = array<i64: 1, 256>}, {transform_indices = @transform_5, window_bounds = array<i64: 32, 256>}]} {
    %c0 = arith.constant 0 : index
    %c0_0 = arith.constant 0 : index
    %0 = vector.load %arg1[%c0, %c0_0] : memref<32x256xbf16, #tpu.memory_space<vmem>>, vector<32x256xbf16>
    %c0_1 = arith.constant 0 : index
    %c0_2 = arith.constant 0 : index
    %1 = vector.load %arg3[%c0_1, %c0_2] : memref<256x256xbf16, #tpu.memory_space<vmem>>, vector<256x256xbf16>
    %cst = arith.constant dense<0.000000e+00> : vector<32x256xf32>
    %2 = tpu.matmul %0, %1, %cst {dimension_numbers = #tpu.dot_dimension_numbers<[1], [0], [0], [1], [0, 0, 1, 1], [], []>} : vector<32x256xbf16>, vector<256x256xbf16>, vector<32x256xf32> -> vector<32x256xf32>
    %c0_3 = arith.constant 0 : index
    %c0_4 = arith.constant 0 : index
    %3 = vector.load %arg2[%c0_3, %c0_4] : memref<32x256xbf16, #tpu.memory_space<vmem>>, vector<32x256xbf16>
    %c0_5 = arith.constant 0 : index
    %c0_6 = arith.constant 0 : index
    %4 = vector.load %arg4[%c0_5, %c0_6] : memref<256x256xbf16, #tpu.memory_space<vmem>>, vector<256x256xbf16>
    %cst_7 = arith.constant dense<0.000000e+00> : vector<32x256xf32>
    %5 = tpu.matmul %3, %4, %cst_7 {dimension_numbers = #tpu.dot_dimension_numbers<[1], [0], [0], [1], [0, 0, 1, 1], [], []>} : vector<32x256xbf16>, vector<256x256xbf16>, vector<32x256xf32> -> vector<32x256xf32>
    %6 = arith.addf %2, %5 : vector<32x256xf32>
    %c0_8 = arith.constant 0 : index
    %c0_9 = arith.constant 0 : index
    %7 = vector.load %arg5[%c0_8, %c0_9] : memref<1x256xf32, #tpu.memory_space<vmem>>, vector<1x256xf32>
    %8 = vector.broadcast %7 : vector<1x256xf32> to vector<32x256xf32>
    %9 = arith.addf %6, %8 : vector<32x256xf32>
    %cst_10 = arith.constant 0.000000e+00 : f32
    %10 = vector.broadcast %cst_10 : f32 to vector<32x256xf32>
    %11 = arith.maximumf %9, %10 : vector<32x256xf32>
    %c0_11 = arith.constant 0 : index
    %c0_12 = arith.constant 0 : index
    %12 = vector.load %arg6[%c0_11, %c0_12] : memref<32x256xf32, #tpu.memory_space<vmem>>, vector<32x256xf32>
    tpu.vector_store %arg6[%c0_11, %c0_12], %11 {strides = array<i32>} : memref<32x256xf32, #tpu.memory_space<vmem>>, vector<32x256xf32>,
    return
  }
  func.func @transform_0(%arg0: i32) -> (i32, i32) {
    %c0_i32 = arith.constant 0 : i32
    %c0_i32_0 = arith.constant 0 : i32
    return %arg0, %c0_i32 : i32, i32
  }
  func.func @transform_1(%arg0: i32) -> (i32, i32) {
    %c0_i32 = arith.constant 0 : i32
    %c0_i32_0 = arith.constant 0 : i32
    return %arg0, %c0_i32 : i32, i32
  }
  func.func @transform_2(%arg0: i32) -> (i32, i32) {
    %c0_i32 = arith.constant 0 : i32
    %c0_i32_0 = arith.constant 0 : i32
    %c0_i32_1 = arith.constant 0 : i32
    return %c0_i32, %c0_i32_0 : i32, i32
  }
  func.func @transform_3(%arg0: i32) -> (i32, i32) {
    %c0_i32 = arith.constant 0 : i32
    %c0_i32_0 = arith.constant 0 : i32
    %c0_i32_1 = arith.constant 0 : i32
    return %c0_i32, %c0_i32_0 : i32, i32
  }
  func.func @transform_4(%arg0: i32) -> (i32, i32) {
    %c0_i32 = arith.constant 0 : i32
    %c0_i32_0 = arith.constant 0 : i32
    %c0_i32_1 = arith.constant 0 : i32
    return %c0_i32, %c0_i32_0 : i32, i32
  }
  func.func @transform_5(%arg0: i32) -> (i32, i32) {
    %c0_i32 = arith.constant 0 : i32
    %c0_i32_0 = arith.constant 0 : i32
    return %arg0, %c0_i32 : i32, i32
  }
}

module attributes {stable_mosaic.version = 11 : i64} {
  func.func @_linear_act_kernel(%arg0: i32, %arg1: memref<8x257xf32, #tpu.memory_space<vmem>>, %arg2: memref<257x16xf32, #tpu.memory_space<vmem>>, %arg3: memref<1x16xf32, #tpu.memory_space<vmem>>, %arg4: memref<8x16xf32, #tpu.memory_space<vmem>>) attributes {dimension_semantics = [#tpu.dimension_semantics<parallel>], iteration_bounds = array<i64: 1>, scalar_prefetch = 0 : i64, scratch_operands = 0 : i64, tpu.core_type = #tpu.core_type<tc>, window_params = [{transform_indices = @transform_0, window_bounds = array<i64: 8, 257>}, {pipeline_mode = #tpu.pipeline_mode<synchronous>, transform_indices = @transform_1, window_bounds = array<i64: 257, 16>}, {pipeline_mode = #tpu.pipeline_mode<synchronous>, transform_indices = @transform_2, window_bounds = array<i64: 1, 16>}, {transform_indices = @transform_3, window_bounds = array<i64: 8, 16>}]} {
    %c0 = arith.constant 0 : index
    %c0_0 = arith.constant 0 : index
    %0 = vector.load %arg1[%c0, %c0_0] : memref<8x257xf32, #tpu.memory_space<vmem>>, vector<8x257xf32>
    %c0_1 = arith.constant 0 : index
    %c0_2 = arith.constant 0 : index
    %1 = vector.load %arg2[%c0_1, %c0_2] : memref<257x16xf32, #tpu.memory_space<vmem>>, vector<257x16xf32>
    %cst = arith.constant dense<0.000000e+00> : vector<8x16xf32>
    %2 = tpu.matmul %0, %1, %cst {dimension_numbers = #tpu.dot_dimension_numbers<[1], [0], [0], [1], [0, 0, 1, 1], [], []>} : vector<8x257xf32>, vector<257x16xf32>, vector<8x16xf32> -> vector<8x16xf32>
    %c0_3 = arith.constant 0 : index
    %c0_4 = arith.constant 0 : index
    %3 = vector.load %arg3[%c0_3, %c0_4] : memref<1x16xf32, #tpu.memory_space<vmem>>, vector<1x16xf32>
    %4 = vector.broadcast %3 : vector<1x16xf32> to vector<8x16xf32>
    %5 = arith.addf %2, %4 : vector<8x16xf32>
    %cst_5 = arith.constant 0.000000e+00 : f32
    %6 = vector.broadcast %cst_5 : f32 to vector<8x16xf32>
    %7 = arith.maximumf %5, %6 : vector<8x16xf32>
    %c0_6 = arith.constant 0 : index
    %c0_7 = arith.constant 0 : index
    %8 = vector.load %arg4[%c0_6, %c0_7] : memref<8x16xf32, #tpu.memory_space<vmem>>, vector<8x16xf32>
    tpu.vector_store %arg4[%c0_6, %c0_7], %7 {strides = array<i32>} : memref<8x16xf32, #tpu.memory_space<vmem>>, vector<8x16xf32>,
    return
  }
  func.func @transform_0(%arg0: i32) -> (i32, i32) {
    %c0_i32 = arith.constant 0 : i32
    %c0_i32_0 = arith.constant 0 : i32
    return %arg0, %c0_i32 : i32, i32
  }
  func.func @transform_1(%arg0: i32) -> (i32, i32) {
    %c0_i32 = arith.constant 0 : i32
    %c0_i32_0 = arith.constant 0 : i32
    %c0_i32_1 = arith.constant 0 : i32
    return %c0_i32, %c0_i32_0 : i32, i32
  }
  func.func @transform_2(%arg0: i32) -> (i32, i32) {
    %c0_i32 = arith.constant 0 : i32
    %c0_i32_0 = arith.constant 0 : i32
    %c0_i32_1 = arith.constant 0 : i32
    return %c0_i32, %c0_i32_0 : i32, i32
  }
  func.func @transform_3(%arg0: i32) -> (i32, i32) {
    %c0_i32 = arith.constant 0 : i32
    %c0_i32_0 = arith.constant 0 : i32
    return %arg0, %c0_i32 : i32, i32
  }
}

module attributes {stable_mosaic.version = 11 : i64} {
  func.func @_linear_act_kernel(%arg0: i32, %arg1: memref<8x16xf32, #tpu.memory_space<vmem>>, %arg2: memref<16x1xf32, #tpu.memory_space<vmem>>, %arg3: memref<1x1xf32, #tpu.memory_space<vmem>>, %arg4: memref<8x1xf32, #tpu.memory_space<vmem>>) attributes {dimension_semantics = [#tpu.dimension_semantics<parallel>], iteration_bounds = array<i64: 1>, scalar_prefetch = 0 : i64, scratch_operands = 0 : i64, tpu.core_type = #tpu.core_type<tc>, window_params = [{transform_indices = @transform_0, window_bounds = array<i64: 8, 16>}, {pipeline_mode = #tpu.pipeline_mode<synchronous>, transform_indices = @transform_1, window_bounds = array<i64: 16, 1>}, {pipeline_mode = #tpu.pipeline_mode<synchronous>, transform_indices = @transform_2, window_bounds = array<i64: 1, 1>}, {transform_indices = @transform_3, window_bounds = array<i64: 8, 1>}]} {
    %c0 = arith.constant 0 : index
    %c0_0 = arith.constant 0 : index
    %0 = vector.load %arg1[%c0, %c0_0] : memref<8x16xf32, #tpu.memory_space<vmem>>, vector<8x16xf32>
    %c0_1 = arith.constant 0 : index
    %c0_2 = arith.constant 0 : index
    %1 = vector.load %arg2[%c0_1, %c0_2] : memref<16x1xf32, #tpu.memory_space<vmem>>, vector<16x1xf32>
    %cst = arith.constant dense<0.000000e+00> : vector<8x1xf32>
    %2 = tpu.matmul %0, %1, %cst {dimension_numbers = #tpu.dot_dimension_numbers<[1], [0], [0], [1], [0, 0, 1, 1], [], []>} : vector<8x16xf32>, vector<16x1xf32>, vector<8x1xf32> -> vector<8x1xf32>
    %c0_3 = arith.constant 0 : index
    %c0_4 = arith.constant 0 : index
    %3 = vector.load %arg3[%c0_3, %c0_4] : memref<1x1xf32, #tpu.memory_space<vmem>>, vector<1x1xf32>
    %4 = vector.broadcast %3 : vector<1x1xf32> to vector<8x1xf32>
    %5 = arith.addf %2, %4 : vector<8x1xf32>
    %cst_5 = arith.constant 0.000000e+00 : f32
    %6 = vector.broadcast %cst_5 : f32 to vector<8x1xf32>
    %7 = arith.maximumf %5, %6 : vector<8x1xf32>
    %c0_6 = arith.constant 0 : index
    %c0_7 = arith.constant 0 : index
    %8 = vector.load %arg4[%c0_6, %c0_7] : memref<8x1xf32, #tpu.memory_space<vmem>>, vector<8x1xf32>
    tpu.vector_store %arg4[%c0_6, %c0_7], %7 {strides = array<i32>} : memref<8x1xf32, #tpu.memory_space<vmem>>, vector<8x1xf32>,
    return
  }
  func.func @transform_0(%arg0: i32) -> (i32, i32) {
    %c0_i32 = arith.constant 0 : i32
    %c0_i32_0 = arith.constant 0 : i32
    return %arg0, %c0_i32 : i32, i32
  }
  func.func @transform_1(%arg0: i32) -> (i32, i32) {
    %c0_i32 = arith.constant 0 : i32
    %c0_i32_0 = arith.constant 0 : i32
    %c0_i32_1 = arith.constant 0 : i32
    return %c0_i32, %c0_i32_0 : i32, i32
  }
  func.func @transform_2(%arg0: i32) -> (i32, i32) {
    %c0_i32 = arith.constant 0 : i32
    %c0_i32_0 = arith.constant 0 : i32
    %c0_i32_1 = arith.constant 0 : i32
    return %c0_i32, %c0_i32_0 : i32, i32
  }
  func.func @transform_3(%arg0: i32) -> (i32, i32) {
    %c0_i32 = arith.constant 0 : i32
    %c0_i32_0 = arith.constant 0 : i32
    return %arg0, %c0_i32 : i32, i32
  }
}

</mosaic_0001>

<llo_original>
// kernel: distnn_forward.13
$region0: #{distnn_forward.13}
  #allocation0 [shape = 'u32[]', space=smem, size = 0x4, offset = 0x4, fixed_abs, tag = 'smem constant byte address 0x4 - core index']
  #allocation1 [shape = 'u32[72,128]{1,0:T(1,128)}', space=vmem, size = 0x9000, scoped, tag = 'internal scratch']
  %s0 = inlined_call_operand.vmem [shape: bf16[32,8], index: 0, kind: input, shape index: {}]
  %s1 = inlined_call_operand.vmem [shape: bf16[8,128], index: 1, kind: input, shape index: {}]
  %s2 = inlined_call_operand.vmem [shape: f32[1,128], index: 2, kind: input, shape index: {}]
  %s3 = inlined_call_operand.vmem [shape: f32[32,128], index: 3, kind: output, shape index: {}]
  %s4 = sld [smem:[#allocation0]]
  $region22: #{distnn_forward.13} parent=0
    _
  %s6 = ssub.s32 1, %s4
  %s7 = scalar_select 0, %s6, %s4
  // Predicated region
  $region2: #{distnn_forward.13} parent=0 // pred_check
    _
  $region3: #{distnn_forward.13} parent=0 // pred_check_branch
    %9 = sbr.rel (0) target = $region5
  $region4: #{distnn_forward.13} parent=0 // pred_region
    _
  $region5: #{distnn_forward.13} parent=0 // pred_fallthru
    _
  // Predicated region
  $region6: #{distnn_forward.13} parent=0 // pred_check
    _
  $region7: #{distnn_forward.13} parent=0 // pred_check_branch
    %11 = sbr.rel (0) target = $region9
  $region8: #{distnn_forward.13} parent=0 // pred_region
    _
  $region9: #{distnn_forward.13} parent=0 // pred_fallthru
    _
  // Predicated region
  $region10: #{distnn_forward.13} parent=0 // pred_check
    _
  $region11: #{distnn_forward.13} parent=0 // pred_check_branch
    %13 = sbr.rel (0) target = $region13
  $region12: #{distnn_forward.13} parent=0 // pred_region
    _
  $region13: #{distnn_forward.13} parent=0 // pred_fallthru
    _
  %v15 = vld [vmem:[%s0] sm:$0xf]
  %v16 = vld [vmem:[%s0 + $0x4] sm:$0xf]
  %v17 = vld [vmem:[%s0 + $0x8] sm:$0xf]
  %v18 = vld [vmem:[%s0 + $0xc] sm:$0xf]
  %v19 = vld [vmem:[%s1] sm:$0xf]
  %v20 = vld [vmem:[%s2] sm:$0x1]
  %v22 = vperm.slane %v20, 0
  %v28 = vunpack.c.l.b16 %v15
  %v29 = vunpack.c.l.b16 %v16
  %v30 = vunpack.c.l.b16 %v17
  %v31 = vunpack.c.l.b16 %v18
  %v32 = vpack.c.b16 %v29, %v28
  %v33 = vpack.c.b16 %v31, %v30
  %vm34 = vcmask 64512
  %v36 = vsel %vm34, %v32, 0
  %v39 = vsel %vm34, %v33, 0
  %vm41 = vcmask 1043456
  %v43 = vsel %vm41, %v19, 0
  %45 = vmatpush.bf16.msra.mxu0 0
  %46 = vmatpush.bf16.msra.mxu0 0
  %47 = vmatpush.bf16.msra.mxu0 0
  %48 = vmatpush.bf16.msra.mxu0 0
  %49 = vmatpush.bf16.msra.mxu0 0
  %50 = vmatpush.bf16.msra.mxu0 0
  %51 = vmatpush.bf16.msra.mxu0 0
  %52 = vmatpush.bf16.msra.mxu0 %v43
  %53 = vmatmul.bf16.gmra.mxu0 %v36
  %v54 = vpop.f32.mrf.mxu0
  %v55 = vadd.f32 %v22, %v54
  %v56 = vpop.f32.mrf.mxu0
  %v57 = vadd.f32 %v22, %v56
  %58 = vmatmul.bf16.gmra.mxu0 %v39
  %v59 = vpop.f32.mrf.mxu0
  %v60 = vadd.f32 %v22, %v59
  %v61 = vpop.f32.mrf.mxu0
  %v62 = vadd.f32 %v22, %v61
  %63 = vdwg.mxu0
  %v64 = vmax.f32 %v55, 0.0
  %v65 = vmax.f32 %v57, 0.0
  %v66 = vmax.f32 %v60, 0.0
  %v67 = vmax.f32 %v62, 0.0
  %68 = vst [vmem:[%s3] sm:$0xff] %v64
  %69 = vst [vmem:[%s3 + $0x8] sm:$0xff] %v65
  %70 = vst [vmem:[%s3 + $0x10] sm:$0xff] %v66
  %71 = vst [vmem:[%s3 + $0x18] sm:$0xff] %v67
  // Predicated region
  $region14: #{distnn_forward.13} parent=0 // pred_check
    _
  $region15: #{distnn_forward.13} parent=0 // pred_check_branch
    %73 = sbr.rel (0) target = $region17
  $region16: #{distnn_forward.13} parent=0 // pred_region
    _
  $region17: #{distnn_forward.13} parent=0 // pred_fallthru
    _
  // Predicated region
  $region18: #{distnn_forward.13} parent=0 // pred_check
    _
  $region19: #{distnn_forward.13} parent=0 // pred_check_branch
    %75 = sbr.rel (0) target = $region21
  $region20: #{distnn_forward.13} parent=0 // pred_region
    _
  $region21: #{distnn_forward.13} parent=0 // pred_fallthru
    _

// kernel: distnn_forward.14
$region0: #{distnn_forward.14}
  #allocation0 [shape = 'u32[]', space=smem, size = 0x4, offset = 0x4, fixed_abs, tag = 'smem constant byte address 0x4 - core index']
  #allocation1 [shape = 'u32[72,128]{1,0:T(1,128)}', space=vmem, size = 0x9000, scoped, tag = 'internal scratch']
  %s0 = inlined_call_operand.vmem [shape: bf16[32,8], index: 0, kind: input, shape index: {}]
  %s1 = inlined_call_operand.vmem [shape: bf16[8,128], index: 1, kind: input, shape index: {}]
  %s2 = inlined_call_operand.vmem [shape: f32[1,128], index: 2, kind: input, shape index: {}]
  %s3 = inlined_call_operand.vmem [shape: f32[32,128], index: 3, kind: output, shape index: {}]
  %s4 = sld [smem:[#allocation0]]
  $region22: #{distnn_forward.14} parent=0
    _
  %s6 = ssub.s32 1, %s4
  %s7 = scalar_select 0, %s6, %s4
  // Predicated region
  $region2: #{distnn_forward.14} parent=0 // pred_check
    _
  $region3: #{distnn_forward.14} parent=0 // pred_check_branch
    %9 = sbr.rel (0) target = $region5
  $region4: #{distnn_forward.14} parent=0 // pred_region
    _
  $region5: #{distnn_forward.14} parent=0 // pred_fallthru
    _
  // Predicated region
  $region6: #{distnn_forward.14} parent=0 // pred_check
    _
  $region7: #{distnn_forward.14} parent=0 // pred_check_branch
    %11 = sbr.rel (0) target = $region9
  $region8: #{distnn_forward.14} parent=0 // pred_region
    _
  $region9: #{distnn_forward.14} parent=0 // pred_fallthru
    _
  // Predicated region
  $region10: #{distnn_forward.14} parent=0 // pred_check
    _
  $region11: #{distnn_forward.14} parent=0 // pred_check_branch
    %13 = sbr.rel (0) target = $region13
  $region12: #{distnn_forward.14} parent=0 // pred_region
    _
  $region13: #{distnn_forward.14} parent=0 // pred_fallthru
    _
  %v15 = vld [vmem:[%s0] sm:$0xf]
  %v16 = vld [vmem:[%s0 + $0x4] sm:$0xf]
  %v17 = vld [vmem:[%s0 + $0x8] sm:$0xf]
  %v18 = vld [vmem:[%s0 + $0xc] sm:$0xf]
  %v19 = vld [vmem:[%s1] sm:$0xf]
  %v20 = vld [vmem:[%s2] sm:$0x1]
  %v22 = vperm.slane %v20, 0
  %v28 = vunpack.c.l.b16 %v15
  %v29 = vunpack.c.l.b16 %v16
  %v30 = vunpack.c.l.b16 %v17
  %v31 = vunpack.c.l.b16 %v18
  %v32 = vpack.c.b16 %v29, %v28
  %v33 = vpack.c.b16 %v31, %v30
  %vm34 = vcmask 64512
  %v36 = vsel %vm34, %v32, 0
  %v39 = vsel %vm34, %v33, 0
  %vm41 = vcmask 1043456
  %v43 = vsel %vm41, %v19, 0
  %45 = vmatpush.bf16.msra.mxu0 0
  %46 = vmatpush.bf16.msra.mxu0 0
  %47 = vmatpush.bf16.msra.mxu0 0
  %48 = vmatpush.bf16.msra.mxu0 0
  %49 = vmatpush.bf16.msra.mxu0 0
  %50 = vmatpush.bf16.msra.mxu0 0
  %51 = vmatpush.bf16.msra.mxu0 0
  %52 = vmatpush.bf16.msra.mxu0 %v43
  %53 = vmatmul.bf16.gmra.mxu0 %v36
  %v54 = vpop.f32.mrf.mxu0
  %v55 = vadd.f32 %v22, %v54
  %v56 = vpop.f32.mrf.mxu0
  %v57 = vadd.f32 %v22, %v56
  %58 = vmatmul.bf16.gmra.mxu0 %v39
  %v59 = vpop.f32.mrf.mxu0
  %v60 = vadd.f32 %v22, %v59
  %v61 = vpop.f32.mrf.mxu0
  %v62 = vadd.f32 %v22, %v61
  %63 = vdwg.mxu0
  %v64 = vmax.f32 %v55, 0.0
  %v65 = vmax.f32 %v57, 0.0
  %v66 = vmax.f32 %v60, 0.0
  %v67 = vmax.f32 %v62, 0.0
  %v68 = vmin.f32 %v64, 6.0
  %v69 = vmin.f32 %v65, 6.0
  %v70 = vmin.f32 %v66, 6.0
  %v71 = vmin.f32 %v67, 6.0
  %72 = vst [vmem:[%s3] sm:$0xff] %v68
  %73 = vst [vmem:[%s3 + $0x8] sm:$0xff] %v69
  %74 = vst [vmem:[%s3 + $0x10] sm:$0xff] %v70
  %75 = vst [vmem:[%s3 + $0x18] sm:$0xff] %v71
  // Predicated region
  $region14: #{distnn_forward.14} parent=0 // pred_check
    _
  $region15: #{distnn_forward.14} parent=0 // pred_check_branch
    %77 = sbr.rel (0) target = $region17
  $region16: #{distnn_forward.14} parent=0 // pred_region
    _
  $region17: #{distnn_forward.14} parent=0 // pred_fallthru
    _
  // Predicated region
  $region18: #{distnn_forward.14} parent=0 // pred_check
    _
  $region19: #{distnn_forward.14} parent=0 // pred_check_branch
    %79 = sbr.rel (0) target = $region21
  $region20: #{distnn_forward.14} parent=0 // pred_region
    _
  $region21: #{distnn_forward.14} parent=0 // pred_fallthru
    _

// kernel: distnn_forward.18
$region0: #{distnn_forward.18}
  #allocation0 [shape = 'u32[]', space=smem, size = 0x4, offset = 0x4, fixed_abs, tag = 'smem constant byte address 0x4 - core index']
  #allocation1 [shape = 'u32[72,128]{1,0:T(1,128)}', space=vmem, size = 0x9000, scoped, tag = 'internal scratch']
  %s0 = inlined_call_operand.vmem [shape: bf16[32,256], index: 0, kind: input, shape index: {}]
  %s1 = inlined_call_operand.vmem [shape: bf16[32,256], index: 1, kind: input, shape index: {}]
  %s2 = inlined_call_operand.vmem [shape: bf16[256,256], index: 2, kind: input, shape index: {}]
  %s3 = inlined_call_operand.vmem [shape: bf16[256,256], index: 3, kind: input, shape index: {}]
  %s4 = inlined_call_operand.vmem [shape: f32[1,256], index: 4, kind: input, shape index: {}]
  %s5 = inlined_call_operand.vmem [shape: f32[32,256], index: 5, kind: output, shape index: {}]
  %s6 = sld [smem:[#allocation0]]
  $region30: #{distnn_forward.18} parent=0
    _
  %s8 = ssub.s32 1, %s6
  %s9 = scalar_select 0, %s8, %s6
  // Predicated region
  $region2: #{distnn_forward.18} parent=0 // pred_check
    _
  $region3: #{distnn_forward.18} parent=0 // pred_check_branch
    %11 = sbr.rel (0) target = $region5
  $region4: #{distnn_forward.18} parent=0 // pred_region
    _
  $region5: #{distnn_forward.18} parent=0 // pred_fallthru
    _
  // Predicated region
  $region6: #{distnn_forward.18} parent=0 // pred_check
    _
  $region7: #{distnn_forward.18} parent=0 // pred_check_branch
    %13 = sbr.rel (0) target = $region9
  $region8: #{distnn_forward.18} parent=0 // pred_region
    _
  $region9: #{distnn_forward.18} parent=0 // pred_fallthru
    _
  // Predicated region
  $region10: #{distnn_forward.18} parent=0 // pred_check
    _
  $region11: #{distnn_forward.18} parent=0 // pred_check_branch
    %15 = sbr.rel (0) target = $region13
  $region12: #{distnn_forward.18} parent=0 // pred_region
    _
  $region13: #{distnn_forward.18} parent=0 // pred_fallthru
    _
  // Predicated region
  $region14: #{distnn_forward.18} parent=0 // pred_check
    _
  $region15: #{distnn_forward.18} parent=0 // pred_check_branch
    %17 = sbr.rel (0) target = $region17
  $region16: #{distnn_forward.18} parent=0 // pred_region
    _
  $region17: #{distnn_forward.18} parent=0 // pred_fallthru
    _
  // Predicated region
  $region18: #{distnn_forward.18} parent=0 // pred_check
    _
  $region19: #{distnn_forward.18} parent=0 // pred_check_branch
    %19 = sbr.rel (0) target = $region21
  $region20: #{distnn_forward.18} parent=0 // pred_region
    _
  $region21: #{distnn_forward.18} parent=0 // pred_fallthru
    _
  %v20 = vld [vmem:[%s0] sm:$0xff]
  %v21 = vld [vmem:[%s0 + $0x8] sm:$0xff]
  %v22 = vld [vmem:[%s0 + $0x10] sm:$0xff]
  %v23 = vld [vmem:[%s0 + $0x18] sm:$0xff]
  %v24 = vld [vmem:[%s2] sm:$0xff]
  %v25 = vld [vmem:[%s2 + $0x8] sm:$0xff]
  %v26 = vld [vmem:[%s2 + $0x10] sm:$0xff]
  %v27 = vld [vmem:[%s2 + $0x18] sm:$0xff]
  %v28 = vld [vmem:[%s2 + $0x20] sm:$0xff]
  %v29 = vld [vmem:[%s2 + $0x28] sm:$0xff]
  %v30 = vld [vmem:[%s2 + $0x30] sm:$0xff]
  %v31 = vld [vmem:[%s2 + $0x38] sm:$0xff]
  %v32 = vld [vmem:[%s2 + $0x40] sm:$0xff]
  %v33 = vld [vmem:[%s2 + $0x48] sm:$0xff]
  %v34 = vld [vmem:[%s2 + $0x50] sm:$0xff]
  %v35 = vld [vmem:[%s2 + $0x58] sm:$0xff]
  %v36 = vld [vmem:[%s2 + $0x60] sm:$0xff]
  %v37 = vld [vmem:[%s2 + $0x68] sm:$0xff]
  %v38 = vld [vmem:[%s2 + $0x70] sm:$0xff]
  %v39 = vld [vmem:[%s2 + $0x78] sm:$0xff]
  %v40 = vld [vmem:[%s2 + $0x80] sm:$0xff]
  %v41 = vld [vmem:[%s2 + $0x88] sm:$0xff]
  %v42 = vld [vmem:[%s2 + $0x90] sm:$0xff]
  %v43 = vld [vmem:[%s2 + $0x98] sm:$0xff]
  %v44 = vld [vmem:[%s2 + $0xa0] sm:$0xff]
  %v45 = vld [vmem:[%s2 + $0xa8] sm:$0xff]
  %v46 = vld [vmem:[%s2 + $0xb0] sm:$0xff]
  %v47 = vld [vmem:[%s2 + $0xb8] sm:$0xff]
  %v48 = vld [vmem:[%s2 + $0xc0] sm:$0xff]
  %v49 = vld [vmem:[%s2 + $0xc8] sm:$0xff]
  %v50 = vld [vmem:[%s2 + $0xd0] sm:$0xff]
  %v51 = vld [vmem:[%s2 + $0xd8] sm:$0xff]
  %v52 = vld [vmem:[%s2 + $0xe0] sm:$0xff]
  %v53 = vld [vmem:[%s2 + $0xe8] sm:$0xff]
  %v54 = vld [vmem:[%s2 + $0xf0] sm:$0xff]
  %v55 = vld [vmem:[%s2 + $0xf8] sm:$0xff]
  %v56 = vld [vmem:[%s1] sm:$0xff]
  %v57 = vld [vmem:[%s1 + $0x8] sm:$0xff]
  %v58 = vld [vmem:[%s1 + $0x10] sm:$0xff]
  %v59 = vld [vmem:[%s1 + $0x18] sm:$0xff]
  %v60 = vld [vmem:[%s3] sm:$0xff]
  %v61 = vld [vmem:[%s3 + $0x8] sm:$0xff]
  %v62 = vld [vmem:[%s3 + $0x10] sm:$0xff]
  %v63 = vld [vmem:[%s3 + $0x18] sm:$0xff]
  %v64 = vld [vmem:[%s3 + $0x20] sm:$0xff]
  %v65 = vld [vmem:[%s3 + $0x28] sm:$0xff]
  %v66 = vld [vmem:[%s3 + $0x30] sm:$0xff]
  %v67 = vld [vmem:[%s3 + $0x38] sm:$0xff]
  %v68 = vld [vmem:[%s3 + $0x40] sm:$0xff]
  %v69 = vld [vmem:[%s3 + $0x48] sm:$0xff]
  %v70 = vld [vmem:[%s3 + $0x50] sm:$0xff]
  %v71 = vld [vmem:[%s3 + $0x58] sm:$0xff]
  %v72 = vld [vmem:[%s3 + $0x60] sm:$0xff]
  %v73 = vld [vmem:[%s3 + $0x68] sm:$0xff]
  %v74 = vld [vmem:[%s3 + $0x70] sm:$0xff]
  %v75 = vld [vmem:[%s3 + $0x78] sm:$0xff]
  %v76 = vld [vmem:[%s3 + $0x80] sm:$0xff]
  %v77 = vld [vmem:[%s3 + $0x88] sm:$0xff]
  %v78 = vld [vmem:[%s3 + $0x90] sm:$0xff]
  %v79 = vld [vmem:[%s3 + $0x98] sm:$0xff]
  %v80 = vld [vmem:[%s3 + $0xa0] sm:$0xff]
  %v81 = vld [vmem:[%s3 + $0xa8] sm:$0xff]
  %v82 = vld [vmem:[%s3 + $0xb0] sm:$0xff]
  %v83 = vld [vmem:[%s3 + $0xb8] sm:$0xff]
  %v84 = vld [vmem:[%s3 + $0xc0] sm:$0xff]
  %v85 = vld [vmem:[%s3 + $0xc8] sm:$0xff]
  %v86 = vld [vmem:[%s3 + $0xd0] sm:$0xff]
  %v87 = vld [vmem:[%s3 + $0xd8] sm:$0xff]
  %v88 = vld [vmem:[%s3 + $0xe0] sm:$0xff]
  %v89 = vld [vmem:[%s3 + $0xe8] sm:$0xff]
  %v90 = vld [vmem:[%s3 + $0xf0] sm:$0xff]
  %v91 = vld [vmem:[%s3 + $0xf8] sm:$0xff]
  %v96 = vunpack.c.l.b16 %v56
  %v97 = vunpack.c.h.b16 %v56
  %v98 = vunpack.c.l.b16 %v57
  %v99 = vunpack.c.h.b16 %v57
  %v100 = vunpack.c.l.b16 %v58
  %v101 = vunpack.c.h.b16 %v58
  %v102 = vunpack.c.l.b16 %v59
  %v103 = vunpack.c.h.b16 %v59
  %v104 = vpack.c.b16 %v98, %v96
  %v105 = vpack.c.b16 %v99, %v97
  %v106 = vpack.c.b16 %v102, %v100
  %v107 = vpack.c.b16 %v103, %v101
  %v144 = vunpack.c.l.b16 %v60
  %v145 = vunpack.c.h.b16 %v60
  %v146 = vunpack.c.l.b16 %v61
  %v147 = vunpack.c.h.b16 %v61
  %v148 = vunpack.c.l.b16 %v62
  %v149 = vunpack.c.h.b16 %v62
  %v150 = vunpack.c.l.b16 %v63
  %v151 = vunpack.c.h.b16 %v63
  %v152 = vunpack.c.l.b16 %v64
  %v153 = vunpack.c.h.b16 %v64
  %v154 = vunpack.c.l.b16 %v65
  %v155 = vunpack.c.h.b16 %v65
  %v156 = vunpack.c.l.b16 %v66
  %v157 = vunpack.c.h.b16 %v66
  %v158 = vunpack.c.l.b16 %v67
  %v159 = vunpack.c.h.b16 %v67
  %v160 = vunpack.c.l.b16 %v68
  %v161 = vunpack.c.h.b16 %v68
  %v162 = vunpack.c.l.b16 %v69
  %v163 = vunpack.c.h.b16 %v69
  %v164 = vunpack.c.l.b16 %v70
  %v165 = vunpack.c.h.b16 %v70
  %v166 = vunpack.c.l.b16 %v71
  %v167 = vunpack.c.h.b16 %v71
  %v168 = vunpack.c.l.b16 %v72
  %v169 = vunpack.c.h.b16 %v72
  %v170 = vunpack.c.l.b16 %v73
  %v171 = vunpack.c.h.b16 %v73
  %v172 = vunpack.c.l.b16 %v74
  %v173 = vunpack.c.h.b16 %v74
  %v174 = vunpack.c.l.b16 %v75
  %v175 = vunpack.c.h.b16 %v75
  %v176 = vunpack.c.l.b16 %v76
  %v177 = vunpack.c.h.b16 %v76
  %v178 = vunpack.c.l.b16 %v77
  %v179 = vunpack.c.h.b16 %v77
  %v180 = vunpack.c.l.b16 %v78
  %v181 = vunpack.c.h.b16 %v78
  %v182 = vunpack.c.l.b16 %v79
  %v183 = vunpack.c.h.b16 %v79
  %v184 = vunpack.c.l.b16 %v80
  %v185 = vunpack.c.h.b16 %v80
  %v186 = vunpack.c.l.b16 %v81
  %v187 = vunpack.c.h.b16 %v81
  %v188 = vunpack.c.l.b16 %v82
  %v189 = vunpack.c.h.b16 %v82
  %v190 = vunpack.c.l.b16 %v83
  %v191 = vunpack.c.h.b16 %v83
  %v192 = vunpack.c.l.b16 %v84
  %v193 = vunpack.c.h.b16 %v84
  %v194 = vunpack.c.l.b16 %v85
  %v195 = vunpack.c.h.b16 %v85
  %v196 = vunpack.c.l.b16 %v86
  %v197 = vunpack.c.h.b16 %v86
  %v198 = vunpack.c.l.b16 %v87
  %v199 = vunpack.c.h.b16 %v87
  %v200 = vunpack.c.l.b16 %v88
  %v201 = vunpack.c.h.b16 %v88
  %v202 = vunpack.c.l.b16 %v89
  %v203 = vunpack.c.h.b16 %v89
  %v204 = vunpack.c.l.b16 %v90
  %v205 = vunpack.c.h.b16 %v90
  %v206 = vunpack.c.l.b16 %v91
  %v207 = vunpack.c.h.b16 %v91
  %v208 = vpack.c.b16 %v146, %v144
  %v209 = vpack.c.b16 %v147, %v145
  %v210 = vpack.c.b16 %v150, %v148
  %v211 = vpack.c.b16 %v151, %v149
  %v212 = vpack.c.b16 %v154, %v152
  %v213 = vpack.c.b16 %v155, %v153
  %v214 = vpack.c.b16 %v158, %v156
  %v215 = vpack.c.b16 %v159, %v157
  %v216 = vpack.c.b16 %v162, %v160
  %v217 = vpack.c.b16 %v163, %v161
  %v218 = vpack.c.b16 %v166, %v164
  %v219 = vpack.c.b16 %v167, %v165
  %v220 = vpack.c.b16 %v170, %v168
  %v221 = vpack.c.b16 %v171, %v169
  %v222 = vpack.c.b16 %v174, %v172
  %v223 = vpack.c.b16 %v175, %v173
  %v224 = vpack.c.b16 %v178, %v176
  %v225 = vpack.c.b16 %v179, %v177
  %v226 = vpack.c.b16 %v182, %v180
  %v227 = vpack.c.b16 %v183, %v181
  %v228 = vpack.c.b16 %v186, %v184
  %v229 = vpack.c.b16 %v187, %v185
  %v230 = vpack.c.b16 %v190, %v188
  %v231 = vpack.c.b16 %v191, %v189
  %v232 = vpack.c.b16 %v194, %v192
  %v233 = vpack.c.b16 %v195, %v193
  %v234 = vpack.c.b16 %v198, %v196
  %v235 = vpack.c.b16 %v199, %v197
  %v236 = vpack.c.b16 %v202, %v200
  %v237 = vpack.c.b16 %v203, %v201
  %v238 = vpack.c.b16 %v206, %v204
  %v239 = vpack.c.b16 %v207, %v205
  %272 = vmatpush.bf16.msra.mxu0 %v222
  %273 = vmatpush.bf16.msra.mxu0 %v220
  %274 = vmatpush.bf16.msra.mxu0 %v218
  %275 = vmatpush.bf16.msra.mxu0 %v216
  %276 = vmatpush.bf16.msra.mxu0 %v214
  %277 = vmatpush.bf16.msra.mxu0 %v212
  %278 = vmatpush.bf16.msra.mxu0 %v210
  %279 = vmatpush.bf16.msra.mxu0 %v208
  %280 = vmatmul.bf16.gmra.mxu0 %v104
  %v281 = vpop.f32.mrf.mxu0
  %v282 = vadd.f32 0.0, %v281
  %v283 = vpop.f32.mrf.mxu0
  %v284 = vadd.f32 0.0, %v283
  %285 = vmatmul.bf16.gmra.mxu0 %v106
  %v286 = vpop.f32.mrf.mxu0
  %v287 = vadd.f32 0.0, %v286
  %v288 = vpop.f32.mrf.mxu0
  %v289 = vadd.f32 0.0, %v288
  %290 = vdwg.mxu0
  %291 = vmatpush.bf16.msra.mxu0 %v238
  %292 = vmatpush.bf16.msra.mxu0 %v236
  %293 = vmatpush.bf16.msra.mxu0 %v234
  %294 = vmatpush.bf16.msra.mxu0 %v232
  %295 = vmatpush.bf16.msra.mxu0 %v230
  %296 = vmatpush.bf16.msra.mxu0 %v228
  %297 = vmatpush.bf16.msra.mxu0 %v226
  %298 = vmatpush.bf16.msra.mxu0 %v224
  %299 = vmatmul.bf16.gmra.mxu0 %v105
  %v300 = vpop.f32.mrf.mxu0
  %v301 = vadd.f32 %v282, %v300
  %v302 = vpop.f32.mrf.mxu0
  %v303 = vadd.f32 %v284, %v302
  %304 = vmatmul.bf16.gmra.mxu0 %v107
  %v305 = vpop.f32.mrf.mxu0
  %v306 = vadd.f32 %v287, %v305
  %v307 = vpop.f32.mrf.mxu0
  %v308 = vadd.f32 %v289, %v307
  %309 = vdwg.mxu0
  %310 = vmatpush.bf16.msra.mxu0 %v223
  %311 = vmatpush.bf16.msra.mxu0 %v221
  %312 = vmatpush.bf16.msra.mxu0 %v219
  %313 = vmatpush.bf16.msra.mxu0 %v217
  %314 = vmatpush.bf16.msra.mxu0 %v215
  %315 = vmatpush.bf16.msra.mxu0 %v213
  %316 = vmatpush.bf16.msra.mxu0 %v211
  %317 = vmatpush.bf16.msra.mxu0 %v209
  %318 = vmatmul.bf16.gmra.mxu0 %v104
  %v319 = vpop.f32.mrf.mxu0
  %v320 = vadd.f32 0.0, %v319
  %v321 = vpop.f32.mrf.mxu0
  %v322 = vadd.f32 0.0, %v321
  %323 = vmatmul.bf16.gmra.mxu0 %v106
  %v324 = vpop.f32.mrf.mxu0
  %v325 = vadd.f32 0.0, %v324
  %v326 = vpop.f32.mrf.mxu0
  %v327 = vadd.f32 0.0, %v326
  %328 = vdwg.mxu0
  %329 = vmatpush.bf16.msra.mxu0 %v239
  %330 = vmatpush.bf16.msra.mxu0 %v237
  %331 = vmatpush.bf16.msra.mxu0 %v235
  %332 = vmatpush.bf16.msra.mxu0 %v233
  %333 = vmatpush.bf16.msra.mxu0 %v231
  %334 = vmatpush.bf16.msra.mxu0 %v229
  %335 = vmatpush.bf16.msra.mxu0 %v227
  %336 = vmatpush.bf16.msra.mxu0 %v225
  %337 = vmatmul.bf16.gmra.mxu0 %v105
  %v338 = vpop.f32.mrf.mxu0
  %v339 = vadd.f32 %v320, %v338
  %v340 = vpop.f32.mrf.mxu0
  %v341 = vadd.f32 %v322, %v340
  %342 = vmatmul.bf16.gmra.mxu0 %v107
  %v343 = vpop.f32.mrf.mxu0
  %v344 = vadd.f32 %v325, %v343
  %v345 = vpop.f32.mrf.mxu0
  %v346 = vadd.f32 %v327, %v345
  %347 = vdwg.mxu0
  %v352 = vunpack.c.l.b16 %v20
  %v353 = vunpack.c.h.b16 %v20
  %v354 = vunpack.c.l.b16 %v21
  %v355 = vunpack.c.h.b16 %v21
  %v356 = vunpack.c.l.b16 %v22
  %v357 = vunpack.c.h.b16 %v22
  %v358 = vunpack.c.l.b16 %v23
  %v359 = vunpack.c.h.b16 %v23
  %v360 = vpack.c.b16 %v354, %v352
  %v361 = vpack.c.b16 %v355, %v353
  %v362 = vpack.c.b16 %v358, %v356
  %v363 = vpack.c.b16 %v359, %v357
  %v400 = vunpack.c.l.b16 %v24
  %v401 = vunpack.c.h.b16 %v24
  %v402 = vunpack.c.l.b16 %v25
  %v403 = vunpack.c.h.b16 %v25
  %v404 = vunpack.c.l.b16 %v26
  %v405 = vunpack.c.h.b16 %v26
  %v406 = vunpack.c.l.b16 %v27
  %v407 = vunpack.c.h.b16 %v27
  %v408 = vunpack.c.l.b16 %v28
  %v409 = vunpack.c.h.b16 %v28
  %v410 = vunpack.c.l.b16 %v29
  %v411 = vunpack.c.h.b16 %v29
  %v412 = vunpack.c.l.b16 %v30
  %v413 = vunpack.c.h.b16 %v30
  %v414 = vunpack.c.l.b16 %v31
  %v415 = vunpack.c.h.b16 %v31
  %v416 = vunpack.c.l.b16 %v32
  %v417 = vunpack.c.h.b16 %v32
  %v418 = vunpack.c.l.b16 %v33
  %v419 = vunpack.c.h.b16 %v33
  %v420 = vunpack.c.l.b16 %v34
  %v421 = vunpack.c.h.b16 %v34
  %v422 = vunpack.c.l.b16 %v35
  %v423 = vunpack.c.h.b16 %v35
  %v424 = vunpack.c.l.b16 %v36
  %v425 = vunpack.c.h.b16 %v36
  %v426 = vunpack.c.l.b16 %v37
  %v427 = vunpack.c.h.b16 %v37
  %v428 = vunpack.c.l.b16 %v38
  %v429 = vunpack.c.h.b16 %v38
  %v430 = vunpack.c.l.b16 %v39
  %v431 = vunpack.c.h.b16 %v39
  %v432 = vunpack.c.l.b16 %v40
  %v433 = vunpack.c.h.b16 %v40
  %v434 = vunpack.c.l.b16 %v41
  %v435 = vunpack.c.h.b16 %v41
  %v436 = vunpack.c.l.b16 %v42
  %v437 = vunpack.c.h.b16 %v42
  %v438 = vunpack.c.l.b16 %v43
  %v439 = vunpack.c.h.b16 %v43
  %v440 = vunpack.c.l.b16 %v44
  %v441 = vunpack.c.h.b16 %v44
  %v442 = vunpack.c.l.b16 %v45
  %v443 = vunpack.c.h.b16 %v45
  %v444 = vunpack.c.l.b16 %v46
  %v445 = vunpack.c.h.b16 %v46
  %v446 = vunpack.c.l.b16 %v47
  %v447 = vunpack.c.h.b16 %v47
  %v448 = vunpack.c.l.b16 %v48
  %v449 = vunpack.c.h.b16 %v48
  %v450 = vunpack.c.l.b16 %v49
  %v451 = vunpack.c.h.b16 %v49
  %v452 = vunpack.c.l.b16 %v50
  %v453 = vunpack.c.h.b16 %v50
  %v454 = vunpack.c.l.b16 %v51
  %v455 = vunpack.c.h.b16 %v51
  %v456 = vunpack.c.l.b16 %v52
  %v457 = vunpack.c.h.b16 %v52
  %v458 = vunpack.c.l.b16 %v53
  %v459 = vunpack.c.h.b16 %v53
  %v460 = vunpack.c.l.b16 %v54
  %v461 = vunpack.c.h.b16 %v54
  %v462 = vunpack.c.l.b16 %v55
  %v463 = vunpack.c.h.b16 %v55
  %v464 = vpack.c.b16 %v402, %v400
  %v465 = vpack.c.b16 %v403, %v401
  %v466 = vpack.c.b16 %v406, %v404
  %v467 = vpack.c.b16 %v407, %v405
  %v468 = vpack.c.b16 %v410, %v408
  %v469 = vpack.c.b16 %v411, %v409
  %v470 = vpack.c.b16 %v414, %v412
  %v471 = vpack.c.b16 %v415, %v413
  %v472 = vpack.c.b16 %v418, %v416
  %v473 = vpack.c.b16 %v419, %v417
  %v474 = vpack.c.b16 %v422, %v420
  %v475 = vpack.c.b16 %v423, %v421
  %v476 = vpack.c.b16 %v426, %v424
  %v477 = vpack.c.b16 %v427, %v425
  %v478 = vpack.c.b16 %v430, %v428
  %v479 = vpack.c.b16 %v431, %v429
  %v480 = vpack.c.b16 %v434, %v432
  %v481 = vpack.c.b16 %v435, %v433
  %v482 = vpack.c.b16 %v438, %v436
  %v483 = vpack.c.b16 %v439, %v437
  %v484 = vpack.c.b16 %v442, %v440
  %v485 = vpack.c.b16 %v443, %v441
  %v486 = vpack.c.b16 %v446, %v444
  %v487 = vpack.c.b16 %v447, %v445
  %v488 = vpack.c.b16 %v450, %v448
  %v489 = vpack.c.b16 %v451, %v449
  %v490 = vpack.c.b16 %v454, %v452
  %v491 = vpack.c.b16 %v455, %v453
  %v492 = vpack.c.b16 %v458, %v456
  %v493 = vpack.c.b16 %v459, %v457
  %v494 = vpack.c.b16 %v462, %v460
  %v495 = vpack.c.b16 %v463, %v461
  %528 = vmatpush.bf16.msra.mxu0 %v478
  %529 = vmatpush.bf16.msra.mxu0 %v476
  %530 = vmatpush.bf16.msra.mxu0 %v474
  %531 = vmatpush.bf16.msra.mxu0 %v472
  %532 = vmatpush.bf16.msra.mxu0 %v470
  %533 = vmatpush.bf16.msra.mxu0 %v468
  %534 = vmatpush.bf16.msra.mxu0 %v466
  %535 = vmatpush.bf16.msra.mxu0 %v464
  %536 = vmatmul.bf16.gmra.mxu0 %v360
  %v537 = vpop.f32.mrf.mxu0
  %v538 = vadd.f32 %v301, %v537
  %v539 = vpop.f32.mrf.mxu0
  %v540 = vadd.f32 %v303, %v539
  %541 = vmatmul.bf16.gmra.mxu0 %v362
  %v542 = vpop.f32.mrf.mxu0
  %v543 = vadd.f32 %v306, %v542
  %v544 = vpop.f32.mrf.mxu0
  %v545 = vadd.f32 %v308, %v544
  %546 = vdwg.mxu0
  %547 = vmatpush.bf16.msra.mxu0 %v494
  %548 = vmatpush.bf16.msra.mxu0 %v492
  %549 = vmatpush.bf16.msra.mxu0 %v490
  %550 = vmatpush.bf16.msra.mxu0 %v488
  %551 = vmatpush.bf16.msra.mxu0 %v486
  %552 = vmatpush.bf16.msra.mxu0 %v484
  %553 = vmatpush.bf16.msra.mxu0 %v482
  %554 = vmatpush.bf16.msra.mxu0 %v480
  %555 = vmatmul.bf16.gmra.mxu0 %v361
  %v556 = vpop.f32.mrf.mxu0
  %v557 = vadd.f32 %v538, %v556
  %v558 = vpop.f32.mrf.mxu0
  %v559 = vadd.f32 %v540, %v558
  %560 = vmatmul.bf16.gmra.mxu0 %v363
  %v561 = vpop.f32.mrf.mxu0
  %v562 = vadd.f32 %v543, %v561
  %v563 = vpop.f32.mrf.mxu0
  %v564 = vadd.f32 %v545, %v563
  %565 = vdwg.mxu0
  %566 = vmatpush.bf16.msra.mxu0 %v479
  %567 = vmatpush.bf16.msra.mxu0 %v477
  %568 = vmatpush.bf16.msra.mxu0 %v475
  %569 = vmatpush.bf16.msra.mxu0 %v473
  %570 = vmatpush.bf16.msra.mxu0 %v471
  %571 = vmatpush.bf16.msra.mxu0 %v469
  %572 = vmatpush.bf16.msra.mxu0 %v467
  %573 = vmatpush.bf16.msra.mxu0 %v465
  %574 = vmatmul.bf16.gmra.mxu0 %v360
  %v575 = vpop.f32.mrf.mxu0
  %v576 = vadd.f32 %v339, %v575
  %v577 = vpop.f32.mrf.mxu0
  %v578 = vadd.f32 %v341, %v577
  %579 = vmatmul.bf16.gmra.mxu0 %v362
  %v580 = vpop.f32.mrf.mxu0
  %v581 = vadd.f32 %v344, %v580
  %v582 = vpop.f32.mrf.mxu0
  %v583 = vadd.f32 %v346, %v582
  %584 = vdwg.mxu0
  %585 = vmatpush.bf16.msra.mxu0 %v495
  %586 = vmatpush.bf16.msra.mxu0 %v493
  %587 = vmatpush.bf16.msra.mxu0 %v491
  %588 = vmatpush.bf16.msra.mxu0 %v489
  %589 = vmatpush.bf16.msra.mxu0 %v487
  %590 = vmatpush.bf16.msra.mxu0 %v485
  %591 = vmatpush.bf16.msra.mxu0 %v483
  %592 = vmatpush.bf16.msra.mxu0 %v481
  %593 = vmatmul.bf16.gmra.mxu0 %v361
  %v594 = vpop.f32.mrf.mxu0
  %v595 = vadd.f32 %v576, %v594
  %v596 = vpop.f32.mrf.mxu0
  %v597 = vadd.f32 %v578, %v596
  %598 = vmatmul.bf16.gmra.mxu0 %v363
  %v599 = vpop.f32.mrf.mxu0
  %v600 = vadd.f32 %v581, %v599
  %v601 = vpop.f32.mrf.mxu0
  %v602 = vadd.f32 %v583, %v601
  %603 = vdwg.mxu0
  %v604 = vld [vmem:[%s4] sm:$0x3]
  %v606 = vperm.slane %v604, 0
  %v607 = vperm.slane %v604, 1
  %v610 = vadd.f32 %v557, %v606
  %v611 = vadd.f32 %v595, %v607
  %v612 = vadd.f32 %v559, %v606
  %v613 = vadd.f32 %v597, %v607
  %v614 = vadd.f32 %v562, %v606
  %v615 = vadd.f32 %v600, %v607
  %v616 = vadd.f32 %v564, %v606
  %v617 = vadd.f32 %v602, %v607
  %v618 = vmax.f32 %v610, 0.0
  %v619 = vmax.f32 %v611, 0.0
  %v620 = vmax.f32 %v612, 0.0
  %v621 = vmax.f32 %v613, 0.0
  %v622 = vmax.f32 %v614, 0.0
  %v623 = vmax.f32 %v615, 0.0
  %v624 = vmax.f32 %v616, 0.0
  %v625 = vmax.f32 %v617, 0.0
  %626 = vst [vmem:[%s5] sm:$0xff] %v618
  %627 = vst [vmem:[%s5 + $0x8] sm:$0xff] %v619
  %628 = vst [vmem:[%s5 + $0x10] sm:$0xff] %v620
  %629 = vst [vmem:[%s5 + $0x18] sm:$0xff] %v621
  %630 = vst [vmem:[%s5 + $0x20] sm:$0xff] %v622
  %631 = vst [vmem:[%s5 + $0x28] sm:$0xff] %v623
  %632 = vst [vmem:[%s5 + $0x30] sm:$0xff] %v624
  %633 = vst [vmem:[%s5 + $0x38] sm:$0xff] %v625
  // Predicated region
  $region22: #{distnn_forward.18} parent=0 // pred_check
    _
  $region23: #{distnn_forward.18} parent=0 // pred_check_branch
    %635 = sbr.rel (0) target = $region25
  $region24: #{distnn_forward.18} parent=0 // pred_region
    _
  $region25: #{distnn_forward.18} parent=0 // pred_fallthru
    _
  // Predicated region
  $region26: #{distnn_forward.18} parent=0 // pred_check
    _
  $region27: #{distnn_forward.18} parent=0 // pred_check_branch
    %637 = sbr.rel (0) target = $region29
  $region28: #{distnn_forward.18} parent=0 // pred_region
    _
  $region29: #{distnn_forward.18} parent=0 // pred_fallthru
    _

// kernel: distnn_forward.17
$region0: #{distnn_forward.17}
  #allocation0 [shape = 'u32[]', space=smem, size = 0x4, offset = 0x4, fixed_abs, tag = 'smem constant byte address 0x4 - core index']
  #allocation1 [shape = 'u32[72,128]{1,0:T(1,128)}', space=vmem, size = 0x9000, scoped, tag = 'internal scratch']
  #allocation2 [shape = 'f32[32,512]{1,0:T(8,128)}', space=vmem, size = 0x10000, scoped, tag = 'scratch operand']
  #allocation3 [shape = 'f32[32,256]{1,0:T(8,128)}', space=vmem, size = 0x8000, scoped, tag = 'scratch operand']
  %s0 = inlined_call_operand.vmem [shape: bf16[32,384], index: 0, kind: input, shape index: {}]
  %s1 = inlined_call_operand.vmem [shape: bf16[128,384], index: 1, kind: input, shape index: {}]
  %s2 = inlined_call_operand.vmem [shape: f32[32,256], index: 2, kind: input, shape index: {}]
  %s3 = inlined_call_operand.vmem [shape: bf16[384,512], index: 3, kind: input, shape index: {}]
  %s4 = inlined_call_operand.vmem [shape: bf16[384,512], index: 4, kind: input, shape index: {}]
  %s5 = inlined_call_operand.vmem [shape: f32[1,512], index: 5, kind: input, shape index: {}]
  %s6 = inlined_call_operand.vmem [shape: f32[1,256], index: 6, kind: input, shape index: {}]
  %s7 = inlined_call_operand.vmem [shape: f32[1,256], index: 7, kind: input, shape index: {}]
  %s8 = inlined_call_operand.vmem [shape: f32[32,256], index: 8, kind: output, shape index: {}]
  %s9 = sld [smem:[#allocation0]]
  $region73: #{distnn_forward.17} parent=0
    _
  %s11 = ssub.s32 1, %s9
  %s12 = scalar_select 0, %s11, %s9
  loop: start=0, step=1, limit=6
  $region2: #{distnn_forward.17} parent=0 // loop_pre_header
    _
  $region3: #{distnn_forward.17} parent=0 // loop_header
    %s14 = sphi 0, %s18
    %p15 = scmp.ge.s32.totalorder %s14, 6
    %s21 = sphi 0, %s33
    %s22 = sphi 0, %s29
    %s23 = sphi 0, %s21
    %s24 = sphi 0, %s22
    %s25 = sphi 0, %s23
    %s26 = sphi 0, %s24
    %s36 = sphi 0, %s38
    %s39 = sphi 0, %s36
    %s40 = sphi 0, %s39
    %s56 = sphi 0, %s40
    %s64 = sphi 0, %s66
    %s67 = sphi 0, %s64
    %s68 = sphi 0, %s67
    %s84 = sphi 0, %s68
    %s90 = sphi 0, %s92
    %s93 = sphi 0, %s90
    %s94 = sphi 0, %s93
    %s110 = sphi 0, %s94
    %s114 = sphi 0, %s114
    %s116 = sphi 0, %s114
    %s117 = sphi 0, %s116
    %s131 = sphi 0, %s117
    %s135 = sphi 0, %s135
    %s137 = sphi 0, %s135
    %s138 = sphi 0, %s137
    %s152 = sphi 0, %s138
    %s156 = sphi 0, %s156
    %s158 = sphi 0, %s156
    %s159 = sphi 0, %s158
    %s173 = sphi 0, %s159
    %s177 = sphi 0, %s177
    %s179 = sphi 0, %s177
    %s180 = sphi 0, %s179
    %s194 = sphi 0, %s180
    %s198 = sphi 0, %s198
    %s200 = sphi 0, %s198
    %s201 = sphi 0, %s200
    %s215 = sphi 0, %s201
    %s221 = sphi 0, %s223
    %s224 = sphi 0, %s221
    %s225 = sphi 0, %s224
    %s241 = sphi 0, %s225
  $region4: #{distnn_forward.17} parent=0 // loop_header_branch
    %17 = sbr.rel (%p15) target = $region8
  $region5: #{distnn_forward.17} parent=0 // loop_body
    %s19 = ssub.s32 %s14, 1
    %s20 = ssub.s32 %s14, 2
    %s27 = sadd.s32 1, %s22
    %p28 = scmp.ge.s32.totalorder %s27, 4
    %s29 = scalar_select %p28, 0, %s27
    %s30 = sadd.s32 1, %s21
    %s31 = scalar_select %p28, %s30, %s21
    %p32 = scmp.ge.s32.totalorder %s31, 1
    %s33 = scalar_select %p32, 0, %s31
    %s34 = ssub.s32 %s21, %s33
    %p35 = scmp.eq.s32.totalorder %s34, 0
    %s37 = sadd.s32 %s36, 1
    %s38 = scalar_select %p35, %s36, %s37
    %p41 = pneg %p35
    %p42 = scmp.eq.s32.totalorder %s14, 3
    %p43 = por %p41, %p42
    %p44 = scmp.ne.s32.totalorder %s36, %s39
    %p45 = scmp.eq.s32.totalorder %s14, 0
    %p46 = por %p44, %p45
    %p47 = scmp.ne.s32.totalorder %s36, %s39
    %p48 = scmp.eq.s32.totalorder %s19, 3
    %p49 = por %p47, %p48
    %p50 = scmp.ne.s32.totalorder %s39, %s40
    %p51 = scmp.eq.s32.totalorder %s19, 0
    %p52 = por %p50, %p51
    %p53 = scmp.ne.s32.totalorder %s39, %s40
    %p54 = scmp.eq.s32.totalorder %s20, 3
    %p55 = por %p53, %p54
    %p57 = scmp.ne.s32.totalorder %s40, %s56
    %p58 = scmp.eq.s32.totalorder %s20, 0
    %p59 = por %p57, %p58
    %s60 = sadd.s32 %s22, %s21
    %s61 = sadd.s32 %s29, %s33
    %s62 = ssub.s32 %s60, %s61
    %p63 = scmp.eq.s32.totalorder %s62, 0
    %s65 = sadd.s32 %s64, 1
    %s66 = scalar_select %p63, %s64, %s65
    %p69 = pneg %p63
    %p70 = scmp.eq.s32.totalorder %s14, 3
    %p71 = por %p69, %p70
    %p72 = scmp.ne.s32.totalorder %s64, %s67
    %p73 = scmp.eq.s32.totalorder %s14, 0
    %p74 = por %p72, %p73
    %p75 = scmp.ne.s32.totalorder %s64, %s67
    %p76 = scmp.eq.s32.totalorder %s19, 3
    %p77 = por %p75, %p76
    %p78 = scmp.ne.s32.totalorder %s67, %s68
    %p79 = scmp.eq.s32.totalorder %s19, 0
    %p80 = por %p78, %p79
    %p81 = scmp.ne.s32.totalorder %s67, %s68
    %p82 = scmp.eq.s32.totalorder %s20, 3
    %p83 = por %p81, %p82
    %p85 = scmp.ne.s32.totalorder %s68, %s84
    %p86 = scmp.eq.s32.totalorder %s20, 0
    %p87 = por %p85, %p86
    %s88 = ssub.s32 %s21, %s33
    %p89 = scmp.eq.s32.totalorder %s88, 0
    %s91 = sadd.s32 %s90, 1
    %s92 = scalar_select %p89, %s90, %s91
    %p95 = pneg %p89
    %p96 = scmp.eq.s32.totalorder %s14, 3
    %p97 = por %p95, %p96
    %p98 = scmp.ne.s32.totalorder %s90, %s93
    %p99 = scmp.eq.s32.totalorder %s14, 0
    %p100 = por %p98, %p99
    %p101 = scmp.ne.s32.totalorder %s90, %s93
    %p102 = scmp.eq.s32.totalorder %s19, 3
    %p103 = por %p101, %p102
    %p104 = scmp.ne.s32.totalorder %s93, %s94
    %p105 = scmp.eq.s32.totalorder %s19, 0
    %p106 = por %p104, %p105
    %p107 = scmp.ne.s32.totalorder %s93, %s94
    %p108 = scmp.eq.s32.totalorder %s20, 3
    %p109 = por %p107, %p108
    %p111 = scmp.ne.s32.totalorder %s94, %s110
    %p112 = scmp.eq.s32.totalorder %s20, 0
    %p113 = por %p111, %p112
    %s115 = sadd.s32 %s114, 1
    %p118 = scmp.eq.s32.totalorder %s14, 3
    %p119 = scmp.ne.s32.totalorder %s114, %s116
    %p120 = scmp.eq.s32.totalorder %s14, 0
    %p121 = por %p119, %p120
    %p122 = scmp.ne.s32.totalorder %s114, %s116
    %p123 = scmp.eq.s32.totalorder %s19, 3
    %p124 = por %p122, %p123
    %p125 = scmp.ne.s32.totalorder %s116, %s117
    %p126 = scmp.eq.s32.totalorder %s19, 0
    %p127 = por %p125, %p126
    %p128 = scmp.ne.s32.totalorder %s116, %s117
    %p129 = scmp.eq.s32.totalorder %s20, 3
    %p130 = por %p128, %p129
    %p132 = scmp.ne.s32.totalorder %s117, %s131
    %p133 = scmp.eq.s32.totalorder %s20, 0
    %p134 = por %p132, %p133
    %s136 = sadd.s32 %s135, 1
    %p139 = scmp.eq.s32.totalorder %s14, 3
    %p140 = scmp.ne.s32.totalorder %s135, %s137
    %p141 = scmp.eq.s32.totalorder %s14, 0
    %p142 = por %p140, %p141
    %p143 = scmp.ne.s32.totalorder %s135, %s137
    %p144 = scmp.eq.s32.totalorder %s19, 3
    %p145 = por %p143, %p144
    %p146 = scmp.ne.s32.totalorder %s137, %s138
    %p147 = scmp.eq.s32.totalorder %s19, 0
    %p148 = por %p146, %p147
    %p149 = scmp.ne.s32.totalorder %s137, %s138
    %p150 = scmp.eq.s32.totalorder %s20, 3
    %p151 = por %p149, %p150
    %p153 = scmp.ne.s32.totalorder %s138, %s152
    %p154 = scmp.eq.s32.totalorder %s20, 0
    %p155 = por %p153, %p154
    %s157 = sadd.s32 %s156, 1
    %p160 = scmp.eq.s32.totalorder %s14, 3
    %p161 = scmp.ne.s32.totalorder %s156, %s158
    %p162 = scmp.eq.s32.totalorder %s14, 0
    %p163 = por %p161, %p162
    %p164 = scmp.ne.s32.totalorder %s156, %s158
    %p165 = scmp.eq.s32.totalorder %s19, 3
    %p166 = por %p164, %p165
    %p167 = scmp.ne.s32.totalorder %s158, %s159
    %p168 = scmp.eq.s32.totalorder %s19, 0
    %p169 = por %p167, %p168
    %p170 = scmp.ne.s32.totalorder %s158, %s159
    %p171 = scmp.eq.s32.totalorder %s20, 3
    %p172 = por %p170, %p171
    %p174 = scmp.ne.s32.totalorder %s159, %s173
    %p175 = scmp.eq.s32.totalorder %s20, 0
    %p176 = por %p174, %p175
    %s178 = sadd.s32 %s177, 1
    %p181 = scmp.eq.s32.totalorder %s14, 3
    %p182 = scmp.ne.s32.totalorder %s177, %s179
    %p183 = scmp.eq.s32.totalorder %s14, 0
    %p184 = por %p182, %p183
    %p185 = scmp.ne.s32.totalorder %s177, %s179
    %p186 = scmp.eq.s32.totalorder %s19, 3
    %p187 = por %p185, %p186
    %p188 = scmp.ne.s32.totalorder %s179, %s180
    %p189 = scmp.eq.s32.totalorder %s19, 0
    %p190 = por %p188, %p189
    %p191 = scmp.ne.s32.totalorder %s179, %s180
    %p192 = scmp.eq.s32.totalorder %s20, 3
    %p193 = por %p191, %p192
    %p195 = scmp.ne.s32.totalorder %s180, %s194
    %p196 = scmp.eq.s32.totalorder %s20, 0
    %p197 = por %p195, %p196
    %s199 = sadd.s32 %s198, 1
    %p202 = scmp.eq.s32.totalorder %s14, 3
    %p203 = scmp.ne.s32.totalorder %s198, %s200
    %p204 = scmp.eq.s32.totalorder %s14, 0
    %p205 = por %p203, %p204
    %p206 = scmp.ne.s32.totalorder %s198, %s200
    %p207 = scmp.eq.s32.totalorder %s19, 3
    %p208 = por %p206, %p207
    %p209 = scmp.ne.s32.totalorder %s200, %s201
    %p210 = scmp.eq.s32.totalorder %s19, 0
    %p211 = por %p209, %p210
    %p212 = scmp.ne.s32.totalorder %s200, %s201
    %p213 = scmp.eq.s32.totalorder %s20, 3
    %p214 = por %p212, %p213
    %p216 = scmp.ne.s32.totalorder %s201, %s215
    %p217 = scmp.eq.s32.totalorder %s20, 0
    %p218 = por %p216, %p217
    %s219 = ssub.s32 %s21, %s33
    %p220 = scmp.eq.s32.totalorder %s219, 0
    %s222 = sadd.s32 %s221, 1
    %s223 = scalar_select %p220, %s221, %s222
    %p226 = pneg %p220
    %p227 = scmp.eq.s32.totalorder %s14, 3
    %p228 = por %p226, %p227
    %p229 = scmp.ne.s32.totalorder %s221, %s224
    %p230 = scmp.eq.s32.totalorder %s14, 0
    %p231 = por %p229, %p230
    %p232 = scmp.ne.s32.totalorder %s221, %s224
    %p233 = scmp.eq.s32.totalorder %s19, 3
    %p234 = por %p232, %p233
    %p235 = scmp.ne.s32.totalorder %s224, %s225
    %p236 = scmp.eq.s32.totalorder %s19, 0
    %p237 = por %p235, %p236
    %p238 = scmp.ne.s32.totalorder %s224, %s225
    %p239 = scmp.eq.s32.totalorder %s20, 3
    %p240 = por %p238, %p239
    %p242 = scmp.ne.s32.totalorder %s225, %s241
    %p243 = scmp.eq.s32.totalorder %s20, 0
    %p244 = por %p242, %p243
    %p245 = scmp.le.s32.totalorder 1, %s14
    %p246 = scmp.lt.s32.totalorder %s14, 5
    %p247 = pnand %p245, %p246
    %p248 = pneg %p247
    // Predicated region
    $region9: #{distnn_forward.17} parent=5 // pred_check
      _
    $region10: #{distnn_forward.17} parent=5 // pred_check_branch
      %250 = sbr.rel (%p247) target = $region12
    $region11: #{distnn_forward.17} parent=5 // pred_region
      %s251 = ssub.s32 %s14, 1
      // Predicated region
      $region13: #{distnn_forward.17} parent=11 // pred_check
        %p252 = pneg %p52
      $region14: #{distnn_forward.17} parent=11 // pred_check_branch
        %254 = sbr.rel (%p252) target = $region16
      $region15: #{distnn_forward.17} parent=11 // pred_region
        %s255 = smul.u32 4, %s23
        %p256 = scmp.lt.s32.totalorder %s255, 3
        %s257 = scalar_select %p256, %s255, 3
        %s258 = smul.addr %s257, 3
        %s259 = smul.addr %s258, 4
        %s260 = scalar_lea.vmem %s0, %s259
        %s261 = smul.u32 4, %s23
      $region16: #{distnn_forward.17} parent=11 // pred_fallthru
        _
      // Predicated region
      $region17: #{distnn_forward.17} parent=11 // pred_check
        %p262 = pneg %p106
      $region18: #{distnn_forward.17} parent=11 // pred_check_branch
        %264 = sbr.rel (%p262) target = $region20
      $region19: #{distnn_forward.17} parent=11 // pred_region
        %s265 = smul.u32 4, %s23
        %p266 = scmp.lt.s32.totalorder %s265, 3
        %s267 = scalar_select %p266, %s265, 3
        %s268 = smul.addr %s267, 2
        %s269 = smul.addr %s268, 8
        %s270 = scalar_lea.vmem %s2, %s269
        %s271 = smul.u32 4, %s23
      $region20: #{distnn_forward.17} parent=11 // pred_fallthru
        _
      // Predicated region
      $region21: #{distnn_forward.17} parent=11 // pred_check
        %p272 = pneg %p127
      $region22: #{distnn_forward.17} parent=11 // pred_check_branch
        %274 = sbr.rel (%p272) target = $region24
      $region23: #{distnn_forward.17} parent=11 // pred_region
        _
      $region24: #{distnn_forward.17} parent=11 // pred_fallthru
        _
      // Predicated region
      $region25: #{distnn_forward.17} parent=11 // pred_check
        %p275 = pneg %p148
      $region26: #{distnn_forward.17} parent=11 // pred_check_branch
        %277 = sbr.rel (%p275) target = $region28
      $region27: #{distnn_forward.17} parent=11 // pred_region
        _
      $region28: #{distnn_forward.17} parent=11 // pred_fallthru
        _
      // Predicated region
      $region29: #{distnn_forward.17} parent=11 // pred_check
        %p278 = pneg %p169
      $region30: #{distnn_forward.17} parent=11 // pred_check_branch
        %280 = sbr.rel (%p278) target = $region32
      $region31: #{distnn_forward.17} parent=11 // pred_region
        _
      $region32: #{distnn_forward.17} parent=11 // pred_fallthru
        _
      // Predicated region
      $region33: #{distnn_forward.17} parent=11 // pred_check
        %p281 = pneg %p190
      $region34: #{distnn_forward.17} parent=11 // pred_check_branch
        %283 = sbr.rel (%p281) target = $region36
      $region35: #{distnn_forward.17} parent=11 // pred_region
        _
      $region36: #{distnn_forward.17} parent=11 // pred_fallthru
        _
      // Predicated region
      $region37: #{distnn_forward.17} parent=11 // pred_check
        %p284 = pneg %p211
      $region38: #{distnn_forward.17} parent=11 // pred_check_branch
        %286 = sbr.rel (%p284) target = $region40
      $region39: #{distnn_forward.17} parent=11 // pred_region
        _
      $region40: #{distnn_forward.17} parent=11 // pred_fallthru
        _
    $region12: #{distnn_forward.17} parent=5 // pred_fallthru
      _
    %p287 = scmp.lt.s32.totalorder %s14, 4
    // Predicated region
    $region41: #{distnn_forward.17} parent=5 // pred_check
      %p288 = pneg %p287
    $region42: #{distnn_forward.17} parent=5 // pred_check_branch
      %290 = sbr.rel (%p288) target = $region44
    $region43: #{distnn_forward.17} parent=5 // pred_region
      // Predicated region
      $region45: #{distnn_forward.17} parent=43 // pred_check
        %p291 = pneg %p74
      $region46: #{distnn_forward.17} parent=43 // pred_check_branch
        %293 = sbr.rel (%p291) target = $region48
      $region47: #{distnn_forward.17} parent=43 // pred_region
        %s294 = sadd.s32 %s22, %s21
        %s295 = smul.u32 4, %s294
        %p296 = scmp.lt.s32.totalorder %s295, 15
        %s297 = scalar_select %p296, %s295, 15
        %s298 = smul.addr %s297, 3
        %s299 = smul.addr %s298, 4
        %s300 = scalar_lea.vmem %s1, %s299
        %s301 = sadd.s32 %s22, %s21
        %s302 = smul.u32 4, %s301
      $region48: #{distnn_forward.17} parent=43 // pred_fallthru
        _
    $region44: #{distnn_forward.17} parent=5 // pred_fallthru
      _
    %p303 = scmp.le.s32.totalorder 1, %s14
    %p304 = scmp.lt.s32.totalorder %s14, 5
    %p305 = pnand %p303, %p304
    %p306 = pneg %p305
    // Predicated region
    $region49: #{distnn_forward.17} parent=5 // pred_check
      _
    $region50: #{distnn_forward.17} parent=5 // pred_check_branch
      %308 = sbr.rel (%p305) target = $region52
    $region51: #{distnn_forward.17} parent=5 // pred_region
      %s309 = ssub.s32 %s14, 1
      %s310 = smul.u32 4, %s23
      %p311 = scmp.lt.s32.totalorder %s310, 3
      %s312 = scalar_select %p311, %s310, 3
      %s313 = smul.addr %s312, 3
      %s314 = smul.addr %s313, 4
      %s315 = scalar_lea.vmem %s0, %s314
      %p316 = pneg %p52
      %p317 = pneg %p49
      %s318 = sadd.s32 %s24, %s23
      %s319 = smul.u32 4, %s318
      %p320 = scmp.lt.s32.totalorder %s319, 15
      %s321 = scalar_select %p320, %s319, 15
      %s322 = smul.addr %s321, 3
      %s323 = smul.addr %s322, 4
      %s324 = scalar_lea.vmem %s1, %s323
      %p325 = pneg %p80
      %p326 = pneg %p77
      %s327 = smul.u32 4, %s23
      %p328 = scmp.lt.s32.totalorder %s327, 3
      %s329 = scalar_select %p328, %s327, 3
      %s330 = smul.addr %s329, 2
      %s331 = smul.addr %s330, 8
      %s332 = scalar_lea.vmem %s2, %s331
      %p333 = pneg %p106
      %p334 = pneg %p103
      %p335 = pneg %p127
      %p336 = pneg %p124
      %p337 = pneg %p148
      %p338 = pneg %p145
      %p339 = pneg %p169
      %p340 = pneg %p166
      %p341 = pneg %p190
      %p342 = pneg %p187
      %p343 = pneg %p211
      %p344 = pneg %p208
      %p345 = pneg %p237
      %p346 = pneg %p234
      %s347 = smul.u32 4, %s23
      %p348 = scmp.lt.s32.totalorder %s347, 3
      %s349 = scalar_select %p348, %s347, 3
      %s350 = smul.addr %s349, 2
      %s351 = smul.addr %s350, 8
      %s352 = scalar_lea.vmem %s8, %s351
      %s353 = smul.u32 4, %s23
      %p354 = scmp.lt.s32.totalorder %s353, 3
      %s355 = scalar_select %p354, %s353, 3
      %s356 = smul.addr %s355, 3
      %s357 = smul.addr %s356, 4
      %s358 = scalar_lea.vmem %s0, %s357
      %s359 = smul.u32 4, %s23
      %s360 = sadd.s32 %s24, %s23
      %s361 = smul.u32 4, %s360
      %p362 = scmp.lt.s32.totalorder %s361, 15
      %s363 = scalar_select %p362, %s361, 15
      %s364 = smul.addr %s363, 3
      %s365 = smul.addr %s364, 4
      %s366 = scalar_lea.vmem %s1, %s365
      %s367 = sadd.s32 %s24, %s23
      %s368 = smul.u32 4, %s367
      %s369 = smul.u32 4, %s23
      %p370 = scmp.lt.s32.totalorder %s369, 3
      %s371 = scalar_select %p370, %s369, 3
      %s372 = smul.addr %s371, 2
      %s373 = smul.addr %s372, 8
      %s374 = scalar_lea.vmem %s2, %s373
      %s375 = smul.u32 4, %s23
      %s376 = smul.u32 4, %s23
      %p377 = scmp.lt.s32.totalorder %s376, 3
      %s378 = scalar_select %p377, %s376, 3
      %s379 = smul.addr %s378, 2
      %s380 = smul.addr %s379, 8
      %s381 = scalar_lea.vmem %s8, %s380
      %s382 = smul.u32 4, %s23
      %p383 = scmp.eq.s32.totalorder %s24, 0
      // Predicated region
      $region53: #{distnn_forward.17} parent=51 // pred_check
        %p384 = pneg %p383
      $region54: #{distnn_forward.17} parent=51 // pred_check_branch
        %386 = sbr.rel (%p384) target = $region56
      $region55: #{distnn_forward.17} parent=51 // pred_region
        %v387 = vld [vmem:[%s358] sm:$0xff]
        %v388 = vld [vmem:[%s358 + $0x8] sm:$0xf]
        %v389 = vld [vmem:[%s358 + $0xc] sm:$0xff]
        %v390 = vld [vmem:[%s358 + $0x14] sm:$0xf]
        %v391 = vld [vmem:[%s358 + $0x18] sm:$0xff]
        %v392 = vld [vmem:[%s358 + $0x20] sm:$0xf]
        %v393 = vld [vmem:[%s358 + $0x24] sm:$0xff]
        %v394 = vld [vmem:[%s358 + $0x2c] sm:$0xf]
        %v395 = vld [vmem:[%s3] sm:$0xff]
        %v396 = vld [vmem:[%s3 + $0x8] sm:$0xff]
        %v397 = vld [vmem:[%s3 + $0x10] sm:$0xff]
        %v398 = vld [vmem:[%s3 + $0x18] sm:$0xff]
        %v399 = vld [vmem:[%s3 + $0x20] sm:$0xff]
        %v400 = vld [vmem:[%s3 + $0x28] sm:$0xff]
        %v401 = vld [vmem:[%s3 + $0x30] sm:$0xff]
        %v402 = vld [vmem:[%s3 + $0x38] sm:$0xff]
        %v403 = vld [vmem:[%s3 + $0x40] sm:$0xff]
        %v404 = vld [vmem:[%s3 + $0x48] sm:$0xff]
        %v405 = vld [vmem:[%s3 + $0x50] sm:$0xff]
        %v406 = vld [vmem:[%s3 + $0x58] sm:$0xff]
        %v407 = vld [vmem:[%s3 + $0x60] sm:$0xff]
        %v408 = vld [vmem:[%s3 + $0x68] sm:$0xff]
        %v409 = vld [vmem:[%s3 + $0x70] sm:$0xff]
        %v410 = vld [vmem:[%s3 + $0x78] sm:$0xff]
        %v411 = vld [vmem:[%s3 + $0x80] sm:$0xff]
        %v412 = vld [vmem:[%s3 + $0x88] sm:$0xff]
        %v413 = vld [vmem:[%s3 + $0x90] sm:$0xff]
        %v414 = vld [vmem:[%s3 + $0x98] sm:$0xff]
        %v415 = vld [vmem:[%s3 + $0xa0] sm:$0xff]
        %v416 = vld [vmem:[%s3 + $0xa8] sm:$0xff]
        %v417 = vld [vmem:[%s3 + $0xb0] sm:$0xff]
        %v418 = vld [vmem:[%s3 + $0xb8] sm:$0xff]
        %v419 = vld [vmem:[%s3 + $0xc0] sm:$0xff]
        %v420 = vld [vmem:[%s3 + $0xc8] sm:$0xff]
        %v421 = vld [vmem:[%s3 + $0xd0] sm:$0xff]
        %v422 = vld [vmem:[%s3 + $0xd8] sm:$0xff]
        %v423 = vld [vmem:[%s3 + $0xe0] sm:$0xff]
        %v424 = vld [vmem:[%s3 + $0xe8] sm:$0xff]
        %v425 = vld [vmem:[%s3 + $0xf0] sm:$0xff]
        %v426 = vld [vmem:[%s3 + $0xf8] sm:$0xff]
        %v427 = vld [vmem:[%s3 + $0x100] sm:$0xff]
        %v428 = vld [vmem:[%s3 + $0x108] sm:$0xff]
        %v429 = vld [vmem:[%s3 + $0x110] sm:$0xff]
        %v430 = vld [vmem:[%s3 + $0x118] sm:$0xff]
        %v431 = vld [vmem:[%s3 + $0x120] sm:$0xff]
        %v432 = vld [vmem:[%s3 + $0x128] sm:$0xff]
        %v433 = vld [vmem:[%s3 + $0x130] sm:$0xff]
        %v434 = vld [vmem:[%s3 + $0x138] sm:$0xff]
        %v435 = vld [vmem:[%s3 + $0x140] sm:$0xff]
        %v436 = vld [vmem:[%s3 + $0x148] sm:$0xff]
        %v437 = vld [vmem:[%s3 + $0x150] sm:$0xff]
        %v438 = vld [vmem:[%s3 + $0x158] sm:$0xff]
        %v439 = vld [vmem:[%s3 + $0x160] sm:$0xff]
        %v440 = vld [vmem:[%s3 + $0x168] sm:$0xff]
        %v441 = vld [vmem:[%s3 + $0x170] sm:$0xff]
        %v442 = vld [vmem:[%s3 + $0x178] sm:$0xff]
        %v443 = vld [vmem:[%s3 + $0x180] sm:$0xff]
        %v444 = vld [vmem:[%s3 + $0x188] sm:$0xff]
        %v445 = vld [vmem:[%s3 + $0x190] sm:$0xff]
        %v446 = vld [vmem:[%s3 + $0x198] sm:$0xff]
        %v447 = vld [vmem:[%s3 + $0x1a0] sm:$0xff]
        %v448 = vld [vmem:[%s3 + $0x1a8] sm:$0xff]
        %v449 = vld [vmem:[%s3 + $0x1b0] sm:$0xff]
        %v450 = vld [vmem:[%s3 + $0x1b8] sm:$0xff]
        %v451 = vld [vmem:[%s3 + $0x1c0] sm:$0xff]
        %v452 = vld [vmem:[%s3 + $0x1c8] sm:$0xff]
        %v453 = vld [vmem:[%s3 + $0x1d0] sm:$0xff]
        %v454 = vld [vmem:[%s3 + $0x1d8] sm:$0xff]
        %v455 = vld [vmem:[%s3 + $0x1e0] sm:$0xff]
        %v456 = vld [vmem:[%s3 + $0x1e8] sm:$0xff]
        %v457 = vld [vmem:[%s3 + $0x1f0] sm:$0xff]
        %v458 = vld [vmem:[%s3 + $0x1f8] sm:$0xff]
        %v459 = vld [vmem:[%s3 + $0x200] sm:$0xff]
        %v460 = vld [vmem:[%s3 + $0x208] sm:$0xff]
        %v461 = vld [vmem:[%s3 + $0x210] sm:$0xff]
        %v462 = vld [vmem:[%s3 + $0x218] sm:$0xff]
        %v463 = vld [vmem:[%s3 + $0x220] sm:$0xff]
        %v464 = vld [vmem:[%s3 + $0x228] sm:$0xff]
        %v465 = vld [vmem:[%s3 + $0x230] sm:$0xff]
        %v466 = vld [vmem:[%s3 + $0x238] sm:$0xff]
        %v467 = vld [vmem:[%s3 + $0x240] sm:$0xff]
        %v468 = vld [vmem:[%s3 + $0x248] sm:$0xff]
        %v469 = vld [vmem:[%s3 + $0x250] sm:$0xff]
        %v470 = vld [vmem:[%s3 + $0x258] sm:$0xff]
        %v471 = vld [vmem:[%s3 + $0x260] sm:$0xff]
        %v472 = vld [vmem:[%s3 + $0x268] sm:$0xff]
        %v473 = vld [vmem:[%s3 + $0x270] sm:$0xff]
        %v474 = vld [vmem:[%s3 + $0x278] sm:$0xff]
        %v475 = vld [vmem:[%s3 + $0x280] sm:$0xff]
        %v476 = vld [vmem:[%s3 + $0x288] sm:$0xff]
        %v477 = vld [vmem:[%s3 + $0x290] sm:$0xff]
        %v478 = vld [vmem:[%s3 + $0x298] sm:$0xff]
        %v479 = vld [vmem:[%s3 + $0x2a0] sm:$0xff]
        %v480 = vld [vmem:[%s3 + $0x2a8] sm:$0xff]
        %v481 = vld [vmem:[%s3 + $0x2b0] sm:$0xff]
        %v482 = vld [vmem:[%s3 + $0x2b8] sm:$0xff]
        %v483 = vld [vmem:[%s3 + $0x2c0] sm:$0xff]
        %v484 = vld [vmem:[%s3 + $0x2c8] sm:$0xff]
        %v485 = vld [vmem:[%s3 + $0x2d0] sm:$0xff]
        %v486 = vld [vmem:[%s3 + $0x2d8] sm:$0xff]
        %v487 = vld [vmem:[%s3 + $0x2e0] sm:$0xff]
        %v488 = vld [vmem:[%s3 + $0x2e8] sm:$0xff]
        %v489 = vld [vmem:[%s3 + $0x2f0] sm:$0xff]
        %v490 = vld [vmem:[%s3 + $0x2f8] sm:$0xff]
        %v491 = vld [vmem:[%s5] sm:$0xf]
        %v493 = vperm.slane %v491, 0
        %v494 = vperm.slane %v491, 1
        %v495 = vperm.slane %v491, 2
        %v496 = vperm.slane %v491, 3
        %v509 = vunpack.c.l.b16 %v387
        %v510 = vunpack.c.h.b16 %v387
        %v511 = vunpack.c.l.b16 %v388
        %v512 = vunpack.c.l.b16 %v389
        %v513 = vunpack.c.h.b16 %v389
        %v514 = vunpack.c.l.b16 %v390
        %v515 = vunpack.c.l.b16 %v391
        %v516 = vunpack.c.h.b16 %v391
        %v517 = vunpack.c.l.b16 %v392
        %v518 = vunpack.c.l.b16 %v393
        %v519 = vunpack.c.h.b16 %v393
        %v520 = vunpack.c.l.b16 %v394
        %v521 = vpack.c.b16 %v512, %v509
        %v522 = vpack.c.b16 %v513, %v510
        %v523 = vpack.c.b16 %v514, %v511
        %v524 = vpack.c.b16 %v518, %v515
        %v525 = vpack.c.b16 %v519, %v516
        %v526 = vpack.c.b16 %v520, %v517
        %v629 = vunpack.c.l.b16 %v395
        %v630 = vunpack.c.h.b16 %v395
        %v631 = vunpack.c.l.b16 %v396
        %v632 = vunpack.c.h.b16 %v396
        %v633 = vunpack.c.l.b16 %v397
        %v634 = vunpack.c.h.b16 %v397
        %v635 = vunpack.c.l.b16 %v398
        %v636 = vunpack.c.h.b16 %v398
        %v637 = vunpack.c.l.b16 %v399
        %v638 = vunpack.c.h.b16 %v399
        %v639 = vunpack.c.l.b16 %v400
        %v640 = vunpack.c.h.b16 %v400
        %v641 = vunpack.c.l.b16 %v401
        %v642 = vunpack.c.h.b16 %v401
        %v643 = vunpack.c.l.b16 %v402
        %v644 = vunpack.c.h.b16 %v402
        %v645 = vunpack.c.l.b16 %v403
        %v646 = vunpack.c.h.b16 %v403
        %v647 = vunpack.c.l.b16 %v404
        %v648 = vunpack.c.h.b16 %v404
        %v649 = vunpack.c.l.b16 %v405
        %v650 = vunpack.c.h.b16 %v405
        %v651 = vunpack.c.l.b16 %v406
        %v652 = vunpack.c.h.b16 %v406
        %v653 = vunpack.c.l.b16 %v407
        %v654 = vunpack.c.h.b16 %v407
        %v655 = vunpack.c.l.b16 %v408
        %v656 = vunpack.c.h.b16 %v408
        %v657 = vunpack.c.l.b16 %v409
        %v658 = vunpack.c.h.b16 %v409
        %v659 = vunpack.c.l.b16 %v410
        %v660 = vunpack.c.h.b16 %v410
        %v661 = vunpack.c.l.b16 %v411
        %v662 = vunpack.c.h.b16 %v411
        %v663 = vunpack.c.l.b16 %v412
        %v664 = vunpack.c.h.b16 %v412
        %v665 = vunpack.c.l.b16 %v413
        %v666 = vunpack.c.h.b16 %v413
        %v667 = vunpack.c.l.b16 %v414
        %v668 = vunpack.c.h.b16 %v414
        %v669 = vunpack.c.l.b16 %v415
        %v670 = vunpack.c.h.b16 %v415
        %v671 = vunpack.c.l.b16 %v416
        %v672 = vunpack.c.h.b16 %v416
        %v673 = vunpack.c.l.b16 %v417
        %v674 = vunpack.c.h.b16 %v417
        %v675 = vunpack.c.l.b16 %v418
        %v676 = vunpack.c.h.b16 %v418
        %v677 = vunpack.c.l.b16 %v419
        %v678 = vunpack.c.h.b16 %v419
        %v679 = vunpack.c.l.b16 %v420
        %v680 = vunpack.c.h.b16 %v420
        %v681 = vunpack.c.l.b16 %v421
        %v682 = vunpack.c.h.b16 %v421
        %v683 = vunpack.c.l.b16 %v422
        %v684 = vunpack.c.h.b16 %v422
        %v685 = vunpack.c.l.b16 %v423
        %v686 = vunpack.c.h.b16 %v423
        %v687 = vunpack.c.l.b16 %v424
        %v688 = vunpack.c.h.b16 %v424
        %v689 = vunpack.c.l.b16 %v425
        %v690 = vunpack.c.h.b16 %v425
        %v691 = vunpack.c.l.b16 %v426
        %v692 = vunpack.c.h.b16 %v426
        %v693 = vunpack.c.l.b16 %v427
        %v694 = vunpack.c.h.b16 %v427
        %v695 = vunpack.c.l.b16 %v428
        %v696 = vunpack.c.h.b16 %v428
        %v697 = vunpack.c.l.b16 %v429
        %v698 = vunpack.c.h.b16 %v429
        %v699 = vunpack.c.l.b16 %v430
        %v700 = vunpack.c.h.b16 %v430
        %v701 = vunpack.c.l.b16 %v431
        %v702 = vunpack.c.h.b16 %v431
        %v703 = vunpack.c.l.b16 %v432
        %v704 = vunpack.c.h.b16 %v432
        %v705 = vunpack.c.l.b16 %v433
        %v706 = vunpack.c.h.b16 %v433
        %v707 = vunpack.c.l.b16 %v434
        %v708 = vunpack.c.h.b16 %v434
        %v709 = vunpack.c.l.b16 %v435
        %v710 = vunpack.c.h.b16 %v435
        %v711 = vunpack.c.l.b16 %v436
        %v712 = vunpack.c.h.b16 %v436
        %v713 = vunpack.c.l.b16 %v437
        %v714 = vunpack.c.h.b16 %v437
        %v715 = vunpack.c.l.b16 %v438
        %v716 = vunpack.c.h.b16 %v438
        %v717 = vunpack.c.l.b16 %v439
        %v718 = vunpack.c.h.b16 %v439
        %v719 = vunpack.c.l.b16 %v440
        %v720 = vunpack.c.h.b16 %v440
        %v721 = vunpack.c.l.b16 %v441
        %v722 = vunpack.c.h.b16 %v441
        %v723 = vunpack.c.l.b16 %v442
        %v724 = vunpack.c.h.b16 %v442
        %v725 = vunpack.c.l.b16 %v443
        %v726 = vunpack.c.h.b16 %v443
        %v727 = vunpack.c.l.b16 %v444
        %v728 = vunpack.c.h.b16 %v444
        %v729 = vunpack.c.l.b16 %v445
        %v730 = vunpack.c.h.b16 %v445
        %v731 = vunpack.c.l.b16 %v446
        %v732 = vunpack.c.h.b16 %v446
        %v733 = vunpack.c.l.b16 %v447
        %v734 = vunpack.c.h.b16 %v447
        %v735 = vunpack.c.l.b16 %v448
        %v736 = vunpack.c.h.b16 %v448
        %v737 = vunpack.c.l.b16 %v449
        %v738 = vunpack.c.h.b16 %v449
        %v739 = vunpack.c.l.b16 %v450
        %v740 = vunpack.c.h.b16 %v450
        %v741 = vunpack.c.l.b16 %v451
        %v742 = vunpack.c.h.b16 %v451
        %v743 = vunpack.c.l.b16 %v452
        %v744 = vunpack.c.h.b16 %v452
        %v745 = vunpack.c.l.b16 %v453
        %v746 = vunpack.c.h.b16 %v453
        %v747 = vunpack.c.l.b16 %v454
        %v748 = vunpack.c.h.b16 %v454
        %v749 = vunpack.c.l.b16 %v455
        %v750 = vunpack.c.h.b16 %v455
        %v751 = vunpack.c.l.b16 %v456
        %v752 = vunpack.c.h.b16 %v456
        %v753 = vunpack.c.l.b16 %v457
        %v754 = vunpack.c.h.b16 %v457
        %v755 = vunpack.c.l.b16 %v458
        %v756 = vunpack.c.h.b16 %v458
        %v757 = vunpack.c.l.b16 %v459
        %v758 = vunpack.c.h.b16 %v459
        %v759 = vunpack.c.l.b16 %v460
        %v760 = vunpack.c.h.b16 %v460
        %v761 = vunpack.c.l.b16 %v461
        %v762 = vunpack.c.h.b16 %v461
        %v763 = vunpack.c.l.b16 %v462
        %v764 = vunpack.c.h.b16 %v462
        %v765 = vunpack.c.l.b16 %v463
        %v766 = vunpack.c.h.b16 %v463
        %v767 = vunpack.c.l.b16 %v464
        %v768 = vunpack.c.h.b16 %v464
        %v769 = vunpack.c.l.b16 %v465
        %v770 = vunpack.c.h.b16 %v465
        %v771 = vunpack.c.l.b16 %v466
        %v772 = vunpack.c.h.b16 %v466
        %v773 = vunpack.c.l.b16 %v467
        %v774 = vunpack.c.h.b16 %v467
        %v775 = vunpack.c.l.b16 %v468
        %v776 = vunpack.c.h.b16 %v468
        %v777 = vunpack.c.l.b16 %v469
        %v778 = vunpack.c.h.b16 %v469
        %v779 = vunpack.c.l.b16 %v470
        %v780 = vunpack.c.h.b16 %v470
        %v781 = vunpack.c.l.b16 %v471
        %v782 = vunpack.c.h.b16 %v471
        %v783 = vunpack.c.l.b16 %v472
        %v784 = vunpack.c.h.b16 %v472
        %v785 = vunpack.c.l.b16 %v473
        %v786 = vunpack.c.h.b16 %v473
        %v787 = vunpack.c.l.b16 %v474
        %v788 = vunpack.c.h.b16 %v474
        %v789 = vunpack.c.l.b16 %v475
        %v790 = vunpack.c.h.b16 %v475
        %v791 = vunpack.c.l.b16 %v476
        %v792 = vunpack.c.h.b16 %v476
        %v793 = vunpack.c.l.b16 %v477
        %v794 = vunpack.c.h.b16 %v477
        %v795 = vunpack.c.l.b16 %v478
        %v796 = vunpack.c.h.b16 %v478
        %v797 = vunpack.c.l.b16 %v479
        %v798 = vunpack.c.h.b16 %v479
        %v799 = vunpack.c.l.b16 %v480
        %v800 = vunpack.c.h.b16 %v480
        %v801 = vunpack.c.l.b16 %v481
        %v802 = vunpack.c.h.b16 %v481
        %v803 = vunpack.c.l.b16 %v482
        %v804 = vunpack.c.h.b16 %v482
        %v805 = vunpack.c.l.b16 %v483
        %v806 = vunpack.c.h.b16 %v483
        %v807 = vunpack.c.l.b16 %v484
        %v808 = vunpack.c.h.b16 %v484
        %v809 = vunpack.c.l.b16 %v485
        %v810 = vunpack.c.h.b16 %v485
        %v811 = vunpack.c.l.b16 %v486
        %v812 = vunpack.c.h.b16 %v486
        %v813 = vunpack.c.l.b16 %v487
        %v814 = vunpack.c.h.b16 %v487
        %v815 = vunpack.c.l.b16 %v488
        %v816 = vunpack.c.h.b16 %v488
        %v817 = vunpack.c.l.b16 %v489
        %v818 = vunpack.c.h.b16 %v489
        %v819 = vunpack.c.l.b16 %v490
        %v820 = vunpack.c.h.b16 %v490
        %v821 = vpack.c.b16 %v633, %v629
        %v822 = vpack.c.b16 %v634, %v630
        %v823 = vpack.c.b16 %v635, %v631
        %v824 = vpack.c.b16 %v636, %v632
        %v825 = vpack.c.b16 %v641, %v637
        %v826 = vpack.c.b16 %v642, %v638
        %v827 = vpack.c.b16 %v643, %v639
        %v828 = vpack.c.b16 %v644, %v640
        %v829 = vpack.c.b16 %v649, %v645
        %v830 = vpack.c.b16 %v650, %v646
        %v831 = vpack.c.b16 %v651, %v647
        %v832 = vpack.c.b16 %v652, %v648
        %v833 = vpack.c.b16 %v657, %v653
        %v834 = vpack.c.b16 %v658, %v654
        %v835 = vpack.c.b16 %v659, %v655
        %v836 = vpack.c.b16 %v660, %v656
        %v837 = vpack.c.b16 %v665, %v661
        %v838 = vpack.c.b16 %v666, %v662
        %v839 = vpack.c.b16 %v667, %v663
        %v840 = vpack.c.b16 %v668, %v664
        %v841 = vpack.c.b16 %v673, %v669
        %v842 = vpack.c.b16 %v674, %v670
        %v843 = vpack.c.b16 %v675, %v671
        %v844 = vpack.c.b16 %v676, %v672
        %v845 = vpack.c.b16 %v681, %v677
        %v846 = vpack.c.b16 %v682, %v678
        %v847 = vpack.c.b16 %v683, %v679
        %v848 = vpack.c.b16 %v684, %v680
        %v849 = vpack.c.b16 %v689, %v685
        %v850 = vpack.c.b16 %v690, %v686
        %v851 = vpack.c.b16 %v691, %v687
        %v852 = vpack.c.b16 %v692, %v688
        %v853 = vpack.c.b16 %v697, %v693
        %v854 = vpack.c.b16 %v698, %v694
        %v855 = vpack.c.b16 %v699, %v695
        %v856 = vpack.c.b16 %v700, %v696
        %v857 = vpack.c.b16 %v705, %v701
        %v858 = vpack.c.b16 %v706, %v702
        %v859 = vpack.c.b16 %v707, %v703
        %v860 = vpack.c.b16 %v708, %v704
        %v861 = vpack.c.b16 %v713, %v709
        %v862 = vpack.c.b16 %v714, %v710
        %v863 = vpack.c.b16 %v715, %v711
        %v864 = vpack.c.b16 %v716, %v712
        %v865 = vpack.c.b16 %v721, %v717
        %v866 = vpack.c.b16 %v722, %v718
        %v867 = vpack.c.b16 %v723, %v719
        %v868 = vpack.c.b16 %v724, %v720
        %v869 = vpack.c.b16 %v729, %v725
        %v870 = vpack.c.b16 %v730, %v726
        %v871 = vpack.c.b16 %v731, %v727
        %v872 = vpack.c.b16 %v732, %v728
        %v873 = vpack.c.b16 %v737, %v733
        %v874 = vpack.c.b16 %v738, %v734
        %v875 = vpack.c.b16 %v739, %v735
        %v876 = vpack.c.b16 %v740, %v736
        %v877 = vpack.c.b16 %v745, %v741
        %v878 = vpack.c.b16 %v746, %v742
        %v879 = vpack.c.b16 %v747, %v743
        %v880 = vpack.c.b16 %v748, %v744
        %v881 = vpack.c.b16 %v753, %v749
        %v882 = vpack.c.b16 %v754, %v750
        %v883 = vpack.c.b16 %v755, %v751
        %v884 = vpack.c.b16 %v756, %v752
        %v885 = vpack.c.b16 %v761, %v757
        %v886 = vpack.c.b16 %v762, %v758
        %v887 = vpack.c.b16 %v763, %v759
        %v888 = vpack.c.b16 %v764, %v760
        %v889 = vpack.c.b16 %v769, %v765
        %v890 = vpack.c.b16 %v770, %v766
        %v891 = vpack.c.b16 %v771, %v767
        %v892 = vpack.c.b16 %v772, %v768
        %v893 = vpack.c.b16 %v777, %v773
        %v894 = vpack.c.b16 %v778, %v774
        %v895 = vpack.c.b16 %v779, %v775
        %v896 = vpack.c.b16 %v780, %v776
        %v897 = vpack.c.b16 %v785, %v781
        %v898 = vpack.c.b16 %v786, %v782
        %v899 = vpack.c.b16 %v787, %v783
        %v900 = vpack.c.b16 %v788, %v784
        %v901 = vpack.c.b16 %v793, %v789
        %v902 = vpack.c.b16 %v794, %v790
        %v903 = vpack.c.b16 %v795, %v791
        %v904 = vpack.c.b16 %v796, %v792
        %v905 = vpack.c.b16 %v801, %v797
        %v906 = vpack.c.b16 %v802, %v798
        %v907 = vpack.c.b16 %v803, %v799
        %v908 = vpack.c.b16 %v804, %v800
        %v909 = vpack.c.b16 %v809, %v805
        %v910 = vpack.c.b16 %v810, %v806
        %v911 = vpack.c.b16 %v811, %v807
        %v912 = vpack.c.b16 %v812, %v808
        %v913 = vpack.c.b16 %v817, %v813
        %v914 = vpack.c.b16 %v818, %v814
        %v915 = vpack.c.b16 %v819, %v815
        %v916 = vpack.c.b16 %v820, %v816
        %1013 = vmatpush.bf16.msra.mxu0 %v849
        %1014 = vmatpush.bf16.msra.mxu0 %v845
        %1015 = vmatpush.bf16.msra.mxu0 %v841
        %1016 = vmatpush.bf16.msra.mxu0 %v837
        %1017 = vmatpush.bf16.msra.mxu0 %v833
        %1018 = vmatpush.bf16.msra.mxu0 %v829
        %1019 = vmatpush.bf16.msra.mxu0 %v825
        %1020 = vmatpush.bf16.msra.mxu0 %v821
        %1021 = vmatmul.bf16.gmra.mxu0 %v521
        %v1022 = vpop.f32.mrf.mxu0
        %v1023 = vadd.f32 %v493, %v1022
        %v1024 = vpop.f32.mrf.mxu0
        %v1025 = vadd.f32 %v493, %v1024
        %1026 = vmatmul.bf16.gmra.mxu0 %v524
        %v1027 = vpop.f32.mrf.mxu0
        %v1028 = vadd.f32 %v493, %v1027
        %v1029 = vpop.f32.mrf.mxu0
        %v1030 = vadd.f32 %v493, %v1029
        %1031 = vdwg.mxu0
        %1032 = vmatpush.bf16.msra.mxu0 %v881
        %1033 = vmatpush.bf16.msra.mxu0 %v877
        %1034 = vmatpush.bf16.msra.mxu0 %v873
        %1035 = vmatpush.bf16.msra.mxu0 %v869
        %1036 = vmatpush.bf16.msra.mxu0 %v865
        %1037 = vmatpush.bf16.msra.mxu0 %v861
        %1038 = vmatpush.bf16.msra.mxu0 %v857
        %1039 = vmatpush.bf16.msra.mxu0 %v853
        %1040 = vmatmul.bf16.gmra.mxu0 %v522
        %v1041 = vpop.f32.mrf.mxu0
        %v1042 = vadd.f32 %v1023, %v1041
        %v1043 = vpop.f32.mrf.mxu0
        %v1044 = vadd.f32 %v1025, %v1043
        %1045 = vmatmul.bf16.gmra.mxu0 %v525
        %v1046 = vpop.f32.mrf.mxu0
        %v1047 = vadd.f32 %v1028, %v1046
        %v1048 = vpop.f32.mrf.mxu0
        %v1049 = vadd.f32 %v1030, %v1048
        %1050 = vdwg.mxu0
        %1051 = vmatpush.bf16.msra.mxu0 %v913
        %1052 = vmatpush.bf16.msra.mxu0 %v909
        %1053 = vmatpush.bf16.msra.mxu0 %v905
        %1054 = vmatpush.bf16.msra.mxu0 %v901
        %1055 = vmatpush.bf16.msra.mxu0 %v897
        %1056 = vmatpush.bf16.msra.mxu0 %v893
        %1057 = vmatpush.bf16.msra.mxu0 %v889
        %1058 = vmatpush.bf16.msra.mxu0 %v885
        %1059 = vmatmul.bf16.gmra.mxu0 %v523
        %v1060 = vpop.f32.mrf.mxu0
        %v1061 = vadd.f32 %v1042, %v1060
        %v1062 = vpop.f32.mrf.mxu0
        %v1063 = vadd.f32 %v1044, %v1062
        %1064 = vmatmul.bf16.gmra.mxu0 %v526
        %v1065 = vpop.f32.mrf.mxu0
        %v1066 = vadd.f32 %v1047, %v1065
        %v1067 = vpop.f32.mrf.mxu0
        %v1068 = vadd.f32 %v1049, %v1067
        %1069 = vdwg.mxu0
        %1070 = vmatpush.bf16.msra.mxu0 %v850
        %1071 = vmatpush.bf16.msra.mxu0 %v846
        %1072 = vmatpush.bf16.msra.mxu0 %v842
        %1073 = vmatpush.bf16.msra.mxu0 %v838
        %1074 = vmatpush.bf16.msra.mxu0 %v834
        %1075 = vmatpush.bf16.msra.mxu0 %v830
        %1076 = vmatpush.bf16.msra.mxu0 %v826
        %1077 = vmatpush.bf16.msra.mxu0 %v822
        %1078 = vmatmul.bf16.gmra.mxu0 %v521
        %v1079 = vpop.f32.mrf.mxu0
        %v1080 = vadd.f32 %v494, %v1079
        %v1081 = vpop.f32.mrf.mxu0
        %v1082 = vadd.f32 %v494, %v1081
        %1083 = vmatmul.bf16.gmra.mxu0 %v524
        %v1084 = vpop.f32.mrf.mxu0
        %v1085 = vadd.f32 %v494, %v1084
        %v1086 = vpop.f32.mrf.mxu0
        %v1087 = vadd.f32 %v494, %v1086
        %1088 = vdwg.mxu0
        %1089 = vmatpush.bf16.msra.mxu0 %v882
        %1090 = vmatpush.bf16.msra.mxu0 %v878
        %1091 = vmatpush.bf16.msra.mxu0 %v874
        %1092 = vmatpush.bf16.msra.mxu0 %v870
        %1093 = vmatpush.bf16.msra.mxu0 %v866
        %1094 = vmatpush.bf16.msra.mxu0 %v862
        %1095 = vmatpush.bf16.msra.mxu0 %v858
        %1096 = vmatpush.bf16.msra.mxu0 %v854
        %1097 = vmatmul.bf16.gmra.mxu0 %v522
        %v1098 = vpop.f32.mrf.mxu0
        %v1099 = vadd.f32 %v1080, %v1098
        %v1100 = vpop.f32.mrf.mxu0
        %v1101 = vadd.f32 %v1082, %v1100
        %1102 = vmatmul.bf16.gmra.mxu0 %v525
        %v1103 = vpop.f32.mrf.mxu0
        %v1104 = vadd.f32 %v1085, %v1103
        %v1105 = vpop.f32.mrf.mxu0
        %v1106 = vadd.f32 %v1087, %v1105
        %1107 = vdwg.mxu0
        %1108 = vmatpush.bf16.msra.mxu0 %v914
        %1109 = vmatpush.bf16.msra.mxu0 %v910
        %1110 = vmatpush.bf16.msra.mxu0 %v906
        %1111 = vmatpush.bf16.msra.mxu0 %v902
        %1112 = vmatpush.bf16.msra.mxu0 %v898
        %1113 = vmatpush.bf16.msra.mxu0 %v894
        %1114 = vmatpush.bf16.msra.mxu0 %v890
        %1115 = vmatpush.bf16.msra.mxu0 %v886
        %1116 = vmatmul.bf16.gmra.mxu0 %v523
        %v1117 = vpop.f32.mrf.mxu0
        %v1118 = vadd.f32 %v1099, %v1117
        %v1119 = vpop.f32.mrf.mxu0
        %v1120 = vadd.f32 %v1101, %v1119
        %1121 = vmatmul.bf16.gmra.mxu0 %v526
        %v1122 = vpop.f32.mrf.mxu0
        %v1123 = vadd.f32 %v1104, %v1122
        %v1124 = vpop.f32.mrf.mxu0
        %v1125 = vadd.f32 %v1106, %v1124
        %1126 = vdwg.mxu0
        %1127 = vmatpush.bf16.msra.mxu0 %v851
        %1128 = vmatpush.bf16.msra.mxu0 %v847
        %1129 = vmatpush.bf16.msra.mxu0 %v843
        %1130 = vmatpush.bf16.msra.mxu0 %v839
        %1131 = vmatpush.bf16.msra.mxu0 %v835
        %1132 = vmatpush.bf16.msra.mxu0 %v831
        %1133 = vmatpush.bf16.msra.mxu0 %v827
        %1134 = vmatpush.bf16.msra.mxu0 %v823
        %1135 = vmatmul.bf16.gmra.mxu0 %v521
        %v1136 = vpop.f32.mrf.mxu0
        %v1137 = vadd.f32 %v495, %v1136
        %v1138 = vpop.f32.mrf.mxu0
        %v1139 = vadd.f32 %v495, %v1138
        %1140 = vmatmul.bf16.gmra.mxu0 %v524
        %v1141 = vpop.f32.mrf.mxu0
        %v1142 = vadd.f32 %v495, %v1141
        %v1143 = vpop.f32.mrf.mxu0
        %v1144 = vadd.f32 %v495, %v1143
        %1145 = vdwg.mxu0
        %1146 = vmatpush.bf16.msra.mxu0 %v883
        %1147 = vmatpush.bf16.msra.mxu0 %v879
        %1148 = vmatpush.bf16.msra.mxu0 %v875
        %1149 = vmatpush.bf16.msra.mxu0 %v871
        %1150 = vmatpush.bf16.msra.mxu0 %v867
        %1151 = vmatpush.bf16.msra.mxu0 %v863
        %1152 = vmatpush.bf16.msra.mxu0 %v859
        %1153 = vmatpush.bf16.msra.mxu0 %v855
        %1154 = vmatmul.bf16.gmra.mxu0 %v522
        %v1155 = vpop.f32.mrf.mxu0
        %v1156 = vadd.f32 %v1137, %v1155
        %v1157 = vpop.f32.mrf.mxu0
        %v1158 = vadd.f32 %v1139, %v1157
        %1159 = vmatmul.bf16.gmra.mxu0 %v525
        %v1160 = vpop.f32.mrf.mxu0
        %v1161 = vadd.f32 %v1142, %v1160
        %v1162 = vpop.f32.mrf.mxu0
        %v1163 = vadd.f32 %v1144, %v1162
        %1164 = vdwg.mxu0
        %1165 = vmatpush.bf16.msra.mxu0 %v915
        %1166 = vmatpush.bf16.msra.mxu0 %v911
        %1167 = vmatpush.bf16.msra.mxu0 %v907
        %1168 = vmatpush.bf16.msra.mxu0 %v903
        %1169 = vmatpush.bf16.msra.mxu0 %v899
        %1170 = vmatpush.bf16.msra.mxu0 %v895
        %1171 = vmatpush.bf16.msra.mxu0 %v891
        %1172 = vmatpush.bf16.msra.mxu0 %v887
        %1173 = vmatmul.bf16.gmra.mxu0 %v523
        %v1174 = vpop.f32.mrf.mxu0
        %v1175 = vadd.f32 %v1156, %v1174
        %v1176 = vpop.f32.mrf.mxu0
        %v1177 = vadd.f32 %v1158, %v1176
        %1178 = vmatmul.bf16.gmra.mxu0 %v526
        %v1179 = vpop.f32.mrf.mxu0
        %v1180 = vadd.f32 %v1161, %v1179
        %v1181 = vpop.f32.mrf.mxu0
        %v1182 = vadd.f32 %v1163, %v1181
        %1183 = vdwg.mxu0
        %1184 = vmatpush.bf16.msra.mxu0 %v852
        %1185 = vmatpush.bf16.msra.mxu0 %v848
        %1186 = vmatpush.bf16.msra.mxu0 %v844
        %1187 = vmatpush.bf16.msra.mxu0 %v840
        %1188 = vmatpush.bf16.msra.mxu0 %v836
        %1189 = vmatpush.bf16.msra.mxu0 %v832
        %1190 = vmatpush.bf16.msra.mxu0 %v828
        %1191 = vmatpush.bf16.msra.mxu0 %v824
        %1192 = vmatmul.bf16.gmra.mxu0 %v521
        %v1193 = vpop.f32.mrf.mxu0
        %v1194 = vadd.f32 %v496, %v1193
        %v1195 = vpop.f32.mrf.mxu0
        %v1196 = vadd.f32 %v496, %v1195
        %1197 = vmatmul.bf16.gmra.mxu0 %v524
        %v1198 = vpop.f32.mrf.mxu0
        %v1199 = vadd.f32 %v496, %v1198
        %v1200 = vpop.f32.mrf.mxu0
        %v1201 = vadd.f32 %v496, %v1200
        %1202 = vdwg.mxu0
        %1203 = vmatpush.bf16.msra.mxu0 %v884
        %1204 = vmatpush.bf16.msra.mxu0 %v880
        %1205 = vmatpush.bf16.msra.mxu0 %v876
        %1206 = vmatpush.bf16.msra.mxu0 %v872
        %1207 = vmatpush.bf16.msra.mxu0 %v868
        %1208 = vmatpush.bf16.msra.mxu0 %v864
        %1209 = vmatpush.bf16.msra.mxu0 %v860
        %1210 = vmatpush.bf16.msra.mxu0 %v856
        %1211 = vmatmul.bf16.gmra.mxu0 %v522
        %v1212 = vpop.f32.mrf.mxu0
        %v1213 = vadd.f32 %v1194, %v1212
        %v1214 = vpop.f32.mrf.mxu0
        %v1215 = vadd.f32 %v1196, %v1214
        %1216 = vmatmul.bf16.gmra.mxu0 %v525
        %v1217 = vpop.f32.mrf.mxu0
        %v1218 = vadd.f32 %v1199, %v1217
        %v1219 = vpop.f32.mrf.mxu0
        %v1220 = vadd.f32 %v1201, %v1219
        %1221 = vdwg.mxu0
        %1222 = vmatpush.bf16.msra.mxu0 %v916
        %1223 = vmatpush.bf16.msra.mxu0 %v912
        %1224 = vmatpush.bf16.msra.mxu0 %v908
        %1225 = vmatpush.bf16.msra.mxu0 %v904
        %1226 = vmatpush.bf16.msra.mxu0 %v900
        %1227 = vmatpush.bf16.msra.mxu0 %v896
        %1228 = vmatpush.bf16.msra.mxu0 %v892
        %1229 = vmatpush.bf16.msra.mxu0 %v888
        %1230 = vmatmul.bf16.gmra.mxu0 %v523
        %v1231 = vpop.f32.mrf.mxu0
        %v1232 = vadd.f32 %v1213, %v1231
        %v1233 = vpop.f32.mrf.mxu0
        %v1234 = vadd.f32 %v1215, %v1233
        %1235 = vmatmul.bf16.gmra.mxu0 %v526
        %v1236 = vpop.f32.mrf.mxu0
        %v1237 = vadd.f32 %v1218, %v1236
        %v1238 = vpop.f32.mrf.mxu0
        %v1239 = vadd.f32 %v1220, %v1238
        %1240 = vdwg.mxu0
        %1241 = vst [vmem:[#allocation2] sm:$0xff] %v1061
        %1242 = vst [vmem:[#allocation2 + $0x8] sm:$0xff] %v1118
        %1243 = vst [vmem:[#allocation2 + $0x10] sm:$0xff] %v1175
        %1244 = vst [vmem:[#allocation2 + $0x18] sm:$0xff] %v1232
        %1245 = vst [vmem:[#allocation2 + $0x20] sm:$0xff] %v1063
        %1246 = vst [vmem:[#allocation2 + $0x28] sm:$0xff] %v1120
        %1247 = vst [vmem:[#allocation2 + $0x30] sm:$0xff] %v1177
        %1248 = vst [vmem:[#allocation2 + $0x38] sm:$0xff] %v1234
        %1249 = vst [vmem:[#allocation2 + $0x40] sm:$0xff] %v1066
        %1250 = vst [vmem:[#allocation2 + $0x48] sm:$0xff] %v1123
        %1251 = vst [vmem:[#allocation2 + $0x50] sm:$0xff] %v1180
        %1252 = vst [vmem:[#allocation2 + $0x58] sm:$0xff] %v1237
        %1253 = vst [vmem:[#allocation2 + $0x60] sm:$0xff] %v1068
        %1254 = vst [vmem:[#allocation2 + $0x68] sm:$0xff] %v1125
        %1255 = vst [vmem:[#allocation2 + $0x70] sm:$0xff] %v1182
        %1256 = vst [vmem:[#allocation2 + $0x78] sm:$0xff] %v1239
        %1257 = vst [vmem:[#allocation3] sm:$0xff] 0.0
        %1258 = vst [vmem:[#allocation3 + $0x8] sm:$0xff] 0.0
        %1259 = vst [vmem:[#allocation3 + $0x10] sm:$0xff] 0.0
        %1260 = vst [vmem:[#allocation3 + $0x18] sm:$0xff] 0.0
        %1261 = vst [vmem:[#allocation3 + $0x20] sm:$0xff] 0.0
        %1262 = vst [vmem:[#allocation3 + $0x28] sm:$0xff] 0.0
        %1263 = vst [vmem:[#allocation3 + $0x30] sm:$0xff] 0.0
        %1264 = vst [vmem:[#allocation3 + $0x38] sm:$0xff] 0.0
      $region56: #{distnn_forward.17} parent=51 // pred_fallthru
        _
      %v1265 = vld [vmem:[#allocation2] sm:$0xff]
      %v1266 = vld [vmem:[#allocation2 + $0x8] sm:$0xff]
      %v1267 = vld [vmem:[#allocation2 + $0x10] sm:$0xff]
      %v1268 = vld [vmem:[#allocation2 + $0x18] sm:$0xff]
      %v1269 = vld [vmem:[#allocation2 + $0x20] sm:$0xff]
      %v1270 = vld [vmem:[#allocation2 + $0x28] sm:$0xff]
      %v1271 = vld [vmem:[#allocation2 + $0x30] sm:$0xff]
      %v1272 = vld [vmem:[#allocation2 + $0x38] sm:$0xff]
      %v1273 = vld [vmem:[#allocation2 + $0x40] sm:$0xff]
      %v1274 = vld [vmem:[#allocation2 + $0x48] sm:$0xff]
      %v1275 = vld [vmem:[#allocation2 + $0x50] sm:$0xff]
      %v1276 = vld [vmem:[#allocation2 + $0x58] sm:$0xff]
      %v1277 = vld [vmem:[#allocation2 + $0x60] sm:$0xff]
      %v1278 = vld [vmem:[#allocation2 + $0x68] sm:$0xff]
      %v1279 = vld [vmem:[#allocation2 + $0x70] sm:$0xff]
      %v1280 = vld [vmem:[#allocation2 + $0x78] sm:$0xff]
      %v1281 = vld [vmem:[%s366] sm:$0xff]
      %v1282 = vld [vmem:[%s366 + $0x8] sm:$0xf]
      %v1283 = vld [vmem:[%s366 + $0xc] sm:$0xff]
      %v1284 = vld [vmem:[%s366 + $0x14] sm:$0xf]
      %v1285 = vld [vmem:[%s366 + $0x18] sm:$0xff]
      %v1286 = vld [vmem:[%s366 + $0x20] sm:$0xf]
      %v1287 = vld [vmem:[%s366 + $0x24] sm:$0xff]
      %v1288 = vld [vmem:[%s366 + $0x2c] sm:$0xf]
      %v1289 = vld [vmem:[%s4] sm:$0xff]
      %v1290 = vld [vmem:[%s4 + $0x8] sm:$0xff]
      %v1291 = vld [vmem:[%s4 + $0x10] sm:$0xff]
      %v1292 = vld [vmem:[%s4 + $0x18] sm:$0xff]
      %v1293 = vld [vmem:[%s4 + $0x20] sm:$0xff]
      %v1294 = vld [vmem:[%s4 + $0x28] sm:$0xff]
      %v1295 = vld [vmem:[%s4 + $0x30] sm:$0xff]
      %v1296 = vld [vmem:[%s4 + $0x38] sm:$0xff]
      %v1297 = vld [vmem:[%s4 + $0x40] sm:$0xff]
      %v1298 = vld [vmem:[%s4 + $0x48] sm:$0xff]
      %v1299 = vld [vmem:[%s4 + $0x50] sm:$0xff]
      %v1300 = vld [vmem:[%s4 + $0x58] sm:$0xff]
      %v1301 = vld [vmem:[%s4 + $0x60] sm:$0xff]
      %v1302 = vld [vmem:[%s4 + $0x68] sm:$0xff]
      %v1303 = vld [vmem:[%s4 + $0x70] sm:$0xff]
      %v1304 = vld [vmem:[%s4 + $0x78] sm:$0xff]
      %v1305 = vld [vmem:[%s4 + $0x80] sm:$0xff]
      %v1306 = vld [vmem:[%s4 + $0x88] sm:$0xff]
      %v1307 = vld [vmem:[%s4 + $0x90] sm:$0xff]
      %v1308 = vld [vmem:[%s4 + $0x98] sm:$0xff]
      %v1309 = vld [vmem:[%s4 + $0xa0] sm:$0xff]
      %v1310 = vld [vmem:[%s4 + $0xa8] sm:$0xff]
      %v1311 = vld [vmem:[%s4 + $0xb0] sm:$0xff]
      %v1312 = vld [vmem:[%s4 + $0xb8] sm:$0xff]
      %v1313 = vld [vmem:[%s4 + $0xc0] sm:$0xff]
      %v1314 = vld [vmem:[%s4 + $0xc8] sm:$0xff]
      %v1315 = vld [vmem:[%s4 + $0xd0] sm:$0xff]
      %v1316 = vld [vmem:[%s4 + $0xd8] sm:$0xff]
      %v1317 = vld [vmem:[%s4 + $0xe0] sm:$0xff]
      %v1318 = vld [vmem:[%s4 + $0xe8] sm:$0xff]
      %v1319 = vld [vmem:[%s4 + $0xf0] sm:$0xff]
      %v1320 = vld [vmem:[%s4 + $0xf8] sm:$0xff]
      %v1321 = vld [vmem:[%s4 + $0x100] sm:$0xff]
      %v1322 = vld [vmem:[%s4 + $0x108] sm:$0xff]
      %v1323 = vld [vmem:[%s4 + $0x110] sm:$0xff]
      %v1324 = vld [vmem:[%s4 + $0x118] sm:$0xff]
      %v1325 = vld [vmem:[%s4 + $0x120] sm:$0xff]
      %v1326 = vld [vmem:[%s4 + $0x128] sm:$0xff]
      %v1327 = vld [vmem:[%s4 + $0x130] sm:$0xff]
      %v1328 = vld [vmem:[%s4 + $0x138] sm:$0xff]
      %v1329 = vld [vmem:[%s4 + $0x140] sm:$0xff]
      %v1330 = vld [vmem:[%s4 + $0x148] sm:$0xff]
      %v1331 = vld [vmem:[%s4 + $0x150] sm:$0xff]
      %v1332 = vld [vmem:[%s4 + $0x158] sm:$0xff]
      %v1333 = vld [vmem:[%s4 + $0x160] sm:$0xff]
      %v1334 = vld [vmem:[%s4 + $0x168] sm:$0xff]
      %v1335 = vld [vmem:[%s4 + $0x170] sm:$0xff]
      %v1336 = vld [vmem:[%s4 + $0x178] sm:$0xff]
      %v1337 = vld [vmem:[%s4 + $0x180] sm:$0xff]
      %v1338 = vld [vmem:[%s4 + $0x188] sm:$0xff]
      %v1339 = vld [vmem:[%s4 + $0x190] sm:$0xff]
      %v1340 = vld [vmem:[%s4 + $0x198] sm:$0xff]
      %v1341 = vld [vmem:[%s4 + $0x1a0] sm:$0xff]
      %v1342 = vld [vmem:[%s4 + $0x1a8] sm:$0xff]
      %v1343 = vld [vmem:[%s4 + $0x1b0] sm:$0xff]
      %v1344 = vld [vmem:[%s4 + $0x1b8] sm:$0xff]
      %v1345 = vld [vmem:[%s4 + $0x1c0] sm:$0xff]
      %v1346 = vld [vmem:[%s4 + $0x1c8] sm:$0xff]
      %v1347 = vld [vmem:[%s4 + $0x1d0] sm:$0xff]
      %v1348 = vld [vmem:[%s4 + $0x1d8] sm:$0xff]
      %v1349 = vld [vmem:[%s4 + $0x1e0] sm:$0xff]
      %v1350 = vld [vmem:[%s4 + $0x1e8] sm:$0xff]
      %v1351 = vld [vmem:[%s4 + $0x1f0] sm:$0xff]
      %v1352 = vld [vmem:[%s4 + $0x1f8] sm:$0xff]
      %v1353 = vld [vmem:[%s4 + $0x200] sm:$0xff]
      %v1354 = vld [vmem:[%s4 + $0x208] sm:$0xff]
      %v1355 = vld [vmem:[%s4 + $0x210] sm:$0xff]
      %v1356 = vld [vmem:[%s4 + $0x218] sm:$0xff]
      %v1357 = vld [vmem:[%s4 + $0x220] sm:$0xff]
      %v1358 = vld [vmem:[%s4 + $0x228] sm:$0xff]
      %v1359 = vld [vmem:[%s4 + $0x230] sm:$0xff]
      %v1360 = vld [vmem:[%s4 + $0x238] sm:$0xff]
      %v1361 = vld [vmem:[%s4 + $0x240] sm:$0xff]
      %v1362 = vld [vmem:[%s4 + $0x248] sm:$0xff]
      %v1363 = vld [vmem:[%s4 + $0x250] sm:$0xff]
      %v1364 = vld [vmem:[%s4 + $0x258] sm:$0xff]
      %v1365 = vld [vmem:[%s4 + $0x260] sm:$0xff]
      %v1366 = vld [vmem:[%s4 + $0x268] sm:$0xff]
      %v1367 = vld [vmem:[%s4 + $0x270] sm:$0xff]
      %v1368 = vld [vmem:[%s4 + $0x278] sm:$0xff]
      %v1369 = vld [vmem:[%s4 + $0x280] sm:$0xff]
      %v1370 = vld [vmem:[%s4 + $0x288] sm:$0xff]
      %v1371 = vld [vmem:[%s4 + $0x290] sm:$0xff]
      %v1372 = vld [vmem:[%s4 + $0x298] sm:$0xff]
      %v1373 = vld [vmem:[%s4 + $0x2a0] sm:$0xff]
      %v1374 = vld [vmem:[%s4 + $0x2a8] sm:$0xff]
      %v1375 = vld [vmem:[%s4 + $0x2b0] sm:$0xff]
      %v1376 = vld [vmem:[%s4 + $0x2b8] sm:$0xff]
      %v1377 = vld [vmem:[%s4 + $0x2c0] sm:$0xff]
      %v1378 = vld [vmem:[%s4 + $0x2c8] sm:$0xff]
      %v1379 = vld [vmem:[%s4 + $0x2d0] sm:$0xff]
      %v1380 = vld [vmem:[%s4 + $0x2d8] sm:$0xff]
      %v1381 = vld [vmem:[%s4 + $0x2e0] sm:$0xff]
      %v1382 = vld [vmem:[%s4 + $0x2e8] sm:$0xff]
      %v1383 = vld [vmem:[%s4 + $0x2f0] sm:$0xff]
      %v1384 = vld [vmem:[%s4 + $0x2f8] sm:$0xff]
      %v1393 = vunpack.c.l.b16 %v1281
      %v1394 = vunpack.c.h.b16 %v1281
      %v1395 = vunpack.c.l.b16 %v1282
      %v1396 = vunpack.c.l.b16 %v1283
      %v1397 = vunpack.c.h.b16 %v1283
      %v1398 = vunpack.c.l.b16 %v1284
      %v1399 = vunpack.c.l.b16 %v1285
      %v1400 = vunpack.c.h.b16 %v1285
      %v1401 = vunpack.c.l.b16 %v1286
      %v1402 = vunpack.c.l.b16 %v1287
      %v1403 = vunpack.c.h.b16 %v1287
      %v1404 = vunpack.c.l.b16 %v1288
      %v1405 = vpack.c.b16 %v1396, %v1393
      %v1406 = vpack.c.b16 %v1397, %v1394
      %v1407 = vpack.c.b16 %v1398, %v1395
      %v1408 = vpack.c.b16 %v1402, %v1399
      %v1409 = vpack.c.b16 %v1403, %v1400
      %v1410 = vpack.c.b16 %v1404, %v1401
      %v1513 = vunpack.c.l.b16 %v1289
      %v1514 = vunpack.c.h.b16 %v1289
      %v1515 = vunpack.c.l.b16 %v1290
      %v1516 = vunpack.c.h.b16 %v1290
      %v1517 = vunpack.c.l.b16 %v1291
      %v1518 = vunpack.c.h.b16 %v1291
      %v1519 = vunpack.c.l.b16 %v1292
      %v1520 = vunpack.c.h.b16 %v1292
      %v1521 = vunpack.c.l.b16 %v1293
      %v1522 = vunpack.c.h.b16 %v1293
      %v1523 = vunpack.c.l.b16 %v1294
      %v1524 = vunpack.c.h.b16 %v1294
      %v1525 = vunpack.c.l.b16 %v1295
      %v1526 = vunpack.c.h.b16 %v1295
      %v1527 = vunpack.c.l.b16 %v1296
      %v1528 = vunpack.c.h.b16 %v1296
      %v1529 = vunpack.c.l.b16 %v1297
      %v1530 = vunpack.c.h.b16 %v1297
      %v1531 = vunpack.c.l.b16 %v1298
      %v1532 = vunpack.c.h.b16 %v1298
      %v1533 = vunpack.c.l.b16 %v1299
      %v1534 = vunpack.c.h.b16 %v1299
      %v1535 = vunpack.c.l.b16 %v1300
      %v1536 = vunpack.c.h.b16 %v1300
      %v1537 = vunpack.c.l.b16 %v1301
      %v1538 = vunpack.c.h.b16 %v1301
      %v1539 = vunpack.c.l.b16 %v1302
      %v1540 = vunpack.c.h.b16 %v1302
      %v1541 = vunpack.c.l.b16 %v1303
      %v1542 = vunpack.c.h.b16 %v1303
      %v1543 = vunpack.c.l.b16 %v1304
      %v1544 = vunpack.c.h.b16 %v1304
      %v1545 = vunpack.c.l.b16 %v1305
      %v1546 = vunpack.c.h.b16 %v1305
      %v1547 = vunpack.c.l.b16 %v1306
      %v1548 = vunpack.c.h.b16 %v1306
      %v1549 = vunpack.c.l.b16 %v1307
      %v1550 = vunpack.c.h.b16 %v1307
      %v1551 = vunpack.c.l.b16 %v1308
      %v1552 = vunpack.c.h.b16 %v1308
      %v1553 = vunpack.c.l.b16 %v1309
      %v1554 = vunpack.c.h.b16 %v1309
      %v1555 = vunpack.c.l.b16 %v1310
      %v1556 = vunpack.c.h.b16 %v1310
      %v1557 = vunpack.c.l.b16 %v1311
      %v1558 = vunpack.c.h.b16 %v1311
      %v1559 = vunpack.c.l.b16 %v1312
      %v1560 = vunpack.c.h.b16 %v1312
      %v1561 = vunpack.c.l.b16 %v1313
      %v1562 = vunpack.c.h.b16 %v1313
      %v1563 = vunpack.c.l.b16 %v1314
      %v1564 = vunpack.c.h.b16 %v1314
      %v1565 = vunpack.c.l.b16 %v1315
      %v1566 = vunpack.c.h.b16 %v1315
      %v1567 = vunpack.c.l.b16 %v1316
      %v1568 = vunpack.c.h.b16 %v1316
      %v1569 = vunpack.c.l.b16 %v1317
      %v1570 = vunpack.c.h.b16 %v1317
      %v1571 = vunpack.c.l.b16 %v1318
      %v1572 = vunpack.c.h.b16 %v1318
      %v1573 = vunpack.c.l.b16 %v1319
      %v1574 = vunpack.c.h.b16 %v1319
      %v1575 = vunpack.c.l.b16 %v1320
      %v1576 = vunpack.c.h.b16 %v1320
      %v1577 = vunpack.c.l.b16 %v1321
      %v1578 = vunpack.c.h.b16 %v1321
      %v1579 = vunpack.c.l.b16 %v1322
      %v1580 = vunpack.c.h.b16 %v1322
      %v1581 = vunpack.c.l.b16 %v1323
      %v1582 = vunpack.c.h.b16 %v1323
      %v1583 = vunpack.c.l.b16 %v1324
      %v1584 = vunpack.c.h.b16 %v1324
      %v1585 = vunpack.c.l.b16 %v1325
      %v1586 = vunpack.c.h.b16 %v1325
      %v1587 = vunpack.c.l.b16 %v1326
      %v1588 = vunpack.c.h.b16 %v1326
      %v1589 = vunpack.c.l.b16 %v1327
      %v1590 = vunpack.c.h.b16 %v1327
      %v1591 = vunpack.c.l.b16 %v1328
      %v1592 = vunpack.c.h.b16 %v1328
      %v1593 = vunpack.c.l.b16 %v1329
      %v1594 = vunpack.c.h.b16 %v1329
      %v1595 = vunpack.c.l.b16 %v1330
      %v1596 = vunpack.c.h.b16 %v1330
      %v1597 = vunpack.c.l.b16 %v1331
      %v1598 = vunpack.c.h.b16 %v1331
      %v1599 = vunpack.c.l.b16 %v1332
      %v1600 = vunpack.c.h.b16 %v1332
      %v1601 = vunpack.c.l.b16 %v1333
      %v1602 = vunpack.c.h.b16 %v1333
      %v1603 = vunpack.c.l.b16 %v1334
      %v1604 = vunpack.c.h.b16 %v1334
      %v1605 = vunpack.c.l.b16 %v1335
      %v1606 = vunpack.c.h.b16 %v1335
      %v1607 = vunpack.c.l.b16 %v1336
      %v1608 = vunpack.c.h.b16 %v1336
      %v1609 = vunpack.c.l.b16 %v1337
      %v1610 = vunpack.c.h.b16 %v1337
      %v1611 = vunpack.c.l.b16 %v1338
      %v1612 = vunpack.c.h.b16 %v1338
      %v1613 = vunpack.c.l.b16 %v1339
      %v1614 = vunpack.c.h.b16 %v1339
      %v1615 = vunpack.c.l.b16 %v1340
      %v1616 = vunpack.c.h.b16 %v1340
      %v1617 = vunpack.c.l.b16 %v1341
      %v1618 = vunpack.c.h.b16 %v1341
      %v1619 = vunpack.c.l.b16 %v1342
      %v1620 = vunpack.c.h.b16 %v1342
      %v1621 = vunpack.c.l.b16 %v1343
      %v1622 = vunpack.c.h.b16 %v1343
      %v1623 = vunpack.c.l.b16 %v1344
      %v1624 = vunpack.c.h.b16 %v1344
      %v1625 = vunpack.c.l.b16 %v1345
      %v1626 = vunpack.c.h.b16 %v1345
      %v1627 = vunpack.c.l.b16 %v1346
      %v1628 = vunpack.c.h.b16 %v1346
      %v1629 = vunpack.c.l.b16 %v1347
      %v1630 = vunpack.c.h.b16 %v1347
      %v1631 = vunpack.c.l.b16 %v1348
      %v1632 = vunpack.c.h.b16 %v1348
      %v1633 = vunpack.c.l.b16 %v1349
      %v1634 = vunpack.c.h.b16 %v1349
      %v1635 = vunpack.c.l.b16 %v1350
      %v1636 = vunpack.c.h.b16 %v1350
      %v1637 = vunpack.c.l.b16 %v1351
      %v1638 = vunpack.c.h.b16 %v1351
      %v1639 = vunpack.c.l.b16 %v1352
      %v1640 = vunpack.c.h.b16 %v1352
      %v1641 = vunpack.c.l.b16 %v1353
      %v1642 = vunpack.c.h.b16 %v1353
      %v1643 = vunpack.c.l.b16 %v1354
      %v1644 = vunpack.c.h.b16 %v1354
      %v1645 = vunpack.c.l.b16 %v1355
      %v1646 = vunpack.c.h.b16 %v1355
      %v1647 = vunpack.c.l.b16 %v1356
      %v1648 = vunpack.c.h.b16 %v1356
      %v1649 = vunpack.c.l.b16 %v1357
      %v1650 = vunpack.c.h.b16 %v1357
      %v1651 = vunpack.c.l.b16 %v1358
      %v1652 = vunpack.c.h.b16 %v1358
      %v1653 = vunpack.c.l.b16 %v1359
      %v1654 = vunpack.c.h.b16 %v1359
      %v1655 = vunpack.c.l.b16 %v1360
      %v1656 = vunpack.c.h.b16 %v1360
      %v1657 = vunpack.c.l.b16 %v1361
      %v1658 = vunpack.c.h.b16 %v1361
      %v1659 = vunpack.c.l.b16 %v1362
      %v1660 = vunpack.c.h.b16 %v1362
      %v1661 = vunpack.c.l.b16 %v1363
      %v1662 = vunpack.c.h.b16 %v1363
      %v1663 = vunpack.c.l.b16 %v1364
      %v1664 = vunpack.c.h.b16 %v1364
      %v1665 = vunpack.c.l.b16 %v1365
      %v1666 = vunpack.c.h.b16 %v1365
      %v1667 = vunpack.c.l.b16 %v1366
      %v1668 = vunpack.c.h.b16 %v1366
      %v1669 = vunpack.c.l.b16 %v1367
      %v1670 = vunpack.c.h.b16 %v1367
      %v1671 = vunpack.c.l.b16 %v1368
      %v1672 = vunpack.c.h.b16 %v1368
      %v1673 = vunpack.c.l.b16 %v1369
      %v1674 = vunpack.c.h.b16 %v1369
      %v1675 = vunpack.c.l.b16 %v1370
      %v1676 = vunpack.c.h.b16 %v1370
      %v1677 = vunpack.c.l.b16 %v1371
      %v1678 = vunpack.c.h.b16 %v1371
      %v1679 = vunpack.c.l.b16 %v1372
      %v1680 = vunpack.c.h.b16 %v1372
      %v1681 = vunpack.c.l.b16 %v1373
      %v1682 = vunpack.c.h.b16 %v1373
      %v1683 = vunpack.c.l.b16 %v1374
      %v1684 = vunpack.c.h.b16 %v1374
      %v1685 = vunpack.c.l.b16 %v1375
      %v1686 = vunpack.c.h.b16 %v1375
      %v1687 = vunpack.c.l.b16 %v1376
      %v1688 = vunpack.c.h.b16 %v1376
      %v1689 = vunpack.c.l.b16 %v1377
      %v1690 = vunpack.c.h.b16 %v1377
      %v1691 = vunpack.c.l.b16 %v1378
      %v1692 = vunpack.c.h.b16 %v1378
      %v1693 = vunpack.c.l.b16 %v1379
      %v1694 = vunpack.c.h.b16 %v1379
      %v1695 = vunpack.c.l.b16 %v1380
      %v1696 = vunpack.c.h.b16 %v1380
      %v1697 = vunpack.c.l.b16 %v1381
      %v1698 = vunpack.c.h.b16 %v1381
      %v1699 = vunpack.c.l.b16 %v1382
      %v1700 = vunpack.c.h.b16 %v1382
      %v1701 = vunpack.c.l.b16 %v1383
      %v1702 = vunpack.c.h.b16 %v1383
      %v1703 = vunpack.c.l.b16 %v1384
      %v1704 = vunpack.c.h.b16 %v1384
      %v1705 = vpack.c.b16 %v1517, %v1513
      %v1706 = vpack.c.b16 %v1518, %v1514
      %v1707 = vpack.c.b16 %v1519, %v1515
      %v1708 = vpack.c.b16 %v1520, %v1516
      %v1709 = vpack.c.b16 %v1525, %v1521
      %v1710 = vpack.c.b16 %v1526, %v1522
      %v1711 = vpack.c.b16 %v1527, %v1523
      %v1712 = vpack.c.b16 %v1528, %v1524
      %v1713 = vpack.c.b16 %v1533, %v1529
      %v1714 = vpack.c.b16 %v1534, %v1530
      %v1715 = vpack.c.b16 %v1535, %v1531
      %v1716 = vpack.c.b16 %v1536, %v1532
      %v1717 = vpack.c.b16 %v1541, %v1537
      %v1718 = vpack.c.b16 %v1542, %v1538
      %v1719 = vpack.c.b16 %v1543, %v1539
      %v1720 = vpack.c.b16 %v1544, %v1540
      %v1721 = vpack.c.b16 %v1549, %v1545
      %v1722 = vpack.c.b16 %v1550, %v1546
      %v1723 = vpack.c.b16 %v1551, %v1547
      %v1724 = vpack.c.b16 %v1552, %v1548
      %v1725 = vpack.c.b16 %v1557, %v1553
      %v1726 = vpack.c.b16 %v1558, %v1554
      %v1727 = vpack.c.b16 %v1559, %v1555
      %v1728 = vpack.c.b16 %v1560, %v1556
      %v1729 = vpack.c.b16 %v1565, %v1561
      %v1730 = vpack.c.b16 %v1566, %v1562
      %v1731 = vpack.c.b16 %v1567, %v1563
      %v1732 = vpack.c.b16 %v1568, %v1564
      %v1733 = vpack.c.b16 %v1573, %v1569
      %v1734 = vpack.c.b16 %v1574, %v1570
      %v1735 = vpack.c.b16 %v1575, %v1571
      %v1736 = vpack.c.b16 %v1576, %v1572
      %v1737 = vpack.c.b16 %v1581, %v1577
      %v1738 = vpack.c.b16 %v1582, %v1578
      %v1739 = vpack.c.b16 %v1583, %v1579
      %v1740 = vpack.c.b16 %v1584, %v1580
      %v1741 = vpack.c.b16 %v1589, %v1585
      %v1742 = vpack.c.b16 %v1590, %v1586
      %v1743 = vpack.c.b16 %v1591, %v1587
      %v1744 = vpack.c.b16 %v1592, %v1588
      %v1745 = vpack.c.b16 %v1597, %v1593
      %v1746 = vpack.c.b16 %v1598, %v1594
      %v1747 = vpack.c.b16 %v1599, %v1595
      %v1748 = vpack.c.b16 %v1600, %v1596
      %v1749 = vpack.c.b16 %v1605, %v1601
      %v1750 = vpack.c.b16 %v1606, %v1602
      %v1751 = vpack.c.b16 %v1607, %v1603
      %v1752 = vpack.c.b16 %v1608, %v1604
      %v1753 = vpack.c.b16 %v1613, %v1609
      %v1754 = vpack.c.b16 %v1614, %v1610
      %v1755 = vpack.c.b16 %v1615, %v1611
      %v1756 = vpack.c.b16 %v1616, %v1612
      %v1757 = vpack.c.b16 %v1621, %v1617
      %v1758 = vpack.c.b16 %v1622, %v1618
      %v1759 = vpack.c.b16 %v1623, %v1619
      %v1760 = vpack.c.b16 %v1624, %v1620
      %v1761 = vpack.c.b16 %v1629, %v1625
      %v1762 = vpack.c.b16 %v1630, %v1626
      %v1763 = vpack.c.b16 %v1631, %v1627
      %v1764 = vpack.c.b16 %v1632, %v1628
      %v1765 = vpack.c.b16 %v1637, %v1633
      %v1766 = vpack.c.b16 %v1638, %v1634
      %v1767 = vpack.c.b16 %v1639, %v1635
      %v1768 = vpack.c.b16 %v1640, %v1636
      %v1769 = vpack.c.b16 %v1645, %v1641
      %v1770 = vpack.c.b16 %v1646, %v1642
      %v1771 = vpack.c.b16 %v1647, %v1643
      %v1772 = vpack.c.b16 %v1648, %v1644
      %v1773 = vpack.c.b16 %v1653, %v1649
      %v1774 = vpack.c.b16 %v1654, %v1650
      %v1775 = vpack.c.b16 %v1655, %v1651
      %v1776 = vpack.c.b16 %v1656, %v1652
      %v1777 = vpack.c.b16 %v1661, %v1657
      %v1778 = vpack.c.b16 %v1662, %v1658
      %v1779 = vpack.c.b16 %v1663, %v1659
      %v1780 = vpack.c.b16 %v1664, %v1660
      %v1781 = vpack.c.b16 %v1669, %v1665
      %v1782 = vpack.c.b16 %v1670, %v1666
      %v1783 = vpack.c.b16 %v1671, %v1667
      %v1784 = vpack.c.b16 %v1672, %v1668
      %v1785 = vpack.c.b16 %v1677, %v1673
      %v1786 = vpack.c.b16 %v1678, %v1674
      %v1787 = vpack.c.b16 %v1679, %v1675
      %v1788 = vpack.c.b16 %v1680, %v1676
      %v1789 = vpack.c.b16 %v1685, %v1681
      %v1790 = vpack.c.b16 %v1686, %v1682
      %v1791 = vpack.c.b16 %v1687, %v1683
      %v1792 = vpack.c.b16 %v1688, %v1684
      %v1793 = vpack.c.b16 %v1693, %v1689
      %v1794 = vpack.c.b16 %v1694, %v1690
      %v1795 = vpack.c.b16 %v1695, %v1691
      %v1796 = vpack.c.b16 %v1696, %v1692
      %v1797 = vpack.c.b16 %v1701, %v1697
      %v1798 = vpack.c.b16 %v1702, %v1698
      %v1799 = vpack.c.b16 %v1703, %v1699
      %v1800 = vpack.c.b16 %v1704, %v1700
      %1897 = vmatpush.bf16.msra.mxu0 %v1733
      %1898 = vmatpush.bf16.msra.mxu0 %v1729
      %1899 = vmatpush.bf16.msra.mxu0 %v1725
      %1900 = vmatpush.bf16.msra.mxu0 %v1721
      %1901 = vmatpush.bf16.msra.mxu0 %v1717
      %1902 = vmatpush.bf16.msra.mxu0 %v1713
      %1903 = vmatpush.bf16.msra.mxu0 %v1709
      %1904 = vmatpush.bf16.msra.mxu0 %v1705
      %1905 = vmatmul.bf16.gmra.mxu0 %v1405
      %v1906 = vpop.f32.mrf.mxu0
      %v1907 = vadd.f32 0.0, %v1906
      %v1908 = vpop.f32.mrf.mxu0
      %v1909 = vadd.f32 0.0, %v1908
      %1910 = vmatmul.bf16.gmra.mxu0 %v1408
      %v1911 = vpop.f32.mrf.mxu0
      %v1912 = vadd.f32 0.0, %v1911
      %v1913 = vpop.f32.mrf.mxu0
      %v1914 = vadd.f32 0.0, %v1913
      %1915 = vdwg.mxu0
      %1916 = vmatpush.bf16.msra.mxu0 %v1765
      %1917 = vmatpush.bf16.msra.mxu0 %v1761
      %1918 = vmatpush.bf16.msra.mxu0 %v1757
      %1919 = vmatpush.bf16.msra.mxu0 %v1753
      %1920 = vmatpush.bf16.msra.mxu0 %v1749
      %1921 = vmatpush.bf16.msra.mxu0 %v1745
      %1922 = vmatpush.bf16.msra.mxu0 %v1741
      %1923 = vmatpush.bf16.msra.mxu0 %v1737
      %1924 = vmatmul.bf16.gmra.mxu0 %v1406
      %v1925 = vpop.f32.mrf.mxu0
      %v1926 = vadd.f32 %v1907, %v1925
      %v1927 = vpop.f32.mrf.mxu0
      %v1928 = vadd.f32 %v1909, %v1927
      %1929 = vmatmul.bf16.gmra.mxu0 %v1409
      %v1930 = vpop.f32.mrf.mxu0
      %v1931 = vadd.f32 %v1912, %v1930
      %v1932 = vpop.f32.mrf.mxu0
      %v1933 = vadd.f32 %v1914, %v1932
      %1934 = vdwg.mxu0
      %1935 = vmatpush.bf16.msra.mxu0 %v1797
      %1936 = vmatpush.bf16.msra.mxu0 %v1793
      %1937 = vmatpush.bf16.msra.mxu0 %v1789
      %1938 = vmatpush.bf16.msra.mxu0 %v1785
      %1939 = vmatpush.bf16.msra.mxu0 %v1781
      %1940 = vmatpush.bf16.msra.mxu0 %v1777
      %1941 = vmatpush.bf16.msra.mxu0 %v1773
      %1942 = vmatpush.bf16.msra.mxu0 %v1769
      %1943 = vmatmul.bf16.gmra.mxu0 %v1407
      %v1944 = vpop.f32.mrf.mxu0
      %v1945 = vadd.f32 %v1926, %v1944
      %v1946 = vpop.f32.mrf.mxu0
      %v1947 = vadd.f32 %v1928, %v1946
      %1948 = vmatmul.bf16.gmra.mxu0 %v1410
      %v1949 = vpop.f32.mrf.mxu0
      %v1950 = vadd.f32 %v1931, %v1949
      %v1951 = vpop.f32.mrf.mxu0
      %v1952 = vadd.f32 %v1933, %v1951
      %1953 = vdwg.mxu0
      %1954 = vmatpush.bf16.msra.mxu0 %v1734
      %1955 = vmatpush.bf16.msra.mxu0 %v1730
      %1956 = vmatpush.bf16.msra.mxu0 %v1726
      %1957 = vmatpush.bf16.msra.mxu0 %v1722
      %1958 = vmatpush.bf16.msra.mxu0 %v1718
      %1959 = vmatpush.bf16.msra.mxu0 %v1714
      %1960 = vmatpush.bf16.msra.mxu0 %v1710
      %1961 = vmatpush.bf16.msra.mxu0 %v1706
      %1962 = vmatmul.bf16.gmra.mxu0 %v1405
      %v1963 = vpop.f32.mrf.mxu0
      %v1964 = vadd.f32 0.0, %v1963
      %v1965 = vpop.f32.mrf.mxu0
      %v1966 = vadd.f32 0.0, %v1965
      %1967 = vmatmul.bf16.gmra.mxu0 %v1408
      %v1968 = vpop.f32.mrf.mxu0
      %v1969 = vadd.f32 0.0, %v1968
      %v1970 = vpop.f32.mrf.mxu0
      %v1971 = vadd.f32 0.0, %v1970
      %1972 = vdwg.mxu0
      %1973 = vmatpush.bf16.msra.mxu0 %v1766
      %1974 = vmatpush.bf16.msra.mxu0 %v1762
      %1975 = vmatpush.bf16.msra.mxu0 %v1758
      %1976 = vmatpush.bf16.msra.mxu0 %v1754
      %1977 = vmatpush.bf16.msra.mxu0 %v1750
      %1978 = vmatpush.bf16.msra.mxu0 %v1746
      %1979 = vmatpush.bf16.msra.mxu0 %v1742
      %1980 = vmatpush.bf16.msra.mxu0 %v1738
      %1981 = vmatmul.bf16.gmra.mxu0 %v1406
      %v1982 = vpop.f32.mrf.mxu0
      %v1983 = vadd.f32 %v1964, %v1982
      %v1984 = vpop.f32.mrf.mxu0
      %v1985 = vadd.f32 %v1966, %v1984
      %1986 = vmatmul.bf16.gmra.mxu0 %v1409
      %v1987 = vpop.f32.mrf.mxu0
      %v1988 = vadd.f32 %v1969, %v1987
      %v1989 = vpop.f32.mrf.mxu0
      %v1990 = vadd.f32 %v1971, %v1989
      %1991 = vdwg.mxu0
      %1992 = vmatpush.bf16.msra.mxu0 %v1798
      %1993 = vmatpush.bf16.msra.mxu0 %v1794
      %1994 = vmatpush.bf16.msra.mxu0 %v1790
      %1995 = vmatpush.bf16.msra.mxu0 %v1786
      %1996 = vmatpush.bf16.msra.mxu0 %v1782
      %1997 = vmatpush.bf16.msra.mxu0 %v1778
      %1998 = vmatpush.bf16.msra.mxu0 %v1774
      %1999 = vmatpush.bf16.msra.mxu0 %v1770
      %2000 = vmatmul.bf16.gmra.mxu0 %v1407
      %v2001 = vpop.f32.mrf.mxu0
      %v2002 = vadd.f32 %v1983, %v2001
      %v2003 = vpop.f32.mrf.mxu0
      %v2004 = vadd.f32 %v1985, %v2003
      %2005 = vmatmul.bf16.gmra.mxu0 %v1410
      %v2006 = vpop.f32.mrf.mxu0
      %v2007 = vadd.f32 %v1988, %v2006
      %v2008 = vpop.f32.mrf.mxu0
      %v2009 = vadd.f32 %v1990, %v2008
      %2010 = vdwg.mxu0
      %2011 = vmatpush.bf16.msra.mxu0 %v1735
      %2012 = vmatpush.bf16.msra.mxu0 %v1731
      %2013 = vmatpush.bf16.msra.mxu0 %v1727
      %2014 = vmatpush.bf16.msra.mxu0 %v1723
      %2015 = vmatpush.bf16.msra.mxu0 %v1719
      %2016 = vmatpush.bf16.msra.mxu0 %v1715
      %2017 = vmatpush.bf16.msra.mxu0 %v1711
      %2018 = vmatpush.bf16.msra.mxu0 %v1707
      %2019 = vmatmul.bf16.gmra.mxu0 %v1405
      %v2020 = vpop.f32.mrf.mxu0
      %v2021 = vadd.f32 0.0, %v2020
      %v2022 = vpop.f32.mrf.mxu0
      %v2023 = vadd.f32 0.0, %v2022
      %2024 = vmatmul.bf16.gmra.mxu0 %v1408
      %v2025 = vpop.f32.mrf.mxu0
      %v2026 = vadd.f32 0.0, %v2025
      %v2027 = vpop.f32.mrf.mxu0
      %v2028 = vadd.f32 0.0, %v2027
      %2029 = vdwg.mxu0
      %2030 = vmatpush.bf16.msra.mxu0 %v1767
      %2031 = vmatpush.bf16.msra.mxu0 %v1763
      %2032 = vmatpush.bf16.msra.mxu0 %v1759
      %2033 = vmatpush.bf16.msra.mxu0 %v1755
      %2034 = vmatpush.bf16.msra.mxu0 %v1751
      %2035 = vmatpush.bf16.msra.mxu0 %v1747
      %2036 = vmatpush.bf16.msra.mxu0 %v1743
      %2037 = vmatpush.bf16.msra.mxu0 %v1739
      %2038 = vmatmul.bf16.gmra.mxu0 %v1406
      %v2039 = vpop.f32.mrf.mxu0
      %v2040 = vadd.f32 %v2021, %v2039
      %v2041 = vpop.f32.mrf.mxu0
      %v2042 = vadd.f32 %v2023, %v2041
      %2043 = vmatmul.bf16.gmra.mxu0 %v1409
      %v2044 = vpop.f32.mrf.mxu0
      %v2045 = vadd.f32 %v2026, %v2044
      %v2046 = vpop.f32.mrf.mxu0
      %v2047 = vadd.f32 %v2028, %v2046
      %2048 = vdwg.mxu0
      %2049 = vmatpush.bf16.msra.mxu0 %v1799
      %2050 = vmatpush.bf16.msra.mxu0 %v1795
      %2051 = vmatpush.bf16.msra.mxu0 %v1791
      %2052 = vmatpush.bf16.msra.mxu0 %v1787
      %2053 = vmatpush.bf16.msra.mxu0 %v1783
      %2054 = vmatpush.bf16.msra.mxu0 %v1779
      %2055 = vmatpush.bf16.msra.mxu0 %v1775
      %2056 = vmatpush.bf16.msra.mxu0 %v1771
      %2057 = vmatmul.bf16.gmra.mxu0 %v1407
      %v2058 = vpop.f32.mrf.mxu0
      %v2059 = vadd.f32 %v2040, %v2058
      %v2060 = vpop.f32.mrf.mxu0
      %v2061 = vadd.f32 %v2042, %v2060
      %2062 = vmatmul.bf16.gmra.mxu0 %v1410
      %v2063 = vpop.f32.mrf.mxu0
      %v2064 = vadd.f32 %v2045, %v2063
      %v2065 = vpop.f32.mrf.mxu0
      %v2066 = vadd.f32 %v2047, %v2065
      %2067 = vdwg.mxu0
      %2068 = vmatpush.bf16.msra.mxu0 %v1736
      %2069 = vmatpush.bf16.msra.mxu0 %v1732
      %2070 = vmatpush.bf16.msra.mxu0 %v1728
      %2071 = vmatpush.bf16.msra.mxu0 %v1724
      %2072 = vmatpush.bf16.msra.mxu0 %v1720
      %2073 = vmatpush.bf16.msra.mxu0 %v1716
      %2074 = vmatpush.bf16.msra.mxu0 %v1712
      %2075 = vmatpush.bf16.msra.mxu0 %v1708
      %2076 = vmatmul.bf16.gmra.mxu0 %v1405
      %v2077 = vpop.f32.mrf.mxu0
      %v2078 = vadd.f32 0.0, %v2077
      %v2079 = vpop.f32.mrf.mxu0
      %v2080 = vadd.f32 0.0, %v2079
      %2081 = vmatmul.bf16.gmra.mxu0 %v1408
      %v2082 = vpop.f32.mrf.mxu0
      %v2083 = vadd.f32 0.0, %v2082
      %v2084 = vpop.f32.mrf.mxu0
      %v2085 = vadd.f32 0.0, %v2084
      %2086 = vdwg.mxu0
      %2087 = vmatpush.bf16.msra.mxu0 %v1768
      %2088 = vmatpush.bf16.msra.mxu0 %v1764
      %2089 = vmatpush.bf16.msra.mxu0 %v1760
      %2090 = vmatpush.bf16.msra.mxu0 %v1756
      %2091 = vmatpush.bf16.msra.mxu0 %v1752
      %2092 = vmatpush.bf16.msra.mxu0 %v1748
      %2093 = vmatpush.bf16.msra.mxu0 %v1744
      %2094 = vmatpush.bf16.msra.mxu0 %v1740
      %2095 = vmatmul.bf16.gmra.mxu0 %v1406
      %v2096 = vpop.f32.mrf.mxu0
      %v2097 = vadd.f32 %v2078, %v2096
      %v2098 = vpop.f32.mrf.mxu0
      %v2099 = vadd.f32 %v2080, %v2098
      %2100 = vmatmul.bf16.gmra.mxu0 %v1409
      %v2101 = vpop.f32.mrf.mxu0
      %v2102 = vadd.f32 %v2083, %v2101
      %v2103 = vpop.f32.mrf.mxu0
      %v2104 = vadd.f32 %v2085, %v2103
      %2105 = vdwg.mxu0
      %2106 = vmatpush.bf16.msra.mxu0 %v1800
      %2107 = vmatpush.bf16.msra.mxu0 %v1796
      %2108 = vmatpush.bf16.msra.mxu0 %v1792
      %2109 = vmatpush.bf16.msra.mxu0 %v1788
      %2110 = vmatpush.bf16.msra.mxu0 %v1784
      %2111 = vmatpush.bf16.msra.mxu0 %v1780
      %2112 = vmatpush.bf16.msra.mxu0 %v1776
      %2113 = vmatpush.bf16.msra.mxu0 %v1772
      %2114 = vmatmul.bf16.gmra.mxu0 %v1407
      %v2115 = vpop.f32.mrf.mxu0
      %v2116 = vadd.f32 %v2097, %v2115
      %v2117 = vpop.f32.mrf.mxu0
      %v2118 = vadd.f32 %v2099, %v2117
      %2119 = vmatmul.bf16.gmra.mxu0 %v1410
      %v2120 = vpop.f32.mrf.mxu0
      %v2121 = vadd.f32 %v2102, %v2120
      %v2122 = vpop.f32.mrf.mxu0
      %v2123 = vadd.f32 %v2104, %v2122
      %2124 = vdwg.mxu0
      %v2125 = vadd.f32 %v1265, %v1945
      %v2126 = vadd.f32 %v1266, %v2002
      %v2127 = vadd.f32 %v1267, %v2059
      %v2128 = vadd.f32 %v1268, %v2116
      %v2129 = vadd.f32 %v1269, %v1947
      %v2130 = vadd.f32 %v1270, %v2004
      %v2131 = vadd.f32 %v1271, %v2061
      %v2132 = vadd.f32 %v1272, %v2118
      %v2133 = vadd.f32 %v1273, %v1950
      %v2134 = vadd.f32 %v1274, %v2007
      %v2135 = vadd.f32 %v1275, %v2064
      %v2136 = vadd.f32 %v1276, %v2121
      %v2137 = vadd.f32 %v1277, %v1952
      %v2138 = vadd.f32 %v1278, %v2009
      %v2139 = vadd.f32 %v1279, %v2066
      %v2140 = vadd.f32 %v1280, %v2123
      %v2141 = vmax.f32 %v2125, 0.0
      %v2142 = vmax.f32 %v2126, 0.0
      %v2143 = vmax.f32 %v2127, 0.0
      %v2144 = vmax.f32 %v2128, 0.0
      %v2145 = vmax.f32 %v2129, 0.0
      %v2146 = vmax.f32 %v2130, 0.0
      %v2147 = vmax.f32 %v2131, 0.0
      %v2148 = vmax.f32 %v2132, 0.0
      %v2149 = vmax.f32 %v2133, 0.0
      %v2150 = vmax.f32 %v2134, 0.0
      %v2151 = vmax.f32 %v2135, 0.0
      %v2152 = vmax.f32 %v2136, 0.0
      %v2153 = vmax.f32 %v2137, 0.0
      %v2154 = vmax.f32 %v2138, 0.0
      %v2155 = vmax.f32 %v2139, 0.0
      %v2156 = vmax.f32 %v2140, 0.0
      %v2157 = vmax.f32 %v2141, %v2142
      %2158 = vmax.xlane.f32.xlu0 %v2157
      %v2159 = vpop.xlane.xlu0 %2158
      %v2160 = vmax.f32 %v2145, %v2146
      %2161 = vmax.xlane.f32.xlu0 %v2160
      %v2162 = vpop.xlane.xlu0 %2161
      %v2163 = vmax.f32 %v2149, %v2150
      %2164 = vmax.xlane.f32.xlu0 %v2163
      %v2165 = vpop.xlane.xlu0 %2164
      %v2166 = vmax.f32 %v2153, %v2154
      %2167 = vmax.xlane.f32.xlu0 %v2166
      %v2168 = vpop.xlane.xlu0 %2167
      %v2169 = vsub.f32 %v2141, %v2159
      %v2170 = vsub.f32 %v2142, %v2159
      %v2171 = vsub.f32 %v2145, %v2162
      %v2172 = vsub.f32 %v2146, %v2162
      %v2173 = vsub.f32 %v2149, %v2165
      %v2174 = vsub.f32 %v2150, %v2165
      %v2175 = vsub.f32 %v2153, %v2168
      %v2176 = vsub.f32 %v2154, %v2168
      %v2177 = vmul.f32 %v2169, 1.442695
      %v2178 = vpow.pop %v2177
      %v2179 = vmul.f32 %v2170, 1.442695
      %v2180 = vpow.pop %v2179
      %v2181 = vmul.f32 %v2171, 1.442695
      %v2182 = vpow.pop %v2181
      %v2183 = vmul.f32 %v2172, 1.442695
      %v2184 = vpow.pop %v2183
      %v2185 = vmul.f32 %v2173, 1.442695
      %v2186 = vpow.pop %v2185
      %v2187 = vmul.f32 %v2174, 1.442695
      %v2188 = vpow.pop %v2187
      %v2189 = vmul.f32 %v2175, 1.442695
      %v2190 = vpow.pop %v2189
      %v2191 = vmul.f32 %v2176, 1.442695
      %v2192 = vpow.pop %v2191
      %v2193 = vadd.f32 %v2178, %v2180
      %2194 = vadd.xlane.f32.xlu0 %v2193
      %v2195 = vpop.xlane.xlu0 %2194
      %v2196 = vadd.f32 %v2182, %v2184
      %2197 = vadd.xlane.f32.xlu0 %v2196
      %v2198 = vpop.xlane.xlu0 %2197
      %v2199 = vadd.f32 %v2186, %v2188
      %2200 = vadd.xlane.f32.xlu0 %v2199
      %v2201 = vpop.xlane.xlu0 %2200
      %v2202 = vadd.f32 %v2190, %v2192
      %2203 = vadd.xlane.f32.xlu0 %v2202
      %v2204 = vpop.xlane.xlu0 %2203
      %v2205 = vrcp.pop %v2195
      %v2206 = vrcp.pop %v2198
      %v2207 = vrcp.pop %v2201
      %v2208 = vrcp.pop %v2204
      %v2209 = vmul.f32 %v2178, %v2205
      %v2210 = vmul.f32 %v2180, %v2205
      %v2211 = vmul.f32 %v2182, %v2206
      %v2212 = vmul.f32 %v2184, %v2206
      %v2213 = vmul.f32 %v2186, %v2207
      %v2214 = vmul.f32 %v2188, %v2207
      %v2215 = vmul.f32 %v2190, %v2208
      %v2216 = vmul.f32 %v2192, %v2208
      %v2217 = vmax.f32 %v2143, 0.0
      %v2218 = vmax.f32 %v2144, 0.0
      %v2219 = vmax.f32 %v2147, 0.0
      %v2220 = vmax.f32 %v2148, 0.0
      %v2221 = vmax.f32 %v2151, 0.0
      %v2222 = vmax.f32 %v2152, 0.0
      %v2223 = vmax.f32 %v2155, 0.0
      %v2224 = vmax.f32 %v2156, 0.0
      %v2225 = vand.u32 2147483647, %v2143
      %v2226 = vand.u32 2147483647, %v2144
      %v2227 = vand.u32 2147483647, %v2147
      %v2228 = vand.u32 2147483647, %v2148
      %v2229 = vand.u32 2147483647, %v2151
      %v2230 = vand.u32 2147483647, %v2152
      %v2231 = vand.u32 2147483647, %v2155
      %v2232 = vand.u32 2147483647, %v2156
      %v2233 = vsub.f32 0.0, %v2225
      %v2234 = vsub.f32 0.0, %v2226
      %v2235 = vsub.f32 0.0, %v2227
      %v2236 = vsub.f32 0.0, %v2228
      %v2237 = vsub.f32 0.0, %v2229
      %v2238 = vsub.f32 0.0, %v2230
      %v2239 = vsub.f32 0.0, %v2231
      %v2240 = vsub.f32 0.0, %v2232
      %v2241 = vmul.f32 %v2233, 1.442695
      %v2242 = vpow.pop %v2241
      %v2243 = vmul.f32 %v2234, 1.442695
      %v2244 = vpow.pop %v2243
      %v2245 = vmul.f32 %v2235, 1.442695
      %v2246 = vpow.pop %v2245
      %v2247 = vmul.f32 %v2236, 1.442695
      %v2248 = vpow.pop %v2247
      %v2249 = vmul.f32 %v2237, 1.442695
      %v2250 = vpow.pop %v2249
      %v2251 = vmul.f32 %v2238, 1.442695
      %v2252 = vpow.pop %v2251
      %v2253 = vmul.f32 %v2239, 1.442695
      %v2254 = vpow.pop %v2253
      %v2255 = vmul.f32 %v2240, 1.442695
      %v2256 = vpow.pop %v2255
      %v2257 = vadd.f32 %v2242, 1.0
      %v2258 = vlog2.pop %v2257
      %v2259 = vmul.f32 %v2258, 0.6931472
      %v2260 = vmul.f32 -0.5, %v2242
      %v2261 = vadd.f32 %v2260, 1.0
      %v2262 = vmul.f32 %v2261, %v2242
      %v2263 = vand.u32 2147483647, %v2242
      %vm2264 = vcmp.lt.f32.partialorder %v2263, 0.0004427343
      %v2265 = vsel %vm2264, %v2262, %v2259
      %v2266 = vadd.f32 %v2244, 1.0
      %v2267 = vlog2.pop %v2266
      %v2268 = vmul.f32 %v2267, 0.6931472
      %v2269 = vmul.f32 -0.5, %v2244
      %v2270 = vadd.f32 %v2269, 1.0
      %v2271 = vmul.f32 %v2270, %v2244
      %v2272 = vand.u32 2147483647, %v2244
      %vm2273 = vcmp.lt.f32.partialorder %v2272, 0.0004427343
      %v2274 = vsel %vm2273, %v2271, %v2268
      %v2275 = vadd.f32 %v2246, 1.0
      %v2276 = vlog2.pop %v2275
      %v2277 = vmul.f32 %v2276, 0.6931472
      %v2278 = vmul.f32 -0.5, %v2246
      %v2279 = vadd.f32 %v2278, 1.0
      %v2280 = vmul.f32 %v2279, %v2246
      %v2281 = vand.u32 2147483647, %v2246
      %vm2282 = vcmp.lt.f32.partialorder %v2281, 0.0004427343
      %v2283 = vsel %vm2282, %v2280, %v2277
      %v2284 = vadd.f32 %v2248, 1.0
      %v2285 = vlog2.pop %v2284
      %v2286 = vmul.f32 %v2285, 0.6931472
      %v2287 = vmul.f32 -0.5, %v2248
      %v2288 = vadd.f32 %v2287, 1.0
      %v2289 = vmul.f32 %v2288, %v2248
      %v2290 = vand.u32 2147483647, %v2248
      %vm2291 = vcmp.lt.f32.partialorder %v2290, 0.0004427343
      %v2292 = vsel %vm2291, %v2289, %v2286
      %v2293 = vadd.f32 %v2250, 1.0
      %v2294 = vlog2.pop %v2293
      %v2295 = vmul.f32 %v2294, 0.6931472
      %v2296 = vmul.f32 -0.5, %v2250
      %v2297 = vadd.f32 %v2296, 1.0
      %v2298 = vmul.f32 %v2297, %v2250
      %v2299 = vand.u32 2147483647, %v2250
      %vm2300 = vcmp.lt.f32.partialorder %v2299, 0.0004427343
      %v2301 = vsel %vm2300, %v2298, %v2295
      %v2302 = vadd.f32 %v2252, 1.0
      %v2303 = vlog2.pop %v2302
      %v2304 = vmul.f32 %v2303, 0.6931472
      %v2305 = vmul.f32 -0.5, %v2252
      %v2306 = vadd.f32 %v2305, 1.0
      %v2307 = vmul.f32 %v2306, %v2252
      %v2308 = vand.u32 2147483647, %v2252
      %vm2309 = vcmp.lt.f32.partialorder %v2308, 0.0004427343
      %v2310 = vsel %vm2309, %v2307, %v2304
      %v2311 = vadd.f32 %v2254, 1.0
      %v2312 = vlog2.pop %v2311
      %v2313 = vmul.f32 %v2312, 0.6931472
      %v2314 = vmul.f32 -0.5, %v2254
      %v2315 = vadd.f32 %v2314, 1.0
      %v2316 = vmul.f32 %v2315, %v2254
      %v2317 = vand.u32 2147483647, %v2254
      %vm2318 = vcmp.lt.f32.partialorder %v2317, 0.0004427343
      %v2319 = vsel %vm2318, %v2316, %v2313
      %v2320 = vadd.f32 %v2256, 1.0
      %v2321 = vlog2.pop %v2320
      %v2322 = vmul.f32 %v2321, 0.6931472
      %v2323 = vmul.f32 -0.5, %v2256
      %v2324 = vadd.f32 %v2323, 1.0
      %v2325 = vmul.f32 %v2324, %v2256
      %v2326 = vand.u32 2147483647, %v2256
      %vm2327 = vcmp.lt.f32.partialorder %v2326, 0.0004427343
      %v2328 = vsel %vm2327, %v2325, %v2322
      %v2329 = vadd.f32 %v2217, %v2265
      %v2330 = vadd.f32 %v2218, %v2274
      %v2331 = vadd.f32 %v2219, %v2283
      %v2332 = vadd.f32 %v2220, %v2292
      %v2333 = vadd.f32 %v2221, %v2301
      %v2334 = vadd.f32 %v2222, %v2310
      %v2335 = vadd.f32 %v2223, %v2319
      %v2336 = vadd.f32 %v2224, %v2328
      %v2337 = vld [vmem:[#allocation3] sm:$0xff]
      %v2338 = vld [vmem:[#allocation3 + $0x8] sm:$0xff]
      %v2339 = vld [vmem:[#allocation3 + $0x10] sm:$0xff]
      %v2340 = vld [vmem:[#allocation3 + $0x18] sm:$0xff]
      %v2341 = vld [vmem:[#allocation3 + $0x20] sm:$0xff]
      %v2342 = vld [vmem:[#allocation3 + $0x28] sm:$0xff]
      %v2343 = vld [vmem:[#allocation3 + $0x30] sm:$0xff]
      %v2344 = vld [vmem:[#allocation3 + $0x38] sm:$0xff]
      %v2345 = vmul.f32 %v2209, %v2329
      %v2346 = vmul.f32 %v2210, %v2330
      %v2347 = vmul.f32 %v2211, %v2331
      %v2348 = vmul.f32 %v2212, %v2332
      %v2349 = vmul.f32 %v2213, %v2333
      %v2350 = vmul.f32 %v2214, %v2334
      %v2351 = vmul.f32 %v2215, %v2335
      %v2352 = vmul.f32 %v2216, %v2336
      %v2353 = vadd.f32 %v2337, %v2345
      %v2354 = vadd.f32 %v2338, %v2346
      %v2355 = vadd.f32 %v2339, %v2347
      %v2356 = vadd.f32 %v2340, %v2348
      %v2357 = vadd.f32 %v2341, %v2349
      %v2358 = vadd.f32 %v2342, %v2350
      %v2359 = vadd.f32 %v2343, %v2351
      %v2360 = vadd.f32 %v2344, %v2352
      %2361 = vst [vmem:[#allocation3] sm:$0xff] %v2353
      %2362 = vst [vmem:[#allocation3 + $0x8] sm:$0xff] %v2354
      %2363 = vst [vmem:[#allocation3 + $0x10] sm:$0xff] %v2355
      %2364 = vst [vmem:[#allocation3 + $0x18] sm:$0xff] %v2356
      %2365 = vst [vmem:[#allocation3 + $0x20] sm:$0xff] %v2357
      %2366 = vst [vmem:[#allocation3 + $0x28] sm:$0xff] %v2358
      %2367 = vst [vmem:[#allocation3 + $0x30] sm:$0xff] %v2359
      %2368 = vst [vmem:[#allocation3 + $0x38] sm:$0xff] %v2360
      %p2369 = scmp.eq.s32.totalorder %s24, 3
      // Predicated region
      $region57: #{distnn_forward.17} parent=51 // pred_check
        %p2370 = pneg %p2369
      $region58: #{distnn_forward.17} parent=51 // pred_check_branch
        %2372 = sbr.rel (%p2370) target = $region60
      $region59: #{distnn_forward.17} parent=51 // pred_region
        %v2373 = vld [vmem:[#allocation3] sm:$0xff]
        %v2374 = vld [vmem:[#allocation3 + $0x8] sm:$0xff]
        %v2375 = vld [vmem:[#allocation3 + $0x10] sm:$0xff]
        %v2376 = vld [vmem:[#allocation3 + $0x18] sm:$0xff]
        %v2377 = vld [vmem:[#allocation3 + $0x20] sm:$0xff]
        %v2378 = vld [vmem:[#allocation3 + $0x28] sm:$0xff]
        %v2379 = vld [vmem:[#allocation3 + $0x30] sm:$0xff]
        %v2380 = vld [vmem:[#allocation3 + $0x38] sm:$0xff]
        %v2381 = vld [vmem:[%s6] sm:$0x3]
        %v2383 = vperm.slane %v2381, 0
        %v2384 = vperm.slane %v2381, 1
        %v2387 = vmul.f32 %v2373, %v2383
        %v2388 = vmul.f32 %v2374, %v2384
        %v2389 = vmul.f32 %v2375, %v2383
        %v2390 = vmul.f32 %v2376, %v2384
        %v2391 = vmul.f32 %v2377, %v2383
        %v2392 = vmul.f32 %v2378, %v2384
        %v2393 = vmul.f32 %v2379, %v2383
        %v2394 = vmul.f32 %v2380, %v2384
        %v2395 = vld [vmem:[%s7] sm:$0x3]
        %v2397 = vperm.slane %v2395, 0
        %v2398 = vperm.slane %v2395, 1
        %v2401 = vadd.f32 %v2387, %v2397
        %v2402 = vadd.f32 %v2388, %v2398
        %v2403 = vadd.f32 %v2389, %v2397
        %v2404 = vadd.f32 %v2390, %v2398
        %v2405 = vadd.f32 %v2391, %v2397
        %v2406 = vadd.f32 %v2392, %v2398
        %v2407 = vadd.f32 %v2393, %v2397
        %v2408 = vadd.f32 %v2394, %v2398
        %v2409 = vld [vmem:[%s374] sm:$0xff]
        %v2410 = vld [vmem:[%s374 + $0x8] sm:$0xff]
        %v2411 = vld [vmem:[%s374 + $0x10] sm:$0xff]
        %v2412 = vld [vmem:[%s374 + $0x18] sm:$0xff]
        %v2413 = vld [vmem:[%s374 + $0x20] sm:$0xff]
        %v2414 = vld [vmem:[%s374 + $0x28] sm:$0xff]
        %v2415 = vld [vmem:[%s374 + $0x30] sm:$0xff]
        %v2416 = vld [vmem:[%s374 + $0x38] sm:$0xff]
        %v2417 = vadd.f32 %v2401, %v2409
        %v2418 = vadd.f32 %v2402, %v2410
        %v2419 = vadd.f32 %v2403, %v2411
        %v2420 = vadd.f32 %v2404, %v2412
        %v2421 = vadd.f32 %v2405, %v2413
        %v2422 = vadd.f32 %v2406, %v2414
        %v2423 = vadd.f32 %v2407, %v2415
        %v2424 = vadd.f32 %v2408, %v2416
        %v2425 = vmax.f32 %v2417, 0.0
        %v2426 = vmax.f32 %v2418, 0.0
        %v2427 = vmax.f32 %v2419, 0.0
        %v2428 = vmax.f32 %v2420, 0.0
        %v2429 = vmax.f32 %v2421, 0.0
        %v2430 = vmax.f32 %v2422, 0.0
        %v2431 = vmax.f32 %v2423, 0.0
        %v2432 = vmax.f32 %v2424, 0.0
        %2433 = vst [vmem:[%s381] sm:$0xff] %v2425
        %2434 = vst [vmem:[%s381 + $0x8] sm:$0xff] %v2426
        %2435 = vst [vmem:[%s381 + $0x10] sm:$0xff] %v2427
        %2436 = vst [vmem:[%s381 + $0x18] sm:$0xff] %v2428
        %2437 = vst [vmem:[%s381 + $0x20] sm:$0xff] %v2429
        %2438 = vst [vmem:[%s381 + $0x28] sm:$0xff] %v2430
        %2439 = vst [vmem:[%s381 + $0x30] sm:$0xff] %v2431
        %2440 = vst [vmem:[%s381 + $0x38] sm:$0xff] %v2432
      $region60: #{distnn_forward.17} parent=51 // pred_fallthru
        _
      %s2441 = smul.u32 4, %s23
      %p2442 = scmp.lt.s32.totalorder %s2441, 3
      %s2443 = scalar_select %p2442, %s2441, 3
      %s2444 = smul.addr %s2443, 2
      %s2445 = smul.addr %s2444, 8
      %s2446 = scalar_lea.vmem %s8, %s2445
      // Predicated region
      $region61: #{distnn_forward.17} parent=51 // pred_check
        %p2447 = pneg %p234
      $region62: #{distnn_forward.17} parent=51 // pred_check_branch
        %2449 = sbr.rel (%p2447) target = $region64
      $region63: #{distnn_forward.17} parent=51 // pred_region
        %s2450 = smul.u32 4, %s23
      $region64: #{distnn_forward.17} parent=51 // pred_fallthru
        _
      // Predicated region
      $region65: #{distnn_forward.17} parent=51 // pred_check
        %p2451 = pneg %p234
      $region66: #{distnn_forward.17} parent=51 // pred_check_branch
        %2453 = sbr.rel (%p2451) target = $region68
      $region67: #{distnn_forward.17} parent=51 // pred_region
        %s2454 = smul.u32 4, %s23
        %p2455 = scmp.lt.s32.totalorder %s2454, 3
        %s2456 = scalar_select %p2455, %s2454, 3
        %s2457 = smul.addr %s2456, 2
        %s2458 = smul.addr %s2457, 8
        %s2459 = scalar_lea.vmem %s8, %s2458
      $region68: #{distnn_forward.17} parent=51 // pred_fallthru
        _
    $region52: #{distnn_forward.17} parent=5 // pred_fallthru
      _
    %p2460 = scmp.le.s32.totalorder 2, %s14
    // Predicated region
    $region69: #{distnn_forward.17} parent=5 // pred_check
      %p2461 = pneg %p2460
    $region70: #{distnn_forward.17} parent=5 // pred_check_branch
      %2463 = sbr.rel (%p2461) target = $region72
    $region71: #{distnn_forward.17} parent=5 // pred_region
      %s2464 = ssub.s32 %s14, 2
    $region72: #{distnn_forward.17} parent=5 // pred_fallthru
      _
  $region6: #{distnn_forward.17} parent=0 // loop_footer
    %s18 = sadd.s32 1, %s14
  $region7: #{distnn_forward.17} parent=0 // loop_footer_branch
    %13 = sbr.rel target = $region3
  $region8: #{distnn_forward.17} parent=0 // loop_exit
    _

// kernel: distnn_forward.16
$region0: #{distnn_forward.16}
  #allocation0 [shape = 'u32[]', space=smem, size = 0x4, offset = 0x4, fixed_abs, tag = 'smem constant byte address 0x4 - core index']
  #allocation1 [shape = 'u32[72,128]{1,0:T(1,128)}', space=vmem, size = 0x9000, scoped, tag = 'internal scratch']
  #allocation2 [shape = 'f32[32,512]{1,0:T(8,128)}', space=vmem, size = 0x10000, scoped, tag = 'scratch operand']
  #allocation3 [shape = 'f32[32,256]{1,0:T(8,128)}', space=vmem, size = 0x8000, scoped, tag = 'scratch operand']
  %s0 = inlined_call_operand.vmem [shape: bf16[32,384], index: 0, kind: input, shape index: {}]
  %s1 = inlined_call_operand.vmem [shape: bf16[128,384], index: 1, kind: input, shape index: {}]
  %s2 = inlined_call_operand.vmem [shape: f32[32,256], index: 2, kind: input, shape index: {}]
  %s3 = inlined_call_operand.vmem [shape: bf16[384,512], index: 3, kind: input, shape index: {}]
  %s4 = inlined_call_operand.hbm [shape: bf16[384,512], index: 4, kind: input, shape index: {}]
  %s5 = inlined_call_operand.vmem [shape: f32[1,512], index: 5, kind: input, shape index: {}]
  %s6 = inlined_call_operand.vmem [shape: f32[1,256], index: 6, kind: input, shape index: {}]
  %s7 = inlined_call_operand.vmem [shape: f32[1,256], index: 7, kind: input, shape index: {}]
  %s8 = inlined_call_operand.vmem [shape: f32[32,256], index: 8, kind: output, shape index: {}]
  %s9 = sld [smem:[#allocation0]]
  $region77: #{distnn_forward.16} parent=0
    _
  %s11 = ssub.s32 1, %s9
  %s12 = scalar_select 0, %s11, %s9
  $region1: #{distnn_forward.16} parent=0
    #allocation4 [shape = 'u8[393216]{0}', space=vmem, size = 0x60000, scoped, tag = 'input window, operand 4, single buffered']
    #allocation5 [shape = 's32[2]{0}', space=sflag, size = 0x8, scoped, tag = 'scoped memory for distnn_forward.16']
    %13 = vsyncpa [#allocation5], 0
    loop: start=0, step=1, limit=6
    $region2: #{distnn_forward.16} parent=1 // loop_pre_header
      _
    $region3: #{distnn_forward.16} parent=1 // loop_header
      %s15 = sphi 0, %s19
      %p16 = scmp.ge.s32.totalorder %s15, 6
      %s22 = sphi 0, %s34
      %s23 = sphi 0, %s30
      %s24 = sphi 0, %s22
      %s25 = sphi 0, %s23
      %s26 = sphi 0, %s24
      %s27 = sphi 0, %s25
      %s37 = sphi 0, %s39
      %s40 = sphi 0, %s37
      %s41 = sphi 0, %s40
      %s57 = sphi 0, %s41
      %s65 = sphi 0, %s67
      %s68 = sphi 0, %s65
      %s69 = sphi 0, %s68
      %s85 = sphi 0, %s69
      %s91 = sphi 0, %s93
      %s94 = sphi 0, %s91
      %s95 = sphi 0, %s94
      %s111 = sphi 0, %s95
      %s115 = sphi 0, %s115
      %s117 = sphi 0, %s115
      %s118 = sphi 0, %s117
      %s132 = sphi 0, %s118
      %s136 = sphi 0, %s136
      %s138 = sphi 0, %s136
      %s139 = sphi 0, %s138
      %s153 = sphi 0, %s139
      %s157 = sphi 0, %s157
      %s159 = sphi 0, %s157
      %s160 = sphi 0, %s159
      %s174 = sphi 0, %s160
      %s178 = sphi 0, %s178
      %s180 = sphi 0, %s178
      %s181 = sphi 0, %s180
      %s195 = sphi 0, %s181
      %s199 = sphi 0, %s199
      %s201 = sphi 0, %s199
      %s202 = sphi 0, %s201
      %s216 = sphi 0, %s202
      %s222 = sphi 0, %s224
      %s225 = sphi 0, %s222
      %s226 = sphi 0, %s225
      %s242 = sphi 0, %s226
    $region4: #{distnn_forward.16} parent=1 // loop_header_branch
      %18 = sbr.rel (%p16) target = $region8
    $region5: #{distnn_forward.16} parent=1 // loop_body
      %s20 = ssub.s32 %s15, 1
      %s21 = ssub.s32 %s15, 2
      %s28 = sadd.s32 1, %s23
      %p29 = scmp.ge.s32.totalorder %s28, 4
      %s30 = scalar_select %p29, 0, %s28
      %s31 = sadd.s32 1, %s22
      %s32 = scalar_select %p29, %s31, %s22
      %p33 = scmp.ge.s32.totalorder %s32, 1
      %s34 = scalar_select %p33, 0, %s32
      %s35 = ssub.s32 %s22, %s34
      %p36 = scmp.eq.s32.totalorder %s35, 0
      %s38 = sadd.s32 %s37, 1
      %s39 = scalar_select %p36, %s37, %s38
      %p42 = pneg %p36
      %p43 = scmp.eq.s32.totalorder %s15, 3
      %p44 = por %p42, %p43
      %p45 = scmp.ne.s32.totalorder %s37, %s40
      %p46 = scmp.eq.s32.totalorder %s15, 0
      %p47 = por %p45, %p46
      %p48 = scmp.ne.s32.totalorder %s37, %s40
      %p49 = scmp.eq.s32.totalorder %s20, 3
      %p50 = por %p48, %p49
      %p51 = scmp.ne.s32.totalorder %s40, %s41
      %p52 = scmp.eq.s32.totalorder %s20, 0
      %p53 = por %p51, %p52
      %p54 = scmp.ne.s32.totalorder %s40, %s41
      %p55 = scmp.eq.s32.totalorder %s21, 3
      %p56 = por %p54, %p55
      %p58 = scmp.ne.s32.totalorder %s41, %s57
      %p59 = scmp.eq.s32.totalorder %s21, 0
      %p60 = por %p58, %p59
      %s61 = sadd.s32 %s23, %s22
      %s62 = sadd.s32 %s30, %s34
      %s63 = ssub.s32 %s61, %s62
      %p64 = scmp.eq.s32.totalorder %s63, 0
      %s66 = sadd.s32 %s65, 1
      %s67 = scalar_select %p64, %s65, %s66
      %p70 = pneg %p64
      %p71 = scmp.eq.s32.totalorder %s15, 3
      %p72 = por %p70, %p71
      %p73 = scmp.ne.s32.totalorder %s65, %s68
      %p74 = scmp.eq.s32.totalorder %s15, 0
      %p75 = por %p73, %p74
      %p76 = scmp.ne.s32.totalorder %s65, %s68
      %p77 = scmp.eq.s32.totalorder %s20, 3
      %p78 = por %p76, %p77
      %p79 = scmp.ne.s32.totalorder %s68, %s69
      %p80 = scmp.eq.s32.totalorder %s20, 0
      %p81 = por %p79, %p80
      %p82 = scmp.ne.s32.totalorder %s68, %s69
      %p83 = scmp.eq.s32.totalorder %s21, 3
      %p84 = por %p82, %p83
      %p86 = scmp.ne.s32.totalorder %s69, %s85
      %p87 = scmp.eq.s32.totalorder %s21, 0
      %p88 = por %p86, %p87
      %s89 = ssub.s32 %s22, %s34
      %p90 = scmp.eq.s32.totalorder %s89, 0
      %s92 = sadd.s32 %s91, 1
      %s93 = scalar_select %p90, %s91, %s92
      %p96 = pneg %p90
      %p97 = scmp.eq.s32.totalorder %s15, 3
      %p98 = por %p96, %p97
      %p99 = scmp.ne.s32.totalorder %s91, %s94
      %p100 = scmp.eq.s32.totalorder %s15, 0
      %p101 = por %p99, %p100
      %p102 = scmp.ne.s32.totalorder %s91, %s94
      %p103 = scmp.eq.s32.totalorder %s20, 3
      %p104 = por %p102, %p103
      %p105 = scmp.ne.s32.totalorder %s94, %s95
      %p106 = scmp.eq.s32.totalorder %s20, 0
      %p107 = por %p105, %p106
      %p108 = scmp.ne.s32.totalorder %s94, %s95
      %p109 = scmp.eq.s32.totalorder %s21, 3
      %p110 = por %p108, %p109
      %p112 = scmp.ne.s32.totalorder %s95, %s111
      %p113 = scmp.eq.s32.totalorder %s21, 0
      %p114 = por %p112, %p113
      %s116 = sadd.s32 %s115, 1
      %p119 = scmp.eq.s32.totalorder %s15, 3
      %p120 = scmp.ne.s32.totalorder %s115, %s117
      %p121 = scmp.eq.s32.totalorder %s15, 0
      %p122 = por %p120, %p121
      %p123 = scmp.ne.s32.totalorder %s115, %s117
      %p124 = scmp.eq.s32.totalorder %s20, 3
      %p125 = por %p123, %p124
      %p126 = scmp.ne.s32.totalorder %s117, %s118
      %p127 = scmp.eq.s32.totalorder %s20, 0
      %p128 = por %p126, %p127
      %p129 = scmp.ne.s32.totalorder %s117, %s118
      %p130 = scmp.eq.s32.totalorder %s21, 3
      %p131 = por %p129, %p130
      %p133 = scmp.ne.s32.totalorder %s118, %s132
      %p134 = scmp.eq.s32.totalorder %s21, 0
      %p135 = por %p133, %p134
      %s137 = sadd.s32 %s136, 1
      %p140 = scmp.eq.s32.totalorder %s15, 3
      %p141 = scmp.ne.s32.totalorder %s136, %s138
      %p142 = scmp.eq.s32.totalorder %s15, 0
      %p143 = por %p141, %p142
      %p144 = scmp.ne.s32.totalorder %s136, %s138
      %p145 = scmp.eq.s32.totalorder %s20, 3
      %p146 = por %p144, %p145
      %p147 = scmp.ne.s32.totalorder %s138, %s139
      %p148 = scmp.eq.s32.totalorder %s20, 0
      %p149 = por %p147, %p148
      %p150 = scmp.ne.s32.totalorder %s138, %s139
      %p151 = scmp.eq.s32.totalorder %s21, 3
      %p152 = por %p150, %p151
      %p154 = scmp.ne.s32.totalorder %s139, %s153
      %p155 = scmp.eq.s32.totalorder %s21, 0
      %p156 = por %p154, %p155
      %s158 = sadd.s32 %s157, 1
      %p161 = scmp.eq.s32.totalorder %s15, 3
      %p162 = scmp.ne.s32.totalorder %s157, %s159
      %p163 = scmp.eq.s32.totalorder %s15, 0
      %p164 = por %p162, %p163
      %p165 = scmp.ne.s32.totalorder %s157, %s159
      %p166 = scmp.eq.s32.totalorder %s20, 3
      %p167 = por %p165, %p166
      %p168 = scmp.ne.s32.totalorder %s159, %s160
      %p169 = scmp.eq.s32.totalorder %s20, 0
      %p170 = por %p168, %p169
      %p171 = scmp.ne.s32.totalorder %s159, %s160
      %p172 = scmp.eq.s32.totalorder %s21, 3
      %p173 = por %p171, %p172
      %p175 = scmp.ne.s32.totalorder %s160, %s174
      %p176 = scmp.eq.s32.totalorder %s21, 0
      %p177 = por %p175, %p176
      %s179 = sadd.s32 %s178, 1
      %p182 = scmp.eq.s32.totalorder %s15, 3
      %p183 = scmp.ne.s32.totalorder %s178, %s180
      %p184 = scmp.eq.s32.totalorder %s15, 0
      %p185 = por %p183, %p184
      %p186 = scmp.ne.s32.totalorder %s178, %s180
      %p187 = scmp.eq.s32.totalorder %s20, 3
      %p188 = por %p186, %p187
      %p189 = scmp.ne.s32.totalorder %s180, %s181
      %p190 = scmp.eq.s32.totalorder %s20, 0
      %p191 = por %p189, %p190
      %p192 = scmp.ne.s32.totalorder %s180, %s181
      %p193 = scmp.eq.s32.totalorder %s21, 3
      %p194 = por %p192, %p193
      %p196 = scmp.ne.s32.totalorder %s181, %s195
      %p197 = scmp.eq.s32.totalorder %s21, 0
      %p198 = por %p196, %p197
      %s200 = sadd.s32 %s199, 1
      %p203 = scmp.eq.s32.totalorder %s15, 3
      %p204 = scmp.ne.s32.totalorder %s199, %s201
      %p205 = scmp.eq.s32.totalorder %s15, 0
      %p206 = por %p204, %p205
      %p207 = scmp.ne.s32.totalorder %s199, %s201
      %p208 = scmp.eq.s32.totalorder %s20, 3
      %p209 = por %p207, %p208
      %p210 = scmp.ne.s32.totalorder %s201, %s202
      %p211 = scmp.eq.s32.totalorder %s20, 0
      %p212 = por %p210, %p211
      %p213 = scmp.ne.s32.totalorder %s201, %s202
      %p214 = scmp.eq.s32.totalorder %s21, 3
      %p215 = por %p213, %p214
      %p217 = scmp.ne.s32.totalorder %s202, %s216
      %p218 = scmp.eq.s32.totalorder %s21, 0
      %p219 = por %p217, %p218
      %s220 = ssub.s32 %s22, %s34
      %p221 = scmp.eq.s32.totalorder %s220, 0
      %s223 = sadd.s32 %s222, 1
      %s224 = scalar_select %p221, %s222, %s223
      %p227 = pneg %p221
      %p228 = scmp.eq.s32.totalorder %s15, 3
      %p229 = por %p227, %p228
      %p230 = scmp.ne.s32.totalorder %s222, %s225
      %p231 = scmp.eq.s32.totalorder %s15, 0
      %p232 = por %p230, %p231
      %p233 = scmp.ne.s32.totalorder %s222, %s225
      %p234 = scmp.eq.s32.totalorder %s20, 3
      %p235 = por %p233, %p234
      %p236 = scmp.ne.s32.totalorder %s225, %s226
      %p237 = scmp.eq.s32.totalorder %s20, 0
      %p238 = por %p236, %p237
      %p239 = scmp.ne.s32.totalorder %s225, %s226
      %p240 = scmp.eq.s32.totalorder %s21, 3
      %p241 = por %p239, %p240
      %p243 = scmp.ne.s32.totalorder %s226, %s242
      %p244 = scmp.eq.s32.totalorder %s21, 0
      %p245 = por %p243, %p244
      %p246 = scmp.le.s32.totalorder 1, %s15
      %p247 = scmp.lt.s32.totalorder %s15, 5
      %p248 = pnand %p246, %p247
      %p249 = pneg %p248
      // Predicated region
      $region9: #{distnn_forward.16} parent=5 // pred_check
        _
      $region10: #{distnn_forward.16} parent=5 // pred_check_branch
        %251 = sbr.rel (%p248) target = $region12
      $region11: #{distnn_forward.16} parent=5 // pred_region
        %s252 = ssub.s32 %s15, 1
        // Predicated region
        $region13: #{distnn_forward.16} parent=11 // pred_check
          %p253 = pneg %p53
        $region14: #{distnn_forward.16} parent=11 // pred_check_branch
          %255 = sbr.rel (%p253) target = $region16
        $region15: #{distnn_forward.16} parent=11 // pred_region
          %s256 = smul.u32 4, %s24
          %p257 = scmp.lt.s32.totalorder %s256, 3
          %s258 = scalar_select %p257, %s256, 3
          %s259 = smul.addr %s258, 3
          %s260 = smul.addr %s259, 4
          %s261 = scalar_lea.vmem %s0, %s260
          %s262 = smul.u32 4, %s24
        $region16: #{distnn_forward.16} parent=11 // pred_fallthru
          _
        // Predicated region
        $region17: #{distnn_forward.16} parent=11 // pred_check
          %p263 = pneg %p107
        $region18: #{distnn_forward.16} parent=11 // pred_check_branch
          %265 = sbr.rel (%p263) target = $region20
        $region19: #{distnn_forward.16} parent=11 // pred_region
          %s266 = smul.u32 4, %s24
          %p267 = scmp.lt.s32.totalorder %s266, 3
          %s268 = scalar_select %p267, %s266, 3
          %s269 = smul.addr %s268, 2
          %s270 = smul.addr %s269, 8
          %s271 = scalar_lea.vmem %s2, %s270
          %s272 = smul.u32 4, %s24
        $region20: #{distnn_forward.16} parent=11 // pred_fallthru
          _
        // Predicated region
        $region21: #{distnn_forward.16} parent=11 // pred_check
          %p273 = pneg %p128
        $region22: #{distnn_forward.16} parent=11 // pred_check_branch
          %275 = sbr.rel (%p273) target = $region24
        $region23: #{distnn_forward.16} parent=11 // pred_region
          _
        $region24: #{distnn_forward.16} parent=11 // pred_fallthru
          _
        // Predicated region
        $region25: #{distnn_forward.16} parent=11 // pred_check
          %p276 = pneg %p149
        $region26: #{distnn_forward.16} parent=11 // pred_check_branch
          %278 = sbr.rel (%p276) target = $region28
        $region27: #{distnn_forward.16} parent=11 // pred_region
          %280 = vsyncadd [#allocation5], 0
          %s281 = sshll.u32 %s4, 4
          %s282 = int_to_ptr.hbm [resolvable:$true] %s281
          %s283 = sshll.u32 [#allocation4], 4
          %s284 = int_to_ptr.vmem [resolvable:$true] %s283
          %289 = dma.hbm_to_vmem [thread:$0]  %s282, 12288, %s284, [#allocation5], 256, 256, 16
        $region28: #{distnn_forward.16} parent=11 // pred_fallthru
          _
        // Predicated region
        $region29: #{distnn_forward.16} parent=11 // pred_check
          %p290 = pneg %p170
        $region30: #{distnn_forward.16} parent=11 // pred_check_branch
          %292 = sbr.rel (%p290) target = $region32
        $region31: #{distnn_forward.16} parent=11 // pred_region
          _
        $region32: #{distnn_forward.16} parent=11 // pred_fallthru
          _
        // Predicated region
        $region33: #{distnn_forward.16} parent=11 // pred_check
          %p293 = pneg %p191
        $region34: #{distnn_forward.16} parent=11 // pred_check_branch
          %295 = sbr.rel (%p293) target = $region36
        $region35: #{distnn_forward.16} parent=11 // pred_region
          _
        $region36: #{distnn_forward.16} parent=11 // pred_fallthru
          _
        // Predicated region
        $region37: #{distnn_forward.16} parent=11 // pred_check
          %p296 = pneg %p212
        $region38: #{distnn_forward.16} parent=11 // pred_check_branch
          %298 = sbr.rel (%p296) target = $region40
        $region39: #{distnn_forward.16} parent=11 // pred_region
          _
        $region40: #{distnn_forward.16} parent=11 // pred_fallthru
          _
      $region12: #{distnn_forward.16} parent=5 // pred_fallthru
        _
      %p299 = scmp.lt.s32.totalorder %s15, 4
      // Predicated region
      $region41: #{distnn_forward.16} parent=5 // pred_check
        %p300 = pneg %p299
      $region42: #{distnn_forward.16} parent=5 // pred_check_branch
        %302 = sbr.rel (%p300) target = $region44
      $region43: #{distnn_forward.16} parent=5 // pred_region
        // Predicated region
        $region45: #{distnn_forward.16} parent=43 // pred_check
          %p303 = pneg %p75
        $region46: #{distnn_forward.16} parent=43 // pred_check_branch
          %305 = sbr.rel (%p303) target = $region48
        $region47: #{distnn_forward.16} parent=43 // pred_region
          %s306 = sadd.s32 %s23, %s22
          %s307 = smul.u32 4, %s306
          %p308 = scmp.lt.s32.totalorder %s307, 15
          %s309 = scalar_select %p308, %s307, 15
          %s310 = smul.addr %s309, 3
          %s311 = smul.addr %s310, 4
          %s312 = scalar_lea.vmem %s1, %s311
          %s313 = sadd.s32 %s23, %s22
          %s314 = smul.u32 4, %s313
        $region48: #{distnn_forward.16} parent=43 // pred_fallthru
          _
      $region44: #{distnn_forward.16} parent=5 // pred_fallthru
        _
      %p315 = scmp.le.s32.totalorder 1, %s15
      %p316 = scmp.lt.s32.totalorder %s15, 5
      %p317 = pnand %p315, %p316
      %p318 = pneg %p317
      // Predicated region
      $region49: #{distnn_forward.16} parent=5 // pred_check
        _
      $region50: #{distnn_forward.16} parent=5 // pred_check_branch
        %320 = sbr.rel (%p317) target = $region52
      $region51: #{distnn_forward.16} parent=5 // pred_region
        %s321 = ssub.s32 %s15, 1
        // Predicated region
        $region53: #{distnn_forward.16} parent=51 // pred_check
          %p322 = pneg %p149
        $region54: #{distnn_forward.16} parent=51 // pred_check_branch
          %324 = sbr.rel (%p322) target = $region56
        $region55: #{distnn_forward.16} parent=51 // pred_region
          %326 = dma.done [#allocation5], 12288
        $region56: #{distnn_forward.16} parent=51 // pred_fallthru
          _
        %s327 = smul.u32 4, %s24
        %p328 = scmp.lt.s32.totalorder %s327, 3
        %s329 = scalar_select %p328, %s327, 3
        %s330 = smul.addr %s329, 3
        %s331 = smul.addr %s330, 4
        %s332 = scalar_lea.vmem %s0, %s331
        %p333 = pneg %p53
        %p334 = pneg %p50
        %s335 = sadd.s32 %s25, %s24
        %s336 = smul.u32 4, %s335
        %p337 = scmp.lt.s32.totalorder %s336, 15
        %s338 = scalar_select %p337, %s336, 15
        %s339 = smul.addr %s338, 3
        %s340 = smul.addr %s339, 4
        %s341 = scalar_lea.vmem %s1, %s340
        %p342 = pneg %p81
        %p343 = pneg %p78
        %s344 = smul.u32 4, %s24
        %p345 = scmp.lt.s32.totalorder %s344, 3
        %s346 = scalar_select %p345, %s344, 3
        %s347 = smul.addr %s346, 2
        %s348 = smul.addr %s347, 8
        %s349 = scalar_lea.vmem %s2, %s348
        %p350 = pneg %p107
        %p351 = pneg %p104
        %p352 = pneg %p128
        %p353 = pneg %p125
        %p354 = pneg %p149
        %p355 = pneg %p146
        %p356 = pneg %p170
        %p357 = pneg %p167
        %p358 = pneg %p191
        %p359 = pneg %p188
        %p360 = pneg %p212
        %p361 = pneg %p209
        %p362 = pneg %p238
        %p363 = pneg %p235
        %s364 = smul.u32 4, %s24
        %p365 = scmp.lt.s32.totalorder %s364, 3
        %s366 = scalar_select %p365, %s364, 3
        %s367 = smul.addr %s366, 2
        %s368 = smul.addr %s367, 8
        %s369 = scalar_lea.vmem %s8, %s368
        %s370 = smul.u32 4, %s24
        %p371 = scmp.lt.s32.totalorder %s370, 3
        %s372 = scalar_select %p371, %s370, 3
        %s373 = smul.addr %s372, 3
        %s374 = smul.addr %s373, 4
        %s375 = scalar_lea.vmem %s0, %s374
        %s376 = smul.u32 4, %s24
        %s377 = sadd.s32 %s25, %s24
        %s378 = smul.u32 4, %s377
        %p379 = scmp.lt.s32.totalorder %s378, 15
        %s380 = scalar_select %p379, %s378, 15
        %s381 = smul.addr %s380, 3
        %s382 = smul.addr %s381, 4
        %s383 = scalar_lea.vmem %s1, %s382
        %s384 = sadd.s32 %s25, %s24
        %s385 = smul.u32 4, %s384
        %s386 = smul.u32 4, %s24
        %p387 = scmp.lt.s32.totalorder %s386, 3
        %s388 = scalar_select %p387, %s386, 3
        %s389 = smul.addr %s388, 2
        %s390 = smul.addr %s389, 8
        %s391 = scalar_lea.vmem %s2, %s390
        %s392 = smul.u32 4, %s24
        %s393 = smul.u32 4, %s24
        %p394 = scmp.lt.s32.totalorder %s393, 3
        %s395 = scalar_select %p394, %s393, 3
        %s396 = smul.addr %s395, 2
        %s397 = smul.addr %s396, 8
        %s398 = scalar_lea.vmem %s8, %s397
        %s399 = smul.u32 4, %s24
        %p400 = scmp.eq.s32.totalorder %s25, 0
        // Predicated region
        $region57: #{distnn_forward.16} parent=51 // pred_check
          %p401 = pneg %p400
        $region58: #{distnn_forward.16} parent=51 // pred_check_branch
          %403 = sbr.rel (%p401) target = $region60
        $region59: #{distnn_forward.16} parent=51 // pred_region
          %v404 = vld [vmem:[%s375] sm:$0xff]
          %v405 = vld [vmem:[%s375 + $0x8] sm:$0xf]
          %v406 = vld [vmem:[%s375 + $0xc] sm:$0xff]
          %v407 = vld [vmem:[%s375 + $0x14] sm:$0xf]
          %v408 = vld [vmem:[%s375 + $0x18] sm:$0xff]
          %v409 = vld [vmem:[%s375 + $0x20] sm:$0xf]
          %v410 = vld [vmem:[%s375 + $0x24] sm:$0xff]
          %v411 = vld [vmem:[%s375 + $0x2c] sm:$0xf]
          %v412 = vld [vmem:[%s3] sm:$0xff]
          %v413 = vld [vmem:[%s3 + $0x8] sm:$0xff]
          %v414 = vld [vmem:[%s3 + $0x10] sm:$0xff]
          %v415 = vld [vmem:[%s3 + $0x18] sm:$0xff]
          %v416 = vld [vmem:[%s3 + $0x20] sm:$0xff]
          %v417 = vld [vmem:[%s3 + $0x28] sm:$0xff]
          %v418 = vld [vmem:[%s3 + $0x30] sm:$0xff]
          %v419 = vld [vmem:[%s3 + $0x38] sm:$0xff]
          %v420 = vld [vmem:[%s3 + $0x40] sm:$0xff]
          %v421 = vld [vmem:[%s3 + $0x48] sm:$0xff]
          %v422 = vld [vmem:[%s3 + $0x50] sm:$0xff]
          %v423 = vld [vmem:[%s3 + $0x58] sm:$0xff]
          %v424 = vld [vmem:[%s3 + $0x60] sm:$0xff]
          %v425 = vld [vmem:[%s3 + $0x68] sm:$0xff]
          %v426 = vld [vmem:[%s3 + $0x70] sm:$0xff]
          %v427 = vld [vmem:[%s3 + $0x78] sm:$0xff]
          %v428 = vld [vmem:[%s3 + $0x80] sm:$0xff]
          %v429 = vld [vmem:[%s3 + $0x88] sm:$0xff]
          %v430 = vld [vmem:[%s3 + $0x90] sm:$0xff]
          %v431 = vld [vmem:[%s3 + $0x98] sm:$0xff]
          %v432 = vld [vmem:[%s3 + $0xa0] sm:$0xff]
          %v433 = vld [vmem:[%s3 + $0xa8] sm:$0xff]
          %v434 = vld [vmem:[%s3 + $0xb0] sm:$0xff]
          %v435 = vld [vmem:[%s3 + $0xb8] sm:$0xff]
          %v436 = vld [vmem:[%s3 + $0xc0] sm:$0xff]
          %v437 = vld [vmem:[%s3 + $0xc8] sm:$0xff]
          %v438 = vld [vmem:[%s3 + $0xd0] sm:$0xff]
          %v439 = vld [vmem:[%s3 + $0xd8] sm:$0xff]
          %v440 = vld [vmem:[%s3 + $0xe0] sm:$0xff]
          %v441 = vld [vmem:[%s3 + $0xe8] sm:$0xff]
          %v442 = vld [vmem:[%s3 + $0xf0] sm:$0xff]
          %v443 = vld [vmem:[%s3 + $0xf8] sm:$0xff]
          %v444 = vld [vmem:[%s3 + $0x100] sm:$0xff]
          %v445 = vld [vmem:[%s3 + $0x108] sm:$0xff]
          %v446 = vld [vmem:[%s3 + $0x110] sm:$0xff]
          %v447 = vld [vmem:[%s3 + $0x118] sm:$0xff]
          %v448 = vld [vmem:[%s3 + $0x120] sm:$0xff]
          %v449 = vld [vmem:[%s3 + $0x128] sm:$0xff]
          %v450 = vld [vmem:[%s3 + $0x130] sm:$0xff]
          %v451 = vld [vmem:[%s3 + $0x138] sm:$0xff]
          %v452 = vld [vmem:[%s3 + $0x140] sm:$0xff]
          %v453 = vld [vmem:[%s3 + $0x148] sm:$0xff]
          %v454 = vld [vmem:[%s3 + $0x150] sm:$0xff]
          %v455 = vld [vmem:[%s3 + $0x158] sm:$0xff]
          %v456 = vld [vmem:[%s3 + $0x160] sm:$0xff]
          %v457 = vld [vmem:[%s3 + $0x168] sm:$0xff]
          %v458 = vld [vmem:[%s3 + $0x170] sm:$0xff]
          %v459 = vld [vmem:[%s3 + $0x178] sm:$0xff]
          %v460 = vld [vmem:[%s3 + $0x180] sm:$0xff]
          %v461 = vld [vmem:[%s3 + $0x188] sm:$0xff]
          %v462 = vld [vmem:[%s3 + $0x190] sm:$0xff]
          %v463 = vld [vmem:[%s3 + $0x198] sm:$0xff]
          %v464 = vld [vmem:[%s3 + $0x1a0] sm:$0xff]
          %v465 = vld [vmem:[%s3 + $0x1a8] sm:$0xff]
          %v466 = vld [vmem:[%s3 + $0x1b0] sm:$0xff]
          %v467 = vld [vmem:[%s3 + $0x1b8] sm:$0xff]
          %v468 = vld [vmem:[%s3 + $0x1c0] sm:$0xff]
          %v469 = vld [vmem:[%s3 + $0x1c8] sm:$0xff]
          %v470 = vld [vmem:[%s3 + $0x1d0] sm:$0xff]
          %v471 = vld [vmem:[%s3 + $0x1d8] sm:$0xff]
          %v472 = vld [vmem:[%s3 + $0x1e0] sm:$0xff]
          %v473 = vld [vmem:[%s3 + $0x1e8] sm:$0xff]
          %v474 = vld [vmem:[%s3 + $0x1f0] sm:$0xff]
          %v475 = vld [vmem:[%s3 + $0x1f8] sm:$0xff]
          %v476 = vld [vmem:[%s3 + $0x200] sm:$0xff]
          %v477 = vld [vmem:[%s3 + $0x208] sm:$0xff]
          %v478 = vld [vmem:[%s3 + $0x210] sm:$0xff]
          %v479 = vld [vmem:[%s3 + $0x218] sm:$0xff]
          %v480 = vld [vmem:[%s3 + $0x220] sm:$0xff]
          %v481 = vld [vmem:[%s3 + $0x228] sm:$0xff]
          %v482 = vld [vmem:[%s3 + $0x230] sm:$0xff]
          %v483 = vld [vmem:[%s3 + $0x238] sm:$0xff]
          %v484 = vld [vmem:[%s3 + $0x240] sm:$0xff]
          %v485 = vld [vmem:[%s3 + $0x248] sm:$0xff]
          %v486 = vld [vmem:[%s3 + $0x250] sm:$0xff]
          %v487 = vld [vmem:[%s3 + $0x258] sm:$0xff]
          %v488 = vld [vmem:[%s3 + $0x260] sm:$0xff]
          %v489 = vld [vmem:[%s3 + $0x268] sm:$0xff]
          %v490 = vld [vmem:[%s3 + $0x270] sm:$0xff]
          %v491 = vld [vmem:[%s3 + $0x278] sm:$0xff]
          %v492 = vld [vmem:[%s3 + $0x280] sm:$0xff]
          %v493 = vld [vmem:[%s3 + $0x288] sm:$0xff]
          %v494 = vld [vmem:[%s3 + $0x290] sm:$0xff]
          %v495 = vld [vmem:[%s3 + $0x298] sm:$0xff]
          %v496 = vld [vmem:[%s3 + $0x2a0] sm:$0xff]
          %v497 = vld [vmem:[%s3 + $0x2a8] sm:$0xff]
          %v498 = vld [vmem:[%s3 + $0x2b0] sm:$0xff]
          %v499 = vld [vmem:[%s3 + $0x2b8] sm:$0xff]
          %v500 = vld [vmem:[%s3 + $0x2c0] sm:$0xff]
          %v501 = vld [vmem:[%s3 + $0x2c8] sm:$0xff]
          %v502 = vld [vmem:[%s3 + $0x2d0] sm:$0xff]
          %v503 = vld [vmem:[%s3 + $0x2d8] sm:$0xff]
          %v504 = vld [vmem:[%s3 + $0x2e0] sm:$0xff]
          %v505 = vld [vmem:[%s3 + $0x2e8] sm:$0xff]
          %v506 = vld [vmem:[%s3 + $0x2f0] sm:$0xff]
          %v507 = vld [vmem:[%s3 + $0x2f8] sm:$0xff]
          %v508 = vld [vmem:[%s5] sm:$0xf]
          %v510 = vperm.slane %v508, 0
          %v511 = vperm.slane %v508, 1
          %v512 = vperm.slane %v508, 2
          %v513 = vperm.slane %v508, 3
          %v526 = vunpack.c.l.b16 %v404
          %v527 = vunpack.c.h.b16 %v404
          %v528 = vunpack.c.l.b16 %v405
          %v529 = vunpack.c.l.b16 %v406
          %v530 = vunpack.c.h.b16 %v406
          %v531 = vunpack.c.l.b16 %v407
          %v532 = vunpack.c.l.b16 %v408
          %v533 = vunpack.c.h.b16 %v408
          %v534 = vunpack.c.l.b16 %v409
          %v535 = vunpack.c.l.b16 %v410
          %v536 = vunpack.c.h.b16 %v410
          %v537 = vunpack.c.l.b16 %v411
          %v538 = vpack.c.b16 %v529, %v526
          %v539 = vpack.c.b16 %v530, %v527
          %v540 = vpack.c.b16 %v531, %v528
          %v541 = vpack.c.b16 %v535, %v532
          %v542 = vpack.c.b16 %v536, %v533
          %v543 = vpack.c.b16 %v537, %v534
          %v646 = vunpack.c.l.b16 %v412
          %v647 = vunpack.c.h.b16 %v412
          %v648 = vunpack.c.l.b16 %v413
          %v649 = vunpack.c.h.b16 %v413
          %v650 = vunpack.c.l.b16 %v414
          %v651 = vunpack.c.h.b16 %v414
          %v652 = vunpack.c.l.b16 %v415
          %v653 = vunpack.c.h.b16 %v415
          %v654 = vunpack.c.l.b16 %v416
          %v655 = vunpack.c.h.b16 %v416
          %v656 = vunpack.c.l.b16 %v417
          %v657 = vunpack.c.h.b16 %v417
          %v658 = vunpack.c.l.b16 %v418
          %v659 = vunpack.c.h.b16 %v418
          %v660 = vunpack.c.l.b16 %v419
          %v661 = vunpack.c.h.b16 %v419
          %v662 = vunpack.c.l.b16 %v420
          %v663 = vunpack.c.h.b16 %v420
          %v664 = vunpack.c.l.b16 %v421
          %v665 = vunpack.c.h.b16 %v421
          %v666 = vunpack.c.l.b16 %v422
          %v667 = vunpack.c.h.b16 %v422
          %v668 = vunpack.c.l.b16 %v423
          %v669 = vunpack.c.h.b16 %v423
          %v670 = vunpack.c.l.b16 %v424
          %v671 = vunpack.c.h.b16 %v424
          %v672 = vunpack.c.l.b16 %v425
          %v673 = vunpack.c.h.b16 %v425
          %v674 = vunpack.c.l.b16 %v426
          %v675 = vunpack.c.h.b16 %v426
          %v676 = vunpack.c.l.b16 %v427
          %v677 = vunpack.c.h.b16 %v427
          %v678 = vunpack.c.l.b16 %v428
          %v679 = vunpack.c.h.b16 %v428
          %v680 = vunpack.c.l.b16 %v429
          %v681 = vunpack.c.h.b16 %v429
          %v682 = vunpack.c.l.b16 %v430
          %v683 = vunpack.c.h.b16 %v430
          %v684 = vunpack.c.l.b16 %v431
          %v685 = vunpack.c.h.b16 %v431
          %v686 = vunpack.c.l.b16 %v432
          %v687 = vunpack.c.h.b16 %v432
          %v688 = vunpack.c.l.b16 %v433
          %v689 = vunpack.c.h.b16 %v433
          %v690 = vunpack.c.l.b16 %v434
          %v691 = vunpack.c.h.b16 %v434
          %v692 = vunpack.c.l.b16 %v435
          %v693 = vunpack.c.h.b16 %v435
          %v694 = vunpack.c.l.b16 %v436
          %v695 = vunpack.c.h.b16 %v436
          %v696 = vunpack.c.l.b16 %v437
          %v697 = vunpack.c.h.b16 %v437
          %v698 = vunpack.c.l.b16 %v438
          %v699 = vunpack.c.h.b16 %v438
          %v700 = vunpack.c.l.b16 %v439
          %v701 = vunpack.c.h.b16 %v439
          %v702 = vunpack.c.l.b16 %v440
          %v703 = vunpack.c.h.b16 %v440
          %v704 = vunpack.c.l.b16 %v441
          %v705 = vunpack.c.h.b16 %v441
          %v706 = vunpack.c.l.b16 %v442
          %v707 = vunpack.c.h.b16 %v442
          %v708 = vunpack.c.l.b16 %v443
          %v709 = vunpack.c.h.b16 %v443
          %v710 = vunpack.c.l.b16 %v444
          %v711 = vunpack.c.h.b16 %v444
          %v712 = vunpack.c.l.b16 %v445
          %v713 = vunpack.c.h.b16 %v445
          %v714 = vunpack.c.l.b16 %v446
          %v715 = vunpack.c.h.b16 %v446
          %v716 = vunpack.c.l.b16 %v447
          %v717 = vunpack.c.h.b16 %v447
          %v718 = vunpack.c.l.b16 %v448
          %v719 = vunpack.c.h.b16 %v448
          %v720 = vunpack.c.l.b16 %v449
          %v721 = vunpack.c.h.b16 %v449
          %v722 = vunpack.c.l.b16 %v450
          %v723 = vunpack.c.h.b16 %v450
          %v724 = vunpack.c.l.b16 %v451
          %v725 = vunpack.c.h.b16 %v451
          %v726 = vunpack.c.l.b16 %v452
          %v727 = vunpack.c.h.b16 %v452
          %v728 = vunpack.c.l.b16 %v453
          %v729 = vunpack.c.h.b16 %v453
          %v730 = vunpack.c.l.b16 %v454
          %v731 = vunpack.c.h.b16 %v454
          %v732 = vunpack.c.l.b16 %v455
          %v733 = vunpack.c.h.b16 %v455
          %v734 = vunpack.c.l.b16 %v456
          %v735 = vunpack.c.h.b16 %v456
          %v736 = vunpack.c.l.b16 %v457
          %v737 = vunpack.c.h.b16 %v457
          %v738 = vunpack.c.l.b16 %v458
          %v739 = vunpack.c.h.b16 %v458
          %v740 = vunpack.c.l.b16 %v459
          %v741 = vunpack.c.h.b16 %v459
          %v742 = vunpack.c.l.b16 %v460
          %v743 = vunpack.c.h.b16 %v460
          %v744 = vunpack.c.l.b16 %v461
          %v745 = vunpack.c.h.b16 %v461
          %v746 = vunpack.c.l.b16 %v462
          %v747 = vunpack.c.h.b16 %v462
          %v748 = vunpack.c.l.b16 %v463
          %v749 = vunpack.c.h.b16 %v463
          %v750 = vunpack.c.l.b16 %v464
          %v751 = vunpack.c.h.b16 %v464
          %v752 = vunpack.c.l.b16 %v465
          %v753 = vunpack.c.h.b16 %v465
          %v754 = vunpack.c.l.b16 %v466
          %v755 = vunpack.c.h.b16 %v466
          %v756 = vunpack.c.l.b16 %v467
          %v757 = vunpack.c.h.b16 %v467
          %v758 = vunpack.c.l.b16 %v468
          %v759 = vunpack.c.h.b16 %v468
          %v760 = vunpack.c.l.b16 %v469
          %v761 = vunpack.c.h.b16 %v469
          %v762 = vunpack.c.l.b16 %v470
          %v763 = vunpack.c.h.b16 %v470
          %v764 = vunpack.c.l.b16 %v471
          %v765 = vunpack.c.h.b16 %v471
          %v766 = vunpack.c.l.b16 %v472
          %v767 = vunpack.c.h.b16 %v472
          %v768 = vunpack.c.l.b16 %v473
          %v769 = vunpack.c.h.b16 %v473
          %v770 = vunpack.c.l.b16 %v474
          %v771 = vunpack.c.h.b16 %v474
          %v772 = vunpack.c.l.b16 %v475
          %v773 = vunpack.c.h.b16 %v475
          %v774 = vunpack.c.l.b16 %v476
          %v775 = vunpack.c.h.b16 %v476
          %v776 = vunpack.c.l.b16 %v477
          %v777 = vunpack.c.h.b16 %v477
          %v778 = vunpack.c.l.b16 %v478
          %v779 = vunpack.c.h.b16 %v478
          %v780 = vunpack.c.l.b16 %v479
          %v781 = vunpack.c.h.b16 %v479
          %v782 = vunpack.c.l.b16 %v480
          %v783 = vunpack.c.h.b16 %v480
          %v784 = vunpack.c.l.b16 %v481
          %v785 = vunpack.c.h.b16 %v481
          %v786 = vunpack.c.l.b16 %v482
          %v787 = vunpack.c.h.b16 %v482
          %v788 = vunpack.c.l.b16 %v483
          %v789 = vunpack.c.h.b16 %v483
          %v790 = vunpack.c.l.b16 %v484
          %v791 = vunpack.c.h.b16 %v484
          %v792 = vunpack.c.l.b16 %v485
          %v793 = vunpack.c.h.b16 %v485
          %v794 = vunpack.c.l.b16 %v486
          %v795 = vunpack.c.h.b16 %v486
          %v796 = vunpack.c.l.b16 %v487
          %v797 = vunpack.c.h.b16 %v487
          %v798 = vunpack.c.l.b16 %v488
          %v799 = vunpack.c.h.b16 %v488
          %v800 = vunpack.c.l.b16 %v489
          %v801 = vunpack.c.h.b16 %v489
          %v802 = vunpack.c.l.b16 %v490
          %v803 = vunpack.c.h.b16 %v490
          %v804 = vunpack.c.l.b16 %v491
          %v805 = vunpack.c.h.b16 %v491
          %v806 = vunpack.c.l.b16 %v492
          %v807 = vunpack.c.h.b16 %v492
          %v808 = vunpack.c.l.b16 %v493
          %v809 = vunpack.c.h.b16 %v493
          %v810 = vunpack.c.l.b16 %v494
          %v811 = vunpack.c.h.b16 %v494
          %v812 = vunpack.c.l.b16 %v495
          %v813 = vunpack.c.h.b16 %v495
          %v814 = vunpack.c.l.b16 %v496
          %v815 = vunpack.c.h.b16 %v496
          %v816 = vunpack.c.l.b16 %v497
          %v817 = vunpack.c.h.b16 %v497
          %v818 = vunpack.c.l.b16 %v498
          %v819 = vunpack.c.h.b16 %v498
          %v820 = vunpack.c.l.b16 %v499
          %v821 = vunpack.c.h.b16 %v499
          %v822 = vunpack.c.l.b16 %v500
          %v823 = vunpack.c.h.b16 %v500
          %v824 = vunpack.c.l.b16 %v501
          %v825 = vunpack.c.h.b16 %v501
          %v826 = vunpack.c.l.b16 %v502
          %v827 = vunpack.c.h.b16 %v502
          %v828 = vunpack.c.l.b16 %v503
          %v829 = vunpack.c.h.b16 %v503
          %v830 = vunpack.c.l.b16 %v504
          %v831 = vunpack.c.h.b16 %v504
          %v832 = vunpack.c.l.b16 %v505
          %v833 = vunpack.c.h.b16 %v505
          %v834 = vunpack.c.l.b16 %v506
          %v835 = vunpack.c.h.b16 %v506
          %v836 = vunpack.c.l.b16 %v507
          %v837 = vunpack.c.h.b16 %v507
          %v838 = vpack.c.b16 %v650, %v646
          %v839 = vpack.c.b16 %v651, %v647
          %v840 = vpack.c.b16 %v652, %v648
          %v841 = vpack.c.b16 %v653, %v649
          %v842 = vpack.c.b16 %v658, %v654
          %v843 = vpack.c.b16 %v659, %v655
          %v844 = vpack.c.b16 %v660, %v656
          %v845 = vpack.c.b16 %v661, %v657
          %v846 = vpack.c.b16 %v666, %v662
          %v847 = vpack.c.b16 %v667, %v663
          %v848 = vpack.c.b16 %v668, %v664
          %v849 = vpack.c.b16 %v669, %v665
          %v850 = vpack.c.b16 %v674, %v670
          %v851 = vpack.c.b16 %v675, %v671
          %v852 = vpack.c.b16 %v676, %v672
          %v853 = vpack.c.b16 %v677, %v673
          %v854 = vpack.c.b16 %v682, %v678
          %v855 = vpack.c.b16 %v683, %v679
          %v856 = vpack.c.b16 %v684, %v680
          %v857 = vpack.c.b16 %v685, %v681
          %v858 = vpack.c.b16 %v690, %v686
          %v859 = vpack.c.b16 %v691, %v687
          %v860 = vpack.c.b16 %v692, %v688
          %v861 = vpack.c.b16 %v693, %v689
          %v862 = vpack.c.b16 %v698, %v694
          %v863 = vpack.c.b16 %v699, %v695
          %v864 = vpack.c.b16 %v700, %v696
          %v865 = vpack.c.b16 %v701, %v697
          %v866 = vpack.c.b16 %v706, %v702
          %v867 = vpack.c.b16 %v707, %v703
          %v868 = vpack.c.b16 %v708, %v704
          %v869 = vpack.c.b16 %v709, %v705
          %v870 = vpack.c.b16 %v714, %v710
          %v871 = vpack.c.b16 %v715, %v711
          %v872 = vpack.c.b16 %v716, %v712
          %v873 = vpack.c.b16 %v717, %v713
          %v874 = vpack.c.b16 %v722, %v718
          %v875 = vpack.c.b16 %v723, %v719
          %v876 = vpack.c.b16 %v724, %v720
          %v877 = vpack.c.b16 %v725, %v721
          %v878 = vpack.c.b16 %v730, %v726
          %v879 = vpack.c.b16 %v731, %v727
          %v880 = vpack.c.b16 %v732, %v728
          %v881 = vpack.c.b16 %v733, %v729
          %v882 = vpack.c.b16 %v738, %v734
          %v883 = vpack.c.b16 %v739, %v735
          %v884 = vpack.c.b16 %v740, %v736
          %v885 = vpack.c.b16 %v741, %v737
          %v886 = vpack.c.b16 %v746, %v742
          %v887 = vpack.c.b16 %v747, %v743
          %v888 = vpack.c.b16 %v748, %v744
          %v889 = vpack.c.b16 %v749, %v745
          %v890 = vpack.c.b16 %v754, %v750
          %v891 = vpack.c.b16 %v755, %v751
          %v892 = vpack.c.b16 %v756, %v752
          %v893 = vpack.c.b16 %v757, %v753
          %v894 = vpack.c.b16 %v762, %v758
          %v895 = vpack.c.b16 %v763, %v759
          %v896 = vpack.c.b16 %v764, %v760
          %v897 = vpack.c.b16 %v765, %v761
          %v898 = vpack.c.b16 %v770, %v766
          %v899 = vpack.c.b16 %v771, %v767
          %v900 = vpack.c.b16 %v772, %v768
          %v901 = vpack.c.b16 %v773, %v769
          %v902 = vpack.c.b16 %v778, %v774
          %v903 = vpack.c.b16 %v779, %v775
          %v904 = vpack.c.b16 %v780, %v776
          %v905 = vpack.c.b16 %v781, %v777
          %v906 = vpack.c.b16 %v786, %v782
          %v907 = vpack.c.b16 %v787, %v783
          %v908 = vpack.c.b16 %v788, %v784
          %v909 = vpack.c.b16 %v789, %v785
          %v910 = vpack.c.b16 %v794, %v790
          %v911 = vpack.c.b16 %v795, %v791
          %v912 = vpack.c.b16 %v796, %v792
          %v913 = vpack.c.b16 %v797, %v793
          %v914 = vpack.c.b16 %v802, %v798
          %v915 = vpack.c.b16 %v803, %v799
          %v916 = vpack.c.b16 %v804, %v800
          %v917 = vpack.c.b16 %v805, %v801
          %v918 = vpack.c.b16 %v810, %v806
          %v919 = vpack.c.b16 %v811, %v807
          %v920 = vpack.c.b16 %v812, %v808
          %v921 = vpack.c.b16 %v813, %v809
          %v922 = vpack.c.b16 %v818, %v814
          %v923 = vpack.c.b16 %v819, %v815
          %v924 = vpack.c.b16 %v820, %v816
          %v925 = vpack.c.b16 %v821, %v817
          %v926 = vpack.c.b16 %v826, %v822
          %v927 = vpack.c.b16 %v827, %v823
          %v928 = vpack.c.b16 %v828, %v824
          %v929 = vpack.c.b16 %v829, %v825
          %v930 = vpack.c.b16 %v834, %v830
          %v931 = vpack.c.b16 %v835, %v831
          %v932 = vpack.c.b16 %v836, %v832
          %v933 = vpack.c.b16 %v837, %v833
          %1030 = vmatpush.bf16.msra.mxu0 %v866
          %1031 = vmatpush.bf16.msra.mxu0 %v862
          %1032 = vmatpush.bf16.msra.mxu0 %v858
          %1033 = vmatpush.bf16.msra.mxu0 %v854
          %1034 = vmatpush.bf16.msra.mxu0 %v850
          %1035 = vmatpush.bf16.msra.mxu0 %v846
          %1036 = vmatpush.bf16.msra.mxu0 %v842
          %1037 = vmatpush.bf16.msra.mxu0 %v838
          %1038 = vmatmul.bf16.gmra.mxu0 %v538
          %v1039 = vpop.f32.mrf.mxu0
          %v1040 = vadd.f32 %v510, %v1039
          %v1041 = vpop.f32.mrf.mxu0
          %v1042 = vadd.f32 %v510, %v1041
          %1043 = vmatmul.bf16.gmra.mxu0 %v541
          %v1044 = vpop.f32.mrf.mxu0
          %v1045 = vadd.f32 %v510, %v1044
          %v1046 = vpop.f32.mrf.mxu0
          %v1047 = vadd.f32 %v510, %v1046
          %1048 = vdwg.mxu0
          %1049 = vmatpush.bf16.msra.mxu0 %v898
          %1050 = vmatpush.bf16.msra.mxu0 %v894
          %1051 = vmatpush.bf16.msra.mxu0 %v890
          %1052 = vmatpush.bf16.msra.mxu0 %v886
          %1053 = vmatpush.bf16.msra.mxu0 %v882
          %1054 = vmatpush.bf16.msra.mxu0 %v878
          %1055 = vmatpush.bf16.msra.mxu0 %v874
          %1056 = vmatpush.bf16.msra.mxu0 %v870
          %1057 = vmatmul.bf16.gmra.mxu0 %v539
          %v1058 = vpop.f32.mrf.mxu0
          %v1059 = vadd.f32 %v1040, %v1058
          %v1060 = vpop.f32.mrf.mxu0
          %v1061 = vadd.f32 %v1042, %v1060
          %1062 = vmatmul.bf16.gmra.mxu0 %v542
          %v1063 = vpop.f32.mrf.mxu0
          %v1064 = vadd.f32 %v1045, %v1063
          %v1065 = vpop.f32.mrf.mxu0
          %v1066 = vadd.f32 %v1047, %v1065
          %1067 = vdwg.mxu0
          %1068 = vmatpush.bf16.msra.mxu0 %v930
          %1069 = vmatpush.bf16.msra.mxu0 %v926
          %1070 = vmatpush.bf16.msra.mxu0 %v922
          %1071 = vmatpush.bf16.msra.mxu0 %v918
          %1072 = vmatpush.bf16.msra.mxu0 %v914
          %1073 = vmatpush.bf16.msra.mxu0 %v910
          %1074 = vmatpush.bf16.msra.mxu0 %v906
          %1075 = vmatpush.bf16.msra.mxu0 %v902
          %1076 = vmatmul.bf16.gmra.mxu0 %v540
          %v1077 = vpop.f32.mrf.mxu0
          %v1078 = vadd.f32 %v1059, %v1077
          %v1079 = vpop.f32.mrf.mxu0
          %v1080 = vadd.f32 %v1061, %v1079
          %1081 = vmatmul.bf16.gmra.mxu0 %v543
          %v1082 = vpop.f32.mrf.mxu0
          %v1083 = vadd.f32 %v1064, %v1082
          %v1084 = vpop.f32.mrf.mxu0
          %v1085 = vadd.f32 %v1066, %v1084
          %1086 = vdwg.mxu0
          %1087 = vmatpush.bf16.msra.mxu0 %v867
          %1088 = vmatpush.bf16.msra.mxu0 %v863
          %1089 = vmatpush.bf16.msra.mxu0 %v859
          %1090 = vmatpush.bf16.msra.mxu0 %v855
          %1091 = vmatpush.bf16.msra.mxu0 %v851
          %1092 = vmatpush.bf16.msra.mxu0 %v847
          %1093 = vmatpush.bf16.msra.mxu0 %v843
          %1094 = vmatpush.bf16.msra.mxu0 %v839
          %1095 = vmatmul.bf16.gmra.mxu0 %v538
          %v1096 = vpop.f32.mrf.mxu0
          %v1097 = vadd.f32 %v511, %v1096
          %v1098 = vpop.f32.mrf.mxu0
          %v1099 = vadd.f32 %v511, %v1098
          %1100 = vmatmul.bf16.gmra.mxu0 %v541
          %v1101 = vpop.f32.mrf.mxu0
          %v1102 = vadd.f32 %v511, %v1101
          %v1103 = vpop.f32.mrf.mxu0
          %v1104 = vadd.f32 %v511, %v1103
          %1105 = vdwg.mxu0
          %1106 = vmatpush.bf16.msra.mxu0 %v899
          %1107 = vmatpush.bf16.msra.mxu0 %v895
          %1108 = vmatpush.bf16.msra.mxu0 %v891
          %1109 = vmatpush.bf16.msra.mxu0 %v887
          %1110 = vmatpush.bf16.msra.mxu0 %v883
          %1111 = vmatpush.bf16.msra.mxu0 %v879
          %1112 = vmatpush.bf16.msra.mxu0 %v875
          %1113 = vmatpush.bf16.msra.mxu0 %v871
          %1114 = vmatmul.bf16.gmra.mxu0 %v539
          %v1115 = vpop.f32.mrf.mxu0
          %v1116 = vadd.f32 %v1097, %v1115
          %v1117 = vpop.f32.mrf.mxu0
          %v1118 = vadd.f32 %v1099, %v1117
          %1119 = vmatmul.bf16.gmra.mxu0 %v542
          %v1120 = vpop.f32.mrf.mxu0
          %v1121 = vadd.f32 %v1102, %v1120
          %v1122 = vpop.f32.mrf.mxu0
          %v1123 = vadd.f32 %v1104, %v1122
          %1124 = vdwg.mxu0
          %1125 = vmatpush.bf16.msra.mxu0 %v931
          %1126 = vmatpush.bf16.msra.mxu0 %v927
          %1127 = vmatpush.bf16.msra.mxu0 %v923
          %1128 = vmatpush.bf16.msra.mxu0 %v919
          %1129 = vmatpush.bf16.msra.mxu0 %v915
          %1130 = vmatpush.bf16.msra.mxu0 %v911
          %1131 = vmatpush.bf16.msra.mxu0 %v907
          %1132 = vmatpush.bf16.msra.mxu0 %v903
          %1133 = vmatmul.bf16.gmra.mxu0 %v540
          %v1134 = vpop.f32.mrf.mxu0
          %v1135 = vadd.f32 %v1116, %v1134
          %v1136 = vpop.f32.mrf.mxu0
          %v1137 = vadd.f32 %v1118, %v1136
          %1138 = vmatmul.bf16.gmra.mxu0 %v543
          %v1139 = vpop.f32.mrf.mxu0
          %v1140 = vadd.f32 %v1121, %v1139
          %v1141 = vpop.f32.mrf.mxu0
          %v1142 = vadd.f32 %v1123, %v1141
          %1143 = vdwg.mxu0
          %1144 = vmatpush.bf16.msra.mxu0 %v868
          %1145 = vmatpush.bf16.msra.mxu0 %v864
          %1146 = vmatpush.bf16.msra.mxu0 %v860
          %1147 = vmatpush.bf16.msra.mxu0 %v856
          %1148 = vmatpush.bf16.msra.mxu0 %v852
          %1149 = vmatpush.bf16.msra.mxu0 %v848
          %1150 = vmatpush.bf16.msra.mxu0 %v844
          %1151 = vmatpush.bf16.msra.mxu0 %v840
          %1152 = vmatmul.bf16.gmra.mxu0 %v538
          %v1153 = vpop.f32.mrf.mxu0
          %v1154 = vadd.f32 %v512, %v1153
          %v1155 = vpop.f32.mrf.mxu0
          %v1156 = vadd.f32 %v512, %v1155
          %1157 = vmatmul.bf16.gmra.mxu0 %v541
          %v1158 = vpop.f32.mrf.mxu0
          %v1159 = vadd.f32 %v512, %v1158
          %v1160 = vpop.f32.mrf.mxu0
          %v1161 = vadd.f32 %v512, %v1160
          %1162 = vdwg.mxu0
          %1163 = vmatpush.bf16.msra.mxu0 %v900
          %1164 = vmatpush.bf16.msra.mxu0 %v896
          %1165 = vmatpush.bf16.msra.mxu0 %v892
          %1166 = vmatpush.bf16.msra.mxu0 %v888
          %1167 = vmatpush.bf16.msra.mxu0 %v884
          %1168 = vmatpush.bf16.msra.mxu0 %v880
          %1169 = vmatpush.bf16.msra.mxu0 %v876
          %1170 = vmatpush.bf16.msra.mxu0 %v872
          %1171 = vmatmul.bf16.gmra.mxu0 %v539
          %v1172 = vpop.f32.mrf.mxu0
          %v1173 = vadd.f32 %v1154, %v1172
          %v1174 = vpop.f32.mrf.mxu0
          %v1175 = vadd.f32 %v1156, %v1174
          %1176 = vmatmul.bf16.gmra.mxu0 %v542
          %v1177 = vpop.f32.mrf.mxu0
          %v1178 = vadd.f32 %v1159, %v1177
          %v1179 = vpop.f32.mrf.mxu0
          %v1180 = vadd.f32 %v1161, %v1179
          %1181 = vdwg.mxu0
          %1182 = vmatpush.bf16.msra.mxu0 %v932
          %1183 = vmatpush.bf16.msra.mxu0 %v928
          %1184 = vmatpush.bf16.msra.mxu0 %v924
          %1185 = vmatpush.bf16.msra.mxu0 %v920
          %1186 = vmatpush.bf16.msra.mxu0 %v916
          %1187 = vmatpush.bf16.msra.mxu0 %v912
          %1188 = vmatpush.bf16.msra.mxu0 %v908
          %1189 = vmatpush.bf16.msra.mxu0 %v904
          %1190 = vmatmul.bf16.gmra.mxu0 %v540
          %v1191 = vpop.f32.mrf.mxu0
          %v1192 = vadd.f32 %v1173, %v1191
          %v1193 = vpop.f32.mrf.mxu0
          %v1194 = vadd.f32 %v1175, %v1193
          %1195 = vmatmul.bf16.gmra.mxu0 %v543
          %v1196 = vpop.f32.mrf.mxu0
          %v1197 = vadd.f32 %v1178, %v1196
          %v1198 = vpop.f32.mrf.mxu0
          %v1199 = vadd.f32 %v1180, %v1198
          %1200 = vdwg.mxu0
          %1201 = vmatpush.bf16.msra.mxu0 %v869
          %1202 = vmatpush.bf16.msra.mxu0 %v865
          %1203 = vmatpush.bf16.msra.mxu0 %v861
          %1204 = vmatpush.bf16.msra.mxu0 %v857
          %1205 = vmatpush.bf16.msra.mxu0 %v853
          %1206 = vmatpush.bf16.msra.mxu0 %v849
          %1207 = vmatpush.bf16.msra.mxu0 %v845
          %1208 = vmatpush.bf16.msra.mxu0 %v841
          %1209 = vmatmul.bf16.gmra.mxu0 %v538
          %v1210 = vpop.f32.mrf.mxu0
          %v1211 = vadd.f32 %v513, %v1210
          %v1212 = vpop.f32.mrf.mxu0
          %v1213 = vadd.f32 %v513, %v1212
          %1214 = vmatmul.bf16.gmra.mxu0 %v541
          %v1215 = vpop.f32.mrf.mxu0
          %v1216 = vadd.f32 %v513, %v1215
          %v1217 = vpop.f32.mrf.mxu0
          %v1218 = vadd.f32 %v513, %v1217
          %1219 = vdwg.mxu0
          %1220 = vmatpush.bf16.msra.mxu0 %v901
          %1221 = vmatpush.bf16.msra.mxu0 %v897
          %1222 = vmatpush.bf16.msra.mxu0 %v893
          %1223 = vmatpush.bf16.msra.mxu0 %v889
          %1224 = vmatpush.bf16.msra.mxu0 %v885
          %1225 = vmatpush.bf16.msra.mxu0 %v881
          %1226 = vmatpush.bf16.msra.mxu0 %v877
          %1227 = vmatpush.bf16.msra.mxu0 %v873
          %1228 = vmatmul.bf16.gmra.mxu0 %v539
          %v1229 = vpop.f32.mrf.mxu0
          %v1230 = vadd.f32 %v1211, %v1229
          %v1231 = vpop.f32.mrf.mxu0
          %v1232 = vadd.f32 %v1213, %v1231
          %1233 = vmatmul.bf16.gmra.mxu0 %v542
          %v1234 = vpop.f32.mrf.mxu0
          %v1235 = vadd.f32 %v1216, %v1234
          %v1236 = vpop.f32.mrf.mxu0
          %v1237 = vadd.f32 %v1218, %v1236
          %1238 = vdwg.mxu0
          %1239 = vmatpush.bf16.msra.mxu0 %v933
          %1240 = vmatpush.bf16.msra.mxu0 %v929
          %1241 = vmatpush.bf16.msra.mxu0 %v925
          %1242 = vmatpush.bf16.msra.mxu0 %v921
          %1243 = vmatpush.bf16.msra.mxu0 %v917
          %1244 = vmatpush.bf16.msra.mxu0 %v913
          %1245 = vmatpush.bf16.msra.mxu0 %v909
          %1246 = vmatpush.bf16.msra.mxu0 %v905
          %1247 = vmatmul.bf16.gmra.mxu0 %v540
          %v1248 = vpop.f32.mrf.mxu0
          %v1249 = vadd.f32 %v1230, %v1248
          %v1250 = vpop.f32.mrf.mxu0
          %v1251 = vadd.f32 %v1232, %v1250
          %1252 = vmatmul.bf16.gmra.mxu0 %v543
          %v1253 = vpop.f32.mrf.mxu0
          %v1254 = vadd.f32 %v1235, %v1253
          %v1255 = vpop.f32.mrf.mxu0
          %v1256 = vadd.f32 %v1237, %v1255
          %1257 = vdwg.mxu0
          %1258 = vst [vmem:[#allocation2] sm:$0xff] %v1078
          %1259 = vst [vmem:[#allocation2 + $0x8] sm:$0xff] %v1135
          %1260 = vst [vmem:[#allocation2 + $0x10] sm:$0xff] %v1192
          %1261 = vst [vmem:[#allocation2 + $0x18] sm:$0xff] %v1249
          %1262 = vst [vmem:[#allocation2 + $0x20] sm:$0xff] %v1080
          %1263 = vst [vmem:[#allocation2 + $0x28] sm:$0xff] %v1137
          %1264 = vst [vmem:[#allocation2 + $0x30] sm:$0xff] %v1194
          %1265 = vst [vmem:[#allocation2 + $0x38] sm:$0xff] %v1251
          %1266 = vst [vmem:[#allocation2 + $0x40] sm:$0xff] %v1083
          %1267 = vst [vmem:[#allocation2 + $0x48] sm:$0xff] %v1140
          %1268 = vst [vmem:[#allocation2 + $0x50] sm:$0xff] %v1197
          %1269 = vst [vmem:[#allocation2 + $0x58] sm:$0xff] %v1254
          %1270 = vst [vmem:[#allocation2 + $0x60] sm:$0xff] %v1085
          %1271 = vst [vmem:[#allocation2 + $0x68] sm:$0xff] %v1142
          %1272 = vst [vmem:[#allocation2 + $0x70] sm:$0xff] %v1199
          %1273 = vst [vmem:[#allocation2 + $0x78] sm:$0xff] %v1256
          %1274 = vst [vmem:[#allocation3] sm:$0xff] 0.0
          %1275 = vst [vmem:[#allocation3 + $0x8] sm:$0xff] 0.0
          %1276 = vst [vmem:[#allocation3 + $0x10] sm:$0xff] 0.0
          %1277 = vst [vmem:[#allocation3 + $0x18] sm:$0xff] 0.0
          %1278 = vst [vmem:[#allocation3 + $0x20] sm:$0xff] 0.0
          %1279 = vst [vmem:[#allocation3 + $0x28] sm:$0xff] 0.0
          %1280 = vst [vmem:[#allocation3 + $0x30] sm:$0xff] 0.0
          %1281 = vst [vmem:[#allocation3 + $0x38] sm:$0xff] 0.0
        $region60: #{distnn_forward.16} parent=51 // pred_fallthru
          _
        %v1282 = vld [vmem:[#allocation2] sm:$0xff]
        %v1283 = vld [vmem:[#allocation2 + $0x8] sm:$0xff]
        %v1284 = vld [vmem:[#allocation2 + $0x10] sm:$0xff]
        %v1285 = vld [vmem:[#allocation2 + $0x18] sm:$0xff]
        %v1286 = vld [vmem:[#allocation2 + $0x20] sm:$0xff]
        %v1287 = vld [vmem:[#allocation2 + $0x28] sm:$0xff]
        %v1288 = vld [vmem:[#allocation2 + $0x30] sm:$0xff]
        %v1289 = vld [vmem:[#allocation2 + $0x38] sm:$0xff]
        %v1290 = vld [vmem:[#allocation2 + $0x40] sm:$0xff]
        %v1291 = vld [vmem:[#allocation2 + $0x48] sm:$0xff]
        %v1292 = vld [vmem:[#allocation2 + $0x50] sm:$0xff]
        %v1293 = vld [vmem:[#allocation2 + $0x58] sm:$0xff]
        %v1294 = vld [vmem:[#allocation2 + $0x60] sm:$0xff]
        %v1295 = vld [vmem:[#allocation2 + $0x68] sm:$0xff]
        %v1296 = vld [vmem:[#allocation2 + $0x70] sm:$0xff]
        %v1297 = vld [vmem:[#allocation2 + $0x78] sm:$0xff]
        %v1298 = vld [vmem:[%s383] sm:$0xff]
        %v1299 = vld [vmem:[%s383 + $0x8] sm:$0xf]
        %v1300 = vld [vmem:[%s383 + $0xc] sm:$0xff]
        %v1301 = vld [vmem:[%s383 + $0x14] sm:$0xf]
        %v1302 = vld [vmem:[%s383 + $0x18] sm:$0xff]
        %v1303 = vld [vmem:[%s383 + $0x20] sm:$0xf]
        %v1304 = vld [vmem:[%s383 + $0x24] sm:$0xff]
        %v1305 = vld [vmem:[%s383 + $0x2c] sm:$0xf]
        %v1306 = vld [vmem:[#allocation4] sm:$0xff]
        %v1307 = vld [vmem:[#allocation4 + $0x8] sm:$0xff]
        %v1308 = vld [vmem:[#allocation4 + $0x10] sm:$0xff]
        %v1309 = vld [vmem:[#allocation4 + $0x18] sm:$0xff]
        %v1310 = vld [vmem:[#allocation4 + $0x20] sm:$0xff]
        %v1311 = vld [vmem:[#allocation4 + $0x28] sm:$0xff]
        %v1312 = vld [vmem:[#allocation4 + $0x30] sm:$0xff]
        %v1313 = vld [vmem:[#allocation4 + $0x38] sm:$0xff]
        %v1314 = vld [vmem:[#allocation4 + $0x40] sm:$0xff]
        %v1315 = vld [vmem:[#allocation4 + $0x48] sm:$0xff]
        %v1316 = vld [vmem:[#allocation4 + $0x50] sm:$0xff]
        %v1317 = vld [vmem:[#allocation4 + $0x58] sm:$0xff]
        %v1318 = vld [vmem:[#allocation4 + $0x60] sm:$0xff]
        %v1319 = vld [vmem:[#allocation4 + $0x68] sm:$0xff]
        %v1320 = vld [vmem:[#allocation4 + $0x70] sm:$0xff]
        %v1321 = vld [vmem:[#allocation4 + $0x78] sm:$0xff]
        %v1322 = vld [vmem:[#allocation4 + $0x80] sm:$0xff]
        %v1323 = vld [vmem:[#allocation4 + $0x88] sm:$0xff]
        %v1324 = vld [vmem:[#allocation4 + $0x90] sm:$0xff]
        %v1325 = vld [vmem:[#allocation4 + $0x98] sm:$0xff]
        %v1326 = vld [vmem:[#allocation4 + $0xa0] sm:$0xff]
        %v1327 = vld [vmem:[#allocation4 + $0xa8] sm:$0xff]
        %v1328 = vld [vmem:[#allocation4 + $0xb0] sm:$0xff]
        %v1329 = vld [vmem:[#allocation4 + $0xb8] sm:$0xff]
        %v1330 = vld [vmem:[#allocation4 + $0xc0] sm:$0xff]
        %v1331 = vld [vmem:[#allocation4 + $0xc8] sm:$0xff]
        %v1332 = vld [vmem:[#allocation4 + $0xd0] sm:$0xff]
        %v1333 = vld [vmem:[#allocation4 + $0xd8] sm:$0xff]
        %v1334 = vld [vmem:[#allocation4 + $0xe0] sm:$0xff]
        %v1335 = vld [vmem:[#allocation4 + $0xe8] sm:$0xff]
        %v1336 = vld [vmem:[#allocation4 + $0xf0] sm:$0xff]
        %v1337 = vld [vmem:[#allocation4 + $0xf8] sm:$0xff]
        %v1338 = vld [vmem:[#allocation4 + $0x100] sm:$0xff]
        %v1339 = vld [vmem:[#allocation4 + $0x108] sm:$0xff]
        %v1340 = vld [vmem:[#allocation4 + $0x110] sm:$0xff]
        %v1341 = vld [vmem:[#allocation4 + $0x118] sm:$0xff]
        %v1342 = vld [vmem:[#allocation4 + $0x120] sm:$0xff]
        %v1343 = vld [vmem:[#allocation4 + $0x128] sm:$0xff]
        %v1344 = vld [vmem:[#allocation4 + $0x130] sm:$0xff]
        %v1345 = vld [vmem:[#allocation4 + $0x138] sm:$0xff]
        %v1346 = vld [vmem:[#allocation4 + $0x140] sm:$0xff]
        %v1347 = vld [vmem:[#allocation4 + $0x148] sm:$0xff]
        %v1348 = vld [vmem:[#allocation4 + $0x150] sm:$0xff]
        %v1349 = vld [vmem:[#allocation4 + $0x158] sm:$0xff]
        %v1350 = vld [vmem:[#allocation4 + $0x160] sm:$0xff]
        %v1351 = vld [vmem:[#allocation4 + $0x168] sm:$0xff]
        %v1352 = vld [vmem:[#allocation4 + $0x170] sm:$0xff]
        %v1353 = vld [vmem:[#allocation4 + $0x178] sm:$0xff]
        %v1354 = vld [vmem:[#allocation4 + $0x180] sm:$0xff]
        %v1355 = vld [vmem:[#allocation4 + $0x188] sm:$0xff]
        %v1356 = vld [vmem:[#allocation4 + $0x190] sm:$0xff]
        %v1357 = vld [vmem:[#allocation4 + $0x198] sm:$0xff]
        %v1358 = vld [vmem:[#allocation4 + $0x1a0] sm:$0xff]
        %v1359 = vld [vmem:[#allocation4 + $0x1a8] sm:$0xff]
        %v1360 = vld [vmem:[#allocation4 + $0x1b0] sm:$0xff]
        %v1361 = vld [vmem:[#allocation4 + $0x1b8] sm:$0xff]
        %v1362 = vld [vmem:[#allocation4 + $0x1c0] sm:$0xff]
        %v1363 = vld [vmem:[#allocation4 + $0x1c8] sm:$0xff]
        %v1364 = vld [vmem:[#allocation4 + $0x1d0] sm:$0xff]
        %v1365 = vld [vmem:[#allocation4 + $0x1d8] sm:$0xff]
        %v1366 = vld [vmem:[#allocation4 + $0x1e0] sm:$0xff]
        %v1367 = vld [vmem:[#allocation4 + $0x1e8] sm:$0xff]
        %v1368 = vld [vmem:[#allocation4 + $0x1f0] sm:$0xff]
        %v1369 = vld [vmem:[#allocation4 + $0x1f8] sm:$0xff]
        %v1370 = vld [vmem:[#allocation4 + $0x200] sm:$0xff]
        %v1371 = vld [vmem:[#allocation4 + $0x208] sm:$0xff]
        %v1372 = vld [vmem:[#allocation4 + $0x210] sm:$0xff]
        %v1373 = vld [vmem:[#allocation4 + $0x218] sm:$0xff]
        %v1374 = vld [vmem:[#allocation4 + $0x220] sm:$0xff]
        %v1375 = vld [vmem:[#allocation4 + $0x228] sm:$0xff]
        %v1376 = vld [vmem:[#allocation4 + $0x230] sm:$0xff]
        %v1377 = vld [vmem:[#allocation4 + $0x238] sm:$0xff]
        %v1378 = vld [vmem:[#allocation4 + $0x240] sm:$0xff]
        %v1379 = vld [vmem:[#allocation4 + $0x248] sm:$0xff]
        %v1380 = vld [vmem:[#allocation4 + $0x250] sm:$0xff]
        %v1381 = vld [vmem:[#allocation4 + $0x258] sm:$0xff]
        %v1382 = vld [vmem:[#allocation4 + $0x260] sm:$0xff]
        %v1383 = vld [vmem:[#allocation4 + $0x268] sm:$0xff]
        %v1384 = vld [vmem:[#allocation4 + $0x270] sm:$0xff]
        %v1385 = vld [vmem:[#allocation4 + $0x278] sm:$0xff]
        %v1386 = vld [vmem:[#allocation4 + $0x280] sm:$0xff]
        %v1387 = vld [vmem:[#allocation4 + $0x288] sm:$0xff]
        %v1388 = vld [vmem:[#allocation4 + $0x290] sm:$0xff]
        %v1389 = vld [vmem:[#allocation4 + $0x298] sm:$0xff]
        %v1390 = vld [vmem:[#allocation4 + $0x2a0] sm:$0xff]
        %v1391 = vld [vmem:[#allocation4 + $0x2a8] sm:$0xff]
        %v1392 = vld [vmem:[#allocation4 + $0x2b0] sm:$0xff]
        %v1393 = vld [vmem:[#allocation4 + $0x2b8] sm:$0xff]
        %v1394 = vld [vmem:[#allocation4 + $0x2c0] sm:$0xff]
        %v1395 = vld [vmem:[#allocation4 + $0x2c8] sm:$0xff]
        %v1396 = vld [vmem:[#allocation4 + $0x2d0] sm:$0xff]
        %v1397 = vld [vmem:[#allocation4 + $0x2d8] sm:$0xff]
        %v1398 = vld [vmem:[#allocation4 + $0x2e0] sm:$0xff]
        %v1399 = vld [vmem:[#allocation4 + $0x2e8] sm:$0xff]
        %v1400 = vld [vmem:[#allocation4 + $0x2f0] sm:$0xff]
        %v1401 = vld [vmem:[#allocation4 + $0x2f8] sm:$0xff]
        %v1410 = vunpack.c.l.b16 %v1298
        %v1411 = vunpack.c.h.b16 %v1298
        %v1412 = vunpack.c.l.b16 %v1299
        %v1413 = vunpack.c.l.b16 %v1300
        %v1414 = vunpack.c.h.b16 %v1300
        %v1415 = vunpack.c.l.b16 %v1301
        %v1416 = vunpack.c.l.b16 %v1302
        %v1417 = vunpack.c.h.b16 %v1302
        %v1418 = vunpack.c.l.b16 %v1303
        %v1419 = vunpack.c.l.b16 %v1304
        %v1420 = vunpack.c.h.b16 %v1304
        %v1421 = vunpack.c.l.b16 %v1305
        %v1422 = vpack.c.b16 %v1413, %v1410
        %v1423 = vpack.c.b16 %v1414, %v1411
        %v1424 = vpack.c.b16 %v1415, %v1412
        %v1425 = vpack.c.b16 %v1419, %v1416
        %v1426 = vpack.c.b16 %v1420, %v1417
        %v1427 = vpack.c.b16 %v1421, %v1418
        %v1530 = vunpack.c.l.b16 %v1306
        %v1531 = vunpack.c.h.b16 %v1306
        %v1532 = vunpack.c.l.b16 %v1307
        %v1533 = vunpack.c.h.b16 %v1307
        %v1534 = vunpack.c.l.b16 %v1308
        %v1535 = vunpack.c.h.b16 %v1308
        %v1536 = vunpack.c.l.b16 %v1309
        %v1537 = vunpack.c.h.b16 %v1309
        %v1538 = vunpack.c.l.b16 %v1310
        %v1539 = vunpack.c.h.b16 %v1310
        %v1540 = vunpack.c.l.b16 %v1311
        %v1541 = vunpack.c.h.b16 %v1311
        %v1542 = vunpack.c.l.b16 %v1312
        %v1543 = vunpack.c.h.b16 %v1312
        %v1544 = vunpack.c.l.b16 %v1313
        %v1545 = vunpack.c.h.b16 %v1313
        %v1546 = vunpack.c.l.b16 %v1314
        %v1547 = vunpack.c.h.b16 %v1314
        %v1548 = vunpack.c.l.b16 %v1315
        %v1549 = vunpack.c.h.b16 %v1315
        %v1550 = vunpack.c.l.b16 %v1316
        %v1551 = vunpack.c.h.b16 %v1316
        %v1552 = vunpack.c.l.b16 %v1317
        %v1553 = vunpack.c.h.b16 %v1317
        %v1554 = vunpack.c.l.b16 %v1318
        %v1555 = vunpack.c.h.b16 %v1318
        %v1556 = vunpack.c.l.b16 %v1319
        %v1557 = vunpack.c.h.b16 %v1319
        %v1558 = vunpack.c.l.b16 %v1320
        %v1559 = vunpack.c.h.b16 %v1320
        %v1560 = vunpack.c.l.b16 %v1321
        %v1561 = vunpack.c.h.b16 %v1321
        %v1562 = vunpack.c.l.b16 %v1322
        %v1563 = vunpack.c.h.b16 %v1322
        %v1564 = vunpack.c.l.b16 %v1323
        %v1565 = vunpack.c.h.b16 %v1323
        %v1566 = vunpack.c.l.b16 %v1324
        %v1567 = vunpack.c.h.b16 %v1324
        %v1568 = vunpack.c.l.b16 %v1325
        %v1569 = vunpack.c.h.b16 %v1325
        %v1570 = vunpack.c.l.b16 %v1326
        %v1571 = vunpack.c.h.b16 %v1326
        %v1572 = vunpack.c.l.b16 %v1327
        %v1573 = vunpack.c.h.b16 %v1327
        %v1574 = vunpack.c.l.b16 %v1328
        %v1575 = vunpack.c.h.b16 %v1328
        %v1576 = vunpack.c.l.b16 %v1329
        %v1577 = vunpack.c.h.b16 %v1329
        %v1578 = vunpack.c.l.b16 %v1330
        %v1579 = vunpack.c.h.b16 %v1330
        %v1580 = vunpack.c.l.b16 %v1331
        %v1581 = vunpack.c.h.b16 %v1331
        %v1582 = vunpack.c.l.b16 %v1332
        %v1583 = vunpack.c.h.b16 %v1332
        %v1584 = vunpack.c.l.b16 %v1333
        %v1585 = vunpack.c.h.b16 %v1333
        %v1586 = vunpack.c.l.b16 %v1334
        %v1587 = vunpack.c.h.b16 %v1334
        %v1588 = vunpack.c.l.b16 %v1335
        %v1589 = vunpack.c.h.b16 %v1335
        %v1590 = vunpack.c.l.b16 %v1336
        %v1591 = vunpack.c.h.b16 %v1336
        %v1592 = vunpack.c.l.b16 %v1337
        %v1593 = vunpack.c.h.b16 %v1337
        %v1594 = vunpack.c.l.b16 %v1338
        %v1595 = vunpack.c.h.b16 %v1338
        %v1596 = vunpack.c.l.b16 %v1339
        %v1597 = vunpack.c.h.b16 %v1339
        %v1598 = vunpack.c.l.b16 %v1340
        %v1599 = vunpack.c.h.b16 %v1340
        %v1600 = vunpack.c.l.b16 %v1341
        %v1601 = vunpack.c.h.b16 %v1341
        %v1602 = vunpack.c.l.b16 %v1342
        %v1603 = vunpack.c.h.b16 %v1342
        %v1604 = vunpack.c.l.b16 %v1343
        %v1605 = vunpack.c.h.b16 %v1343
        %v1606 = vunpack.c.l.b16 %v1344
        %v1607 = vunpack.c.h.b16 %v1344
        %v1608 = vunpack.c.l.b16 %v1345
        %v1609 = vunpack.c.h.b16 %v1345
        %v1610 = vunpack.c.l.b16 %v1346
        %v1611 = vunpack.c.h.b16 %v1346
        %v1612 = vunpack.c.l.b16 %v1347
        %v1613 = vunpack.c.h.b16 %v1347
        %v1614 = vunpack.c.l.b16 %v1348
        %v1615 = vunpack.c.h.b16 %v1348
        %v1616 = vunpack.c.l.b16 %v1349
        %v1617 = vunpack.c.h.b16 %v1349
        %v1618 = vunpack.c.l.b16 %v1350
        %v1619 = vunpack.c.h.b16 %v1350
        %v1620 = vunpack.c.l.b16 %v1351
        %v1621 = vunpack.c.h.b16 %v1351
        %v1622 = vunpack.c.l.b16 %v1352
        %v1623 = vunpack.c.h.b16 %v1352
        %v1624 = vunpack.c.l.b16 %v1353
        %v1625 = vunpack.c.h.b16 %v1353
        %v1626 = vunpack.c.l.b16 %v1354
        %v1627 = vunpack.c.h.b16 %v1354
        %v1628 = vunpack.c.l.b16 %v1355
        %v1629 = vunpack.c.h.b16 %v1355
        %v1630 = vunpack.c.l.b16 %v1356
        %v1631 = vunpack.c.h.b16 %v1356
        %v1632 = vunpack.c.l.b16 %v1357
        %v1633 = vunpack.c.h.b16 %v1357
        %v1634 = vunpack.c.l.b16 %v1358
        %v1635 = vunpack.c.h.b16 %v1358
        %v1636 = vunpack.c.l.b16 %v1359
        %v1637 = vunpack.c.h.b16 %v1359
        %v1638 = vunpack.c.l.b16 %v1360
        %v1639 = vunpack.c.h.b16 %v1360
        %v1640 = vunpack.c.l.b16 %v1361
        %v1641 = vunpack.c.h.b16 %v1361
        %v1642 = vunpack.c.l.b16 %v1362
        %v1643 = vunpack.c.h.b16 %v1362
        %v1644 = vunpack.c.l.b16 %v1363
        %v1645 = vunpack.c.h.b16 %v1363
        %v1646 = vunpack.c.l.b16 %v1364
        %v1647 = vunpack.c.h.b16 %v1364
        %v1648 = vunpack.c.l.b16 %v1365
        %v1649 = vunpack.c.h.b16 %v1365
        %v1650 = vunpack.c.l.b16 %v1366
        %v1651 = vunpack.c.h.b16 %v1366
        %v1652 = vunpack.c.l.b16 %v1367
        %v1653 = vunpack.c.h.b16 %v1367
        %v1654 = vunpack.c.l.b16 %v1368
        %v1655 = vunpack.c.h.b16 %v1368
        %v1656 = vunpack.c.l.b16 %v1369
        %v1657 = vunpack.c.h.b16 %v1369
        %v1658 = vunpack.c.l.b16 %v1370
        %v1659 = vunpack.c.h.b16 %v1370
        %v1660 = vunpack.c.l.b16 %v1371
        %v1661 = vunpack.c.h.b16 %v1371
        %v1662 = vunpack.c.l.b16 %v1372
        %v1663 = vunpack.c.h.b16 %v1372
        %v1664 = vunpack.c.l.b16 %v1373
        %v1665 = vunpack.c.h.b16 %v1373
        %v1666 = vunpack.c.l.b16 %v1374
        %v1667 = vunpack.c.h.b16 %v1374
        %v1668 = vunpack.c.l.b16 %v1375
        %v1669 = vunpack.c.h.b16 %v1375
        %v1670 = vunpack.c.l.b16 %v1376
        %v1671 = vunpack.c.h.b16 %v1376
        %v1672 = vunpack.c.l.b16 %v1377
        %v1673 = vunpack.c.h.b16 %v1377
        %v1674 = vunpack.c.l.b16 %v1378
        %v1675 = vunpack.c.h.b16 %v1378
        %v1676 = vunpack.c.l.b16 %v1379
        %v1677 = vunpack.c.h.b16 %v1379
        %v1678 = vunpack.c.l.b16 %v1380
        %v1679 = vunpack.c.h.b16 %v1380
        %v1680 = vunpack.c.l.b16 %v1381
        %v1681 = vunpack.c.h.b16 %v1381
        %v1682 = vunpack.c.l.b16 %v1382
        %v1683 = vunpack.c.h.b16 %v1382
        %v1684 = vunpack.c.l.b16 %v1383
        %v1685 = vunpack.c.h.b16 %v1383
        %v1686 = vunpack.c.l.b16 %v1384
        %v1687 = vunpack.c.h.b16 %v1384
        %v1688 = vunpack.c.l.b16 %v1385
        %v1689 = vunpack.c.h.b16 %v1385
        %v1690 = vunpack.c.l.b16 %v1386
        %v1691 = vunpack.c.h.b16 %v1386
        %v1692 = vunpack.c.l.b16 %v1387
        %v1693 = vunpack.c.h.b16 %v1387
        %v1694 = vunpack.c.l.b16 %v1388
        %v1695 = vunpack.c.h.b16 %v1388
        %v1696 = vunpack.c.l.b16 %v1389
        %v1697 = vunpack.c.h.b16 %v1389
        %v1698 = vunpack.c.l.b16 %v1390
        %v1699 = vunpack.c.h.b16 %v1390
        %v1700 = vunpack.c.l.b16 %v1391
        %v1701 = vunpack.c.h.b16 %v1391
        %v1702 = vunpack.c.l.b16 %v1392
        %v1703 = vunpack.c.h.b16 %v1392
        %v1704 = vunpack.c.l.b16 %v1393
        %v1705 = vunpack.c.h.b16 %v1393
        %v1706 = vunpack.c.l.b16 %v1394
        %v1707 = vunpack.c.h.b16 %v1394
        %v1708 = vunpack.c.l.b16 %v1395
        %v1709 = vunpack.c.h.b16 %v1395
        %v1710 = vunpack.c.l.b16 %v1396
        %v1711 = vunpack.c.h.b16 %v1396
        %v1712 = vunpack.c.l.b16 %v1397
        %v1713 = vunpack.c.h.b16 %v1397
        %v1714 = vunpack.c.l.b16 %v1398
        %v1715 = vunpack.c.h.b16 %v1398
        %v1716 = vunpack.c.l.b16 %v1399
        %v1717 = vunpack.c.h.b16 %v1399
        %v1718 = vunpack.c.l.b16 %v1400
        %v1719 = vunpack.c.h.b16 %v1400
        %v1720 = vunpack.c.l.b16 %v1401
        %v1721 = vunpack.c.h.b16 %v1401
        %v1722 = vpack.c.b16 %v1534, %v1530
        %v1723 = vpack.c.b16 %v1535, %v1531
        %v1724 = vpack.c.b16 %v1536, %v1532
        %v1725 = vpack.c.b16 %v1537, %v1533
        %v1726 = vpack.c.b16 %v1542, %v1538
        %v1727 = vpack.c.b16 %v1543, %v1539
        %v1728 = vpack.c.b16 %v1544, %v1540
        %v1729 = vpack.c.b16 %v1545, %v1541
        %v1730 = vpack.c.b16 %v1550, %v1546
        %v1731 = vpack.c.b16 %v1551, %v1547
        %v1732 = vpack.c.b16 %v1552, %v1548
        %v1733 = vpack.c.b16 %v1553, %v1549
        %v1734 = vpack.c.b16 %v1558, %v1554
        %v1735 = vpack.c.b16 %v1559, %v1555
        %v1736 = vpack.c.b16 %v1560, %v1556
        %v1737 = vpack.c.b16 %v1561, %v1557
        %v1738 = vpack.c.b16 %v1566, %v1562
        %v1739 = vpack.c.b16 %v1567, %v1563
        %v1740 = vpack.c.b16 %v1568, %v1564
        %v1741 = vpack.c.b16 %v1569, %v1565
        %v1742 = vpack.c.b16 %v1574, %v1570
        %v1743 = vpack.c.b16 %v1575, %v1571
        %v1744 = vpack.c.b16 %v1576, %v1572
        %v1745 = vpack.c.b16 %v1577, %v1573
        %v1746 = vpack.c.b16 %v1582, %v1578
        %v1747 = vpack.c.b16 %v1583, %v1579
        %v1748 = vpack.c.b16 %v1584, %v1580
        %v1749 = vpack.c.b16 %v1585, %v1581
        %v1750 = vpack.c.b16 %v1590, %v1586
        %v1751 = vpack.c.b16 %v1591, %v1587
        %v1752 = vpack.c.b16 %v1592, %v1588
        %v1753 = vpack.c.b16 %v1593, %v1589
        %v1754 = vpack.c.b16 %v1598, %v1594
        %v1755 = vpack.c.b16 %v1599, %v1595
        %v1756 = vpack.c.b16 %v1600, %v1596
        %v1757 = vpack.c.b16 %v1601, %v1597
        %v1758 = vpack.c.b16 %v1606, %v1602
        %v1759 = vpack.c.b16 %v1607, %v1603
        %v1760 = vpack.c.b16 %v1608, %v1604
        %v1761 = vpack.c.b16 %v1609, %v1605
        %v1762 = vpack.c.b16 %v1614, %v1610
        %v1763 = vpack.c.b16 %v1615, %v1611
        %v1764 = vpack.c.b16 %v1616, %v1612
        %v1765 = vpack.c.b16 %v1617, %v1613
        %v1766 = vpack.c.b16 %v1622, %v1618
        %v1767 = vpack.c.b16 %v1623, %v1619
        %v1768 = vpack.c.b16 %v1624, %v1620
        %v1769 = vpack.c.b16 %v1625, %v1621
        %v1770 = vpack.c.b16 %v1630, %v1626
        %v1771 = vpack.c.b16 %v1631, %v1627
        %v1772 = vpack.c.b16 %v1632, %v1628
        %v1773 = vpack.c.b16 %v1633, %v1629
        %v1774 = vpack.c.b16 %v1638, %v1634
        %v1775 = vpack.c.b16 %v1639, %v1635
        %v1776 = vpack.c.b16 %v1640, %v1636
        %v1777 = vpack.c.b16 %v1641, %v1637
        %v1778 = vpack.c.b16 %v1646, %v1642
        %v1779 = vpack.c.b16 %v1647, %v1643
        %v1780 = vpack.c.b16 %v1648, %v1644
        %v1781 = vpack.c.b16 %v1649, %v1645
        %v1782 = vpack.c.b16 %v1654, %v1650
        %v1783 = vpack.c.b16 %v1655, %v1651
        %v1784 = vpack.c.b16 %v1656, %v1652
        %v1785 = vpack.c.b16 %v1657, %v1653
        %v1786 = vpack.c.b16 %v1662, %v1658
        %v1787 = vpack.c.b16 %v1663, %v1659
        %v1788 = vpack.c.b16 %v1664, %v1660
        %v1789 = vpack.c.b16 %v1665, %v1661
        %v1790 = vpack.c.b16 %v1670, %v1666
        %v1791 = vpack.c.b16 %v1671, %v1667
        %v1792 = vpack.c.b16 %v1672, %v1668
        %v1793 = vpack.c.b16 %v1673, %v1669
        %v1794 = vpack.c.b16 %v1678, %v1674
        %v1795 = vpack.c.b16 %v1679, %v1675
        %v1796 = vpack.c.b16 %v1680, %v1676
        %v1797 = vpack.c.b16 %v1681, %v1677
        %v1798 = vpack.c.b16 %v1686, %v1682
        %v1799 = vpack.c.b16 %v1687, %v1683
        %v1800 = vpack.c.b16 %v1688, %v1684
        %v1801 = vpack.c.b16 %v1689, %v1685
        %v1802 = vpack.c.b16 %v1694, %v1690
        %v1803 = vpack.c.b16 %v1695, %v1691
        %v1804 = vpack.c.b16 %v1696, %v1692
        %v1805 = vpack.c.b16 %v1697, %v1693
        %v1806 = vpack.c.b16 %v1702, %v1698
        %v1807 = vpack.c.b16 %v1703, %v1699
        %v1808 = vpack.c.b16 %v1704, %v1700
        %v1809 = vpack.c.b16 %v1705, %v1701
        %v1810 = vpack.c.b16 %v1710, %v1706
        %v1811 = vpack.c.b16 %v1711, %v1707
        %v1812 = vpack.c.b16 %v1712, %v1708
        %v1813 = vpack.c.b16 %v1713, %v1709
        %v1814 = vpack.c.b16 %v1718, %v1714
        %v1815 = vpack.c.b16 %v1719, %v1715
        %v1816 = vpack.c.b16 %v1720, %v1716
        %v1817 = vpack.c.b16 %v1721, %v1717
        %1914 = vmatpush.bf16.msra.mxu0 %v1750
        %1915 = vmatpush.bf16.msra.mxu0 %v1746
        %1916 = vmatpush.bf16.msra.mxu0 %v1742
        %1917 = vmatpush.bf16.msra.mxu0 %v1738
        %1918 = vmatpush.bf16.msra.mxu0 %v1734
        %1919 = vmatpush.bf16.msra.mxu0 %v1730
        %1920 = vmatpush.bf16.msra.mxu0 %v1726
        %1921 = vmatpush.bf16.msra.mxu0 %v1722
        %1922 = vmatmul.bf16.gmra.mxu0 %v1422
        %v1923 = vpop.f32.mrf.mxu0
        %v1924 = vadd.f32 0.0, %v1923
        %v1925 = vpop.f32.mrf.mxu0
        %v1926 = vadd.f32 0.0, %v1925
        %1927 = vmatmul.bf16.gmra.mxu0 %v1425
        %v1928 = vpop.f32.mrf.mxu0
        %v1929 = vadd.f32 0.0, %v1928
        %v1930 = vpop.f32.mrf.mxu0
        %v1931 = vadd.f32 0.0, %v1930
        %1932 = vdwg.mxu0
        %1933 = vmatpush.bf16.msra.mxu0 %v1782
        %1934 = vmatpush.bf16.msra.mxu0 %v1778
        %1935 = vmatpush.bf16.msra.mxu0 %v1774
        %1936 = vmatpush.bf16.msra.mxu0 %v1770
        %1937 = vmatpush.bf16.msra.mxu0 %v1766
        %1938 = vmatpush.bf16.msra.mxu0 %v1762
        %1939 = vmatpush.bf16.msra.mxu0 %v1758
        %1940 = vmatpush.bf16.msra.mxu0 %v1754
        %1941 = vmatmul.bf16.gmra.mxu0 %v1423
        %v1942 = vpop.f32.mrf.mxu0
        %v1943 = vadd.f32 %v1924, %v1942
        %v1944 = vpop.f32.mrf.mxu0
        %v1945 = vadd.f32 %v1926, %v1944
        %1946 = vmatmul.bf16.gmra.mxu0 %v1426
        %v1947 = vpop.f32.mrf.mxu0
        %v1948 = vadd.f32 %v1929, %v1947
        %v1949 = vpop.f32.mrf.mxu0
        %v1950 = vadd.f32 %v1931, %v1949
        %1951 = vdwg.mxu0
        %1952 = vmatpush.bf16.msra.mxu0 %v1814
        %1953 = vmatpush.bf16.msra.mxu0 %v1810
        %1954 = vmatpush.bf16.msra.mxu0 %v1806
        %1955 = vmatpush.bf16.msra.mxu0 %v1802
        %1956 = vmatpush.bf16.msra.mxu0 %v1798
        %1957 = vmatpush.bf16.msra.mxu0 %v1794
        %1958 = vmatpush.bf16.msra.mxu0 %v1790
        %1959 = vmatpush.bf16.msra.mxu0 %v1786
        %1960 = vmatmul.bf16.gmra.mxu0 %v1424
        %v1961 = vpop.f32.mrf.mxu0
        %v1962 = vadd.f32 %v1943, %v1961
        %v1963 = vpop.f32.mrf.mxu0
        %v1964 = vadd.f32 %v1945, %v1963
        %1965 = vmatmul.bf16.gmra.mxu0 %v1427
        %v1966 = vpop.f32.mrf.mxu0
        %v1967 = vadd.f32 %v1948, %v1966
        %v1968 = vpop.f32.mrf.mxu0
        %v1969 = vadd.f32 %v1950, %v1968
        %1970 = vdwg.mxu0
        %1971 = vmatpush.bf16.msra.mxu0 %v1751
        %1972 = vmatpush.bf16.msra.mxu0 %v1747
        %1973 = vmatpush.bf16.msra.mxu0 %v1743
        %1974 = vmatpush.bf16.msra.mxu0 %v1739
        %1975 = vmatpush.bf16.msra.mxu0 %v1735
        %1976 = vmatpush.bf16.msra.mxu0 %v1731
        %1977 = vmatpush.bf16.msra.mxu0 %v1727
        %1978 = vmatpush.bf16.msra.mxu0 %v1723
        %1979 = vmatmul.bf16.gmra.mxu0 %v1422
        %v1980 = vpop.f32.mrf.mxu0
        %v1981 = vadd.f32 0.0, %v1980
        %v1982 = vpop.f32.mrf.mxu0
        %v1983 = vadd.f32 0.0, %v1982
        %1984 = vmatmul.bf16.gmra.mxu0 %v1425
        %v1985 = vpop.f32.mrf.mxu0
        %v1986 = vadd.f32 0.0, %v1985
        %v1987 = vpop.f32.mrf.mxu0
        %v1988 = vadd.f32 0.0, %v1987
        %1989 = vdwg.mxu0
        %1990 = vmatpush.bf16.msra.mxu0 %v1783
        %1991 = vmatpush.bf16.msra.mxu0 %v1779
        %1992 = vmatpush.bf16.msra.mxu0 %v1775
        %1993 = vmatpush.bf16.msra.mxu0 %v1771
        %1994 = vmatpush.bf16.msra.mxu0 %v1767
        %1995 = vmatpush.bf16.msra.mxu0 %v1763
        %1996 = vmatpush.bf16.msra.mxu0 %v1759
        %1997 = vmatpush.bf16.msra.mxu0 %v1755
        %1998 = vmatmul.bf16.gmra.mxu0 %v1423
        %v1999 = vpop.f32.mrf.mxu0
        %v2000 = vadd.f32 %v1981, %v1999
        %v2001 = vpop.f32.mrf.mxu0
        %v2002 = vadd.f32 %v1983, %v2001
        %2003 = vmatmul.bf16.gmra.mxu0 %v1426
        %v2004 = vpop.f32.mrf.mxu0
        %v2005 = vadd.f32 %v1986, %v2004
        %v2006 = vpop.f32.mrf.mxu0
        %v2007 = vadd.f32 %v1988, %v2006
        %2008 = vdwg.mxu0
        %2009 = vmatpush.bf16.msra.mxu0 %v1815
        %2010 = vmatpush.bf16.msra.mxu0 %v1811
        %2011 = vmatpush.bf16.msra.mxu0 %v1807
        %2012 = vmatpush.bf16.msra.mxu0 %v1803
        %2013 = vmatpush.bf16.msra.mxu0 %v1799
        %2014 = vmatpush.bf16.msra.mxu0 %v1795
        %2015 = vmatpush.bf16.msra.mxu0 %v1791
        %2016 = vmatpush.bf16.msra.mxu0 %v1787
        %2017 = vmatmul.bf16.gmra.mxu0 %v1424
        %v2018 = vpop.f32.mrf.mxu0
        %v2019 = vadd.f32 %v2000, %v2018
        %v2020 = vpop.f32.mrf.mxu0
        %v2021 = vadd.f32 %v2002, %v2020
        %2022 = vmatmul.bf16.gmra.mxu0 %v1427
        %v2023 = vpop.f32.mrf.mxu0
        %v2024 = vadd.f32 %v2005, %v2023
        %v2025 = vpop.f32.mrf.mxu0
        %v2026 = vadd.f32 %v2007, %v2025
        %2027 = vdwg.mxu0
        %2028 = vmatpush.bf16.msra.mxu0 %v1752
        %2029 = vmatpush.bf16.msra.mxu0 %v1748
        %2030 = vmatpush.bf16.msra.mxu0 %v1744
        %2031 = vmatpush.bf16.msra.mxu0 %v1740
        %2032 = vmatpush.bf16.msra.mxu0 %v1736
        %2033 = vmatpush.bf16.msra.mxu0 %v1732
        %2034 = vmatpush.bf16.msra.mxu0 %v1728
        %2035 = vmatpush.bf16.msra.mxu0 %v1724
        %2036 = vmatmul.bf16.gmra.mxu0 %v1422
        %v2037 = vpop.f32.mrf.mxu0
        %v2038 = vadd.f32 0.0, %v2037
        %v2039 = vpop.f32.mrf.mxu0
        %v2040 = vadd.f32 0.0, %v2039
        %2041 = vmatmul.bf16.gmra.mxu0 %v1425
        %v2042 = vpop.f32.mrf.mxu0
        %v2043 = vadd.f32 0.0, %v2042
        %v2044 = vpop.f32.mrf.mxu0
        %v2045 = vadd.f32 0.0, %v2044
        %2046 = vdwg.mxu0
        %2047 = vmatpush.bf16.msra.mxu0 %v1784
        %2048 = vmatpush.bf16.msra.mxu0 %v1780
        %2049 = vmatpush.bf16.msra.mxu0 %v1776
        %2050 = vmatpush.bf16.msra.mxu0 %v1772
        %2051 = vmatpush.bf16.msra.mxu0 %v1768
        %2052 = vmatpush.bf16.msra.mxu0 %v1764
        %2053 = vmatpush.bf16.msra.mxu0 %v1760
        %2054 = vmatpush.bf16.msra.mxu0 %v1756
        %2055 = vmatmul.bf16.gmra.mxu0 %v1423
        %v2056 = vpop.f32.mrf.mxu0
        %v2057 = vadd.f32 %v2038, %v2056
        %v2058 = vpop.f32.mrf.mxu0
        %v2059 = vadd.f32 %v2040, %v2058
        %2060 = vmatmul.bf16.gmra.mxu0 %v1426
        %v2061 = vpop.f32.mrf.mxu0
        %v2062 = vadd.f32 %v2043, %v2061
        %v2063 = vpop.f32.mrf.mxu0
        %v2064 = vadd.f32 %v2045, %v2063
        %2065 = vdwg.mxu0
        %2066 = vmatpush.bf16.msra.mxu0 %v1816
        %2067 = vmatpush.bf16.msra.mxu0 %v1812
        %2068 = vmatpush.bf16.msra.mxu0 %v1808
        %2069 = vmatpush.bf16.msra.mxu0 %v1804
        %2070 = vmatpush.bf16.msra.mxu0 %v1800
        %2071 = vmatpush.bf16.msra.mxu0 %v1796
        %2072 = vmatpush.bf16.msra.mxu0 %v1792
        %2073 = vmatpush.bf16.msra.mxu0 %v1788
        %2074 = vmatmul.bf16.gmra.mxu0 %v1424
        %v2075 = vpop.f32.mrf.mxu0
        %v2076 = vadd.f32 %v2057, %v2075
        %v2077 = vpop.f32.mrf.mxu0
        %v2078 = vadd.f32 %v2059, %v2077
        %2079 = vmatmul.bf16.gmra.mxu0 %v1427
        %v2080 = vpop.f32.mrf.mxu0
        %v2081 = vadd.f32 %v2062, %v2080
        %v2082 = vpop.f32.mrf.mxu0
        %v2083 = vadd.f32 %v2064, %v2082
        %2084 = vdwg.mxu0
        %2085 = vmatpush.bf16.msra.mxu0 %v1753
        %2086 = vmatpush.bf16.msra.mxu0 %v1749
        %2087 = vmatpush.bf16.msra.mxu0 %v1745
        %2088 = vmatpush.bf16.msra.mxu0 %v1741
        %2089 = vmatpush.bf16.msra.mxu0 %v1737
        %2090 = vmatpush.bf16.msra.mxu0 %v1733
        %2091 = vmatpush.bf16.msra.mxu0 %v1729
        %2092 = vmatpush.bf16.msra.mxu0 %v1725
        %2093 = vmatmul.bf16.gmra.mxu0 %v1422
        %v2094 = vpop.f32.mrf.mxu0
        %v2095 = vadd.f32 0.0, %v2094
        %v2096 = vpop.f32.mrf.mxu0
        %v2097 = vadd.f32 0.0, %v2096
        %2098 = vmatmul.bf16.gmra.mxu0 %v1425
        %v2099 = vpop.f32.mrf.mxu0
        %v2100 = vadd.f32 0.0, %v2099
        %v2101 = vpop.f32.mrf.mxu0
        %v2102 = vadd.f32 0.0, %v2101
        %2103 = vdwg.mxu0
        %2104 = vmatpush.bf16.msra.mxu0 %v1785
        %2105 = vmatpush.bf16.msra.mxu0 %v1781
        %2106 = vmatpush.bf16.msra.mxu0 %v1777
        %2107 = vmatpush.bf16.msra.mxu0 %v1773
        %2108 = vmatpush.bf16.msra.mxu0 %v1769
        %2109 = vmatpush.bf16.msra.mxu0 %v1765
        %2110 = vmatpush.bf16.msra.mxu0 %v1761
        %2111 = vmatpush.bf16.msra.mxu0 %v1757
        %2112 = vmatmul.bf16.gmra.mxu0 %v1423
        %v2113 = vpop.f32.mrf.mxu0
        %v2114 = vadd.f32 %v2095, %v2113
        %v2115 = vpop.f32.mrf.mxu0
        %v2116 = vadd.f32 %v2097, %v2115
        %2117 = vmatmul.bf16.gmra.mxu0 %v1426
        %v2118 = vpop.f32.mrf.mxu0
        %v2119 = vadd.f32 %v2100, %v2118
        %v2120 = vpop.f32.mrf.mxu0
        %v2121 = vadd.f32 %v2102, %v2120
        %2122 = vdwg.mxu0
        %2123 = vmatpush.bf16.msra.mxu0 %v1817
        %2124 = vmatpush.bf16.msra.mxu0 %v1813
        %2125 = vmatpush.bf16.msra.mxu0 %v1809
        %2126 = vmatpush.bf16.msra.mxu0 %v1805
        %2127 = vmatpush.bf16.msra.mxu0 %v1801
        %2128 = vmatpush.bf16.msra.mxu0 %v1797
        %2129 = vmatpush.bf16.msra.mxu0 %v1793
        %2130 = vmatpush.bf16.msra.mxu0 %v1789
        %2131 = vmatmul.bf16.gmra.mxu0 %v1424
        %v2132 = vpop.f32.mrf.mxu0
        %v2133 = vadd.f32 %v2114, %v2132
        %v2134 = vpop.f32.mrf.mxu0
        %v2135 = vadd.f32 %v2116, %v2134
        %2136 = vmatmul.bf16.gmra.mxu0 %v1427
        %v2137 = vpop.f32.mrf.mxu0
        %v2138 = vadd.f32 %v2119, %v2137
        %v2139 = vpop.f32.mrf.mxu0
        %v2140 = vadd.f32 %v2121, %v2139
        %2141 = vdwg.mxu0
        %v2142 = vadd.f32 %v1282, %v1962
        %v2143 = vadd.f32 %v1283, %v2019
        %v2144 = vadd.f32 %v1284, %v2076
        %v2145 = vadd.f32 %v1285, %v2133
        %v2146 = vadd.f32 %v1286, %v1964
        %v2147 = vadd.f32 %v1287, %v2021
        %v2148 = vadd.f32 %v1288, %v2078
        %v2149 = vadd.f32 %v1289, %v2135
        %v2150 = vadd.f32 %v1290, %v1967
        %v2151 = vadd.f32 %v1291, %v2024
        %v2152 = vadd.f32 %v1292, %v2081
        %v2153 = vadd.f32 %v1293, %v2138
        %v2154 = vadd.f32 %v1294, %v1969
        %v2155 = vadd.f32 %v1295, %v2026
        %v2156 = vadd.f32 %v1296, %v2083
        %v2157 = vadd.f32 %v1297, %v2140
        %v2158 = vmax.f32 %v2142, 0.0
        %v2159 = vmax.f32 %v2143, 0.0
        %v2160 = vmax.f32 %v2144, 0.0
        %v2161 = vmax.f32 %v2145, 0.0
        %v2162 = vmax.f32 %v2146, 0.0
        %v2163 = vmax.f32 %v2147, 0.0
        %v2164 = vmax.f32 %v2148, 0.0
        %v2165 = vmax.f32 %v2149, 0.0
        %v2166 = vmax.f32 %v2150, 0.0
        %v2167 = vmax.f32 %v2151, 0.0
        %v2168 = vmax.f32 %v2152, 0.0
        %v2169 = vmax.f32 %v2153, 0.0
        %v2170 = vmax.f32 %v2154, 0.0
        %v2171 = vmax.f32 %v2155, 0.0
        %v2172 = vmax.f32 %v2156, 0.0
        %v2173 = vmax.f32 %v2157, 0.0
        %v2174 = vmax.f32 %v2158, %v2159
        %2175 = vmax.xlane.f32.xlu0 %v2174
        %v2176 = vpop.xlane.xlu0 %2175
        %v2177 = vmax.f32 %v2162, %v2163
        %2178 = vmax.xlane.f32.xlu0 %v2177
        %v2179 = vpop.xlane.xlu0 %2178
        %v2180 = vmax.f32 %v2166, %v2167
        %2181 = vmax.xlane.f32.xlu0 %v2180
        %v2182 = vpop.xlane.xlu0 %2181
        %v2183 = vmax.f32 %v2170, %v2171
        %2184 = vmax.xlane.f32.xlu0 %v2183
        %v2185 = vpop.xlane.xlu0 %2184
        %v2186 = vsub.f32 %v2158, %v2176
        %v2187 = vsub.f32 %v2159, %v2176
        %v2188 = vsub.f32 %v2162, %v2179
        %v2189 = vsub.f32 %v2163, %v2179
        %v2190 = vsub.f32 %v2166, %v2182
        %v2191 = vsub.f32 %v2167, %v2182
        %v2192 = vsub.f32 %v2170, %v2185
        %v2193 = vsub.f32 %v2171, %v2185
        %v2194 = vmul.f32 %v2186, 1.442695
        %v2195 = vpow.pop %v2194
        %v2196 = vmul.f32 %v2187, 1.442695
        %v2197 = vpow.pop %v2196
        %v2198 = vmul.f32 %v2188, 1.442695
        %v2199 = vpow.pop %v2198
        %v2200 = vmul.f32 %v2189, 1.442695
        %v2201 = vpow.pop %v2200
        %v2202 = vmul.f32 %v2190, 1.442695
        %v2203 = vpow.pop %v2202
        %v2204 = vmul.f32 %v2191, 1.442695
        %v2205 = vpow.pop %v2204
        %v2206 = vmul.f32 %v2192, 1.442695
        %v2207 = vpow.pop %v2206
        %v2208 = vmul.f32 %v2193, 1.442695
        %v2209 = vpow.pop %v2208
        %v2210 = vadd.f32 %v2195, %v2197
        %2211 = vadd.xlane.f32.xlu0 %v2210
        %v2212 = vpop.xlane.xlu0 %2211
        %v2213 = vadd.f32 %v2199, %v2201
        %2214 = vadd.xlane.f32.xlu0 %v2213
        %v2215 = vpop.xlane.xlu0 %2214
        %v2216 = vadd.f32 %v2203, %v2205
        %2217 = vadd.xlane.f32.xlu0 %v2216
        %v2218 = vpop.xlane.xlu0 %2217
        %v2219 = vadd.f32 %v2207, %v2209
        %2220 = vadd.xlane.f32.xlu0 %v2219
        %v2221 = vpop.xlane.xlu0 %2220
        %v2222 = vrcp.pop %v2212
        %v2223 = vrcp.pop %v2215
        %v2224 = vrcp.pop %v2218
        %v2225 = vrcp.pop %v2221
        %v2226 = vmul.f32 %v2195, %v2222
        %v2227 = vmul.f32 %v2197, %v2222
        %v2228 = vmul.f32 %v2199, %v2223
        %v2229 = vmul.f32 %v2201, %v2223
        %v2230 = vmul.f32 %v2203, %v2224
        %v2231 = vmul.f32 %v2205, %v2224
        %v2232 = vmul.f32 %v2207, %v2225
        %v2233 = vmul.f32 %v2209, %v2225
        %v2234 = vmax.f32 %v2160, 0.0
        %v2235 = vmax.f32 %v2161, 0.0
        %v2236 = vmax.f32 %v2164, 0.0
        %v2237 = vmax.f32 %v2165, 0.0
        %v2238 = vmax.f32 %v2168, 0.0
        %v2239 = vmax.f32 %v2169, 0.0
        %v2240 = vmax.f32 %v2172, 0.0
        %v2241 = vmax.f32 %v2173, 0.0
        %v2242 = vand.u32 2147483647, %v2160
        %v2243 = vand.u32 2147483647, %v2161
        %v2244 = vand.u32 2147483647, %v2164
        %v2245 = vand.u32 2147483647, %v2165
        %v2246 = vand.u32 2147483647, %v2168
        %v2247 = vand.u32 2147483647, %v2169
        %v2248 = vand.u32 2147483647, %v2172
        %v2249 = vand.u32 2147483647, %v2173
        %v2250 = vsub.f32 0.0, %v2242
        %v2251 = vsub.f32 0.0, %v2243
        %v2252 = vsub.f32 0.0, %v2244
        %v2253 = vsub.f32 0.0, %v2245
        %v2254 = vsub.f32 0.0, %v2246
        %v2255 = vsub.f32 0.0, %v2247
        %v2256 = vsub.f32 0.0, %v2248
        %v2257 = vsub.f32 0.0, %v2249
        %v2258 = vmul.f32 %v2250, 1.442695
        %v2259 = vpow.pop %v2258
        %v2260 = vmul.f32 %v2251, 1.442695
        %v2261 = vpow.pop %v2260
        %v2262 = vmul.f32 %v2252, 1.442695
        %v2263 = vpow.pop %v2262
        %v2264 = vmul.f32 %v2253, 1.442695
        %v2265 = vpow.pop %v2264
        %v2266 = vmul.f32 %v2254, 1.442695
        %v2267 = vpow.pop %v2266
        %v2268 = vmul.f32 %v2255, 1.442695
        %v2269 = vpow.pop %v2268
        %v2270 = vmul.f32 %v2256, 1.442695
        %v2271 = vpow.pop %v2270
        %v2272 = vmul.f32 %v2257, 1.442695
        %v2273 = vpow.pop %v2272
        %v2274 = vadd.f32 %v2259, 1.0
        %v2275 = vlog2.pop %v2274
        %v2276 = vmul.f32 %v2275, 0.6931472
        %v2277 = vmul.f32 -0.5, %v2259
        %v2278 = vadd.f32 %v2277, 1.0
        %v2279 = vmul.f32 %v2278, %v2259
        %v2280 = vand.u32 2147483647, %v2259
        %vm2281 = vcmp.lt.f32.partialorder %v2280, 0.0004427343
        %v2282 = vsel %vm2281, %v2279, %v2276
        %v2283 = vadd.f32 %v2261, 1.0
        %v2284 = vlog2.pop %v2283
        %v2285 = vmul.f32 %v2284, 0.6931472
        %v2286 = vmul.f32 -0.5, %v2261
        %v2287 = vadd.f32 %v2286, 1.0
        %v2288 = vmul.f32 %v2287, %v2261
        %v2289 = vand.u32 2147483647, %v2261
        %vm2290 = vcmp.lt.f32.partialorder %v2289, 0.0004427343
        %v2291 = vsel %vm2290, %v2288, %v2285
        %v2292 = vadd.f32 %v2263, 1.0
        %v2293 = vlog2.pop %v2292
        %v2294 = vmul.f32 %v2293, 0.6931472
        %v2295 = vmul.f32 -0.5, %v2263
        %v2296 = vadd.f32 %v2295, 1.0
        %v2297 = vmul.f32 %v2296, %v2263
        %v2298 = vand.u32 2147483647, %v2263
        %vm2299 = vcmp.lt.f32.partialorder %v2298, 0.0004427343
        %v2300 = vsel %vm2299, %v2297, %v2294
        %v2301 = vadd.f32 %v2265, 1.0
        %v2302 = vlog2.pop %v2301
        %v2303 = vmul.f32 %v2302, 0.6931472
        %v2304 = vmul.f32 -0.5, %v2265
        %v2305 = vadd.f32 %v2304, 1.0
        %v2306 = vmul.f32 %v2305, %v2265
        %v2307 = vand.u32 2147483647, %v2265
        %vm2308 = vcmp.lt.f32.partialorder %v2307, 0.0004427343
        %v2309 = vsel %vm2308, %v2306, %v2303
        %v2310 = vadd.f32 %v2267, 1.0
        %v2311 = vlog2.pop %v2310
        %v2312 = vmul.f32 %v2311, 0.6931472
        %v2313 = vmul.f32 -0.5, %v2267
        %v2314 = vadd.f32 %v2313, 1.0
        %v2315 = vmul.f32 %v2314, %v2267
        %v2316 = vand.u32 2147483647, %v2267
        %vm2317 = vcmp.lt.f32.partialorder %v2316, 0.0004427343
        %v2318 = vsel %vm2317, %v2315, %v2312
        %v2319 = vadd.f32 %v2269, 1.0
        %v2320 = vlog2.pop %v2319
        %v2321 = vmul.f32 %v2320, 0.6931472
        %v2322 = vmul.f32 -0.5, %v2269
        %v2323 = vadd.f32 %v2322, 1.0
        %v2324 = vmul.f32 %v2323, %v2269
        %v2325 = vand.u32 2147483647, %v2269
        %vm2326 = vcmp.lt.f32.partialorder %v2325, 0.0004427343
        %v2327 = vsel %vm2326, %v2324, %v2321
        %v2328 = vadd.f32 %v2271, 1.0
        %v2329 = vlog2.pop %v2328
        %v2330 = vmul.f32 %v2329, 0.6931472
        %v2331 = vmul.f32 -0.5, %v2271
        %v2332 = vadd.f32 %v2331, 1.0
        %v2333 = vmul.f32 %v2332, %v2271
        %v2334 = vand.u32 2147483647, %v2271
        %vm2335 = vcmp.lt.f32.partialorder %v2334, 0.0004427343
        %v2336 = vsel %vm2335, %v2333, %v2330
        %v2337 = vadd.f32 %v2273, 1.0
        %v2338 = vlog2.pop %v2337
        %v2339 = vmul.f32 %v2338, 0.6931472
        %v2340 = vmul.f32 -0.5, %v2273
        %v2341 = vadd.f32 %v2340, 1.0
        %v2342 = vmul.f32 %v2341, %v2273
        %v2343 = vand.u32 2147483647, %v2273
        %vm2344 = vcmp.lt.f32.partialorder %v2343, 0.0004427343
        %v2345 = vsel %vm2344, %v2342, %v2339
        %v2346 = vadd.f32 %v2234, %v2282
        %v2347 = vadd.f32 %v2235, %v2291
        %v2348 = vadd.f32 %v2236, %v2300
        %v2349 = vadd.f32 %v2237, %v2309
        %v2350 = vadd.f32 %v2238, %v2318
        %v2351 = vadd.f32 %v2239, %v2327
        %v2352 = vadd.f32 %v2240, %v2336
        %v2353 = vadd.f32 %v2241, %v2345
        %v2354 = vld [vmem:[#allocation3] sm:$0xff]
        %v2355 = vld [vmem:[#allocation3 + $0x8] sm:$0xff]
        %v2356 = vld [vmem:[#allocation3 + $0x10] sm:$0xff]
        %v2357 = vld [vmem:[#allocation3 + $0x18] sm:$0xff]
        %v2358 = vld [vmem:[#allocation3 + $0x20] sm:$0xff]
        %v2359 = vld [vmem:[#allocation3 + $0x28] sm:$0xff]
        %v2360 = vld [vmem:[#allocation3 + $0x30] sm:$0xff]
        %v2361 = vld [vmem:[#allocation3 + $0x38] sm:$0xff]
        %v2362 = vmul.f32 %v2226, %v2346
        %v2363 = vmul.f32 %v2227, %v2347
        %v2364 = vmul.f32 %v2228, %v2348
        %v2365 = vmul.f32 %v2229, %v2349
        %v2366 = vmul.f32 %v2230, %v2350
        %v2367 = vmul.f32 %v2231, %v2351
        %v2368 = vmul.f32 %v2232, %v2352
        %v2369 = vmul.f32 %v2233, %v2353
        %v2370 = vadd.f32 %v2354, %v2362
        %v2371 = vadd.f32 %v2355, %v2363
        %v2372 = vadd.f32 %v2356, %v2364
        %v2373 = vadd.f32 %v2357, %v2365
        %v2374 = vadd.f32 %v2358, %v2366
        %v2375 = vadd.f32 %v2359, %v2367
        %v2376 = vadd.f32 %v2360, %v2368
        %v2377 = vadd.f32 %v2361, %v2369
        %2378 = vst [vmem:[#allocation3] sm:$0xff] %v2370
        %2379 = vst [vmem:[#allocation3 + $0x8] sm:$0xff] %v2371
        %2380 = vst [vmem:[#allocation3 + $0x10] sm:$0xff] %v2372
        %2381 = vst [vmem:[#allocation3 + $0x18] sm:$0xff] %v2373
        %2382 = vst [vmem:[#allocation3 + $0x20] sm:$0xff] %v2374
        %2383 = vst [vmem:[#allocation3 + $0x28] sm:$0xff] %v2375
        %2384 = vst [vmem:[#allocation3 + $0x30] sm:$0xff] %v2376
        %2385 = vst [vmem:[#allocation3 + $0x38] sm:$0xff] %v2377
        %p2386 = scmp.eq.s32.totalorder %s25, 3
        // Predicated region
        $region61: #{distnn_forward.16} parent=51 // pred_check
          %p2387 = pneg %p2386
        $region62: #{distnn_forward.16} parent=51 // pred_check_branch
          %2389 = sbr.rel (%p2387) target = $region64
        $region63: #{distnn_forward.16} parent=51 // pred_region
          %v2390 = vld [vmem:[#allocation3] sm:$0xff]
          %v2391 = vld [vmem:[#allocation3 + $0x8] sm:$0xff]
          %v2392 = vld [vmem:[#allocation3 + $0x10] sm:$0xff]
          %v2393 = vld [vmem:[#allocation3 + $0x18] sm:$0xff]
          %v2394 = vld [vmem:[#allocation3 + $0x20] sm:$0xff]
          %v2395 = vld [vmem:[#allocation3 + $0x28] sm:$0xff]
          %v2396 = vld [vmem:[#allocation3 + $0x30] sm:$0xff]
          %v2397 = vld [vmem:[#allocation3 + $0x38] sm:$0xff]
          %v2398 = vld [vmem:[%s6] sm:$0x3]
          %v2400 = vperm.slane %v2398, 0
          %v2401 = vperm.slane %v2398, 1
          %v2404 = vmul.f32 %v2390, %v2400
          %v2405 = vmul.f32 %v2391, %v2401
          %v2406 = vmul.f32 %v2392, %v2400
          %v2407 = vmul.f32 %v2393, %v2401
          %v2408 = vmul.f32 %v2394, %v2400
          %v2409 = vmul.f32 %v2395, %v2401
          %v2410 = vmul.f32 %v2396, %v2400
          %v2411 = vmul.f32 %v2397, %v2401
          %v2412 = vld [vmem:[%s7] sm:$0x3]
          %v2414 = vperm.slane %v2412, 0
          %v2415 = vperm.slane %v2412, 1
          %v2418 = vadd.f32 %v2404, %v2414
          %v2419 = vadd.f32 %v2405, %v2415
          %v2420 = vadd.f32 %v2406, %v2414
          %v2421 = vadd.f32 %v2407, %v2415
          %v2422 = vadd.f32 %v2408, %v2414
          %v2423 = vadd.f32 %v2409, %v2415
          %v2424 = vadd.f32 %v2410, %v2414
          %v2425 = vadd.f32 %v2411, %v2415
          %v2426 = vld [vmem:[%s391] sm:$0xff]
          %v2427 = vld [vmem:[%s391 + $0x8] sm:$0xff]
          %v2428 = vld [vmem:[%s391 + $0x10] sm:$0xff]
          %v2429 = vld [vmem:[%s391 + $0x18] sm:$0xff]
          %v2430 = vld [vmem:[%s391 + $0x20] sm:$0xff]
          %v2431 = vld [vmem:[%s391 + $0x28] sm:$0xff]
          %v2432 = vld [vmem:[%s391 + $0x30] sm:$0xff]
          %v2433 = vld [vmem:[%s391 + $0x38] sm:$0xff]
          %v2434 = vadd.f32 %v2418, %v2426
          %v2435 = vadd.f32 %v2419, %v2427
          %v2436 = vadd.f32 %v2420, %v2428
          %v2437 = vadd.f32 %v2421, %v2429
          %v2438 = vadd.f32 %v2422, %v2430
          %v2439 = vadd.f32 %v2423, %v2431
          %v2440 = vadd.f32 %v2424, %v2432
          %v2441 = vadd.f32 %v2425, %v2433
          %v2442 = vmax.f32 %v2434, 0.0
          %v2443 = vmax.f32 %v2435, 0.0
          %v2444 = vmax.f32 %v2436, 0.0
          %v2445 = vmax.f32 %v2437, 0.0
          %v2446 = vmax.f32 %v2438, 0.0
          %v2447 = vmax.f32 %v2439, 0.0
          %v2448 = vmax.f32 %v2440, 0.0
          %v2449 = vmax.f32 %v2441, 0.0
          %2450 = vst [vmem:[%s398] sm:$0xff] %v2442
          %2451 = vst [vmem:[%s398 + $0x8] sm:$0xff] %v2443
          %2452 = vst [vmem:[%s398 + $0x10] sm:$0xff] %v2444
          %2453 = vst [vmem:[%s398 + $0x18] sm:$0xff] %v2445
          %2454 = vst [vmem:[%s398 + $0x20] sm:$0xff] %v2446
          %2455 = vst [vmem:[%s398 + $0x28] sm:$0xff] %v2447
          %2456 = vst [vmem:[%s398 + $0x30] sm:$0xff] %v2448
          %2457 = vst [vmem:[%s398 + $0x38] sm:$0xff] %v2449
        $region64: #{distnn_forward.16} parent=51 // pred_fallthru
          _
        %s2458 = smul.u32 4, %s24
        %p2459 = scmp.lt.s32.totalorder %s2458, 3
        %s2460 = scalar_select %p2459, %s2458, 3
        %s2461 = smul.addr %s2460, 2
        %s2462 = smul.addr %s2461, 8
        %s2463 = scalar_lea.vmem %s8, %s2462
        // Predicated region
        $region65: #{distnn_forward.16} parent=51 // pred_check
          %p2464 = pneg %p235
        $region66: #{distnn_forward.16} parent=51 // pred_check_branch
          %2466 = sbr.rel (%p2464) target = $region68
        $region67: #{distnn_forward.16} parent=51 // pred_region
          %s2467 = smul.u32 4, %s24
        $region68: #{distnn_forward.16} parent=51 // pred_fallthru
          _
        // Predicated region
        $region69: #{distnn_forward.16} parent=51 // pred_check
          %p2468 = pneg %p235
        $region70: #{distnn_forward.16} parent=51 // pred_check_branch
          %2470 = sbr.rel (%p2468) target = $region72
        $region71: #{distnn_forward.16} parent=51 // pred_region
          %s2471 = smul.u32 4, %s24
          %p2472 = scmp.lt.s32.totalorder %s2471, 3
          %s2473 = scalar_select %p2472, %s2471, 3
          %s2474 = smul.addr %s2473, 2
          %s2475 = smul.addr %s2474, 8
          %s2476 = scalar_lea.vmem %s8, %s2475
        $region72: #{distnn_forward.16} parent=51 // pred_fallthru
          _
      $region52: #{distnn_forward.16} parent=5 // pred_fallthru
        _
      %p2477 = scmp.le.s32.totalorder 2, %s15
      // Predicated region
      $region73: #{distnn_forward.16} parent=5 // pred_check
        %p2478 = pneg %p2477
      $region74: #{distnn_forward.16} parent=5 // pred_check_branch
        %2480 = sbr.rel (%p2478) target = $region76
      $region75: #{distnn_forward.16} parent=5 // pred_region
        %s2481 = ssub.s32 %s15, 2
      $region76: #{distnn_forward.16} parent=5 // pred_fallthru
        _
    $region6: #{distnn_forward.16} parent=1 // loop_footer
      %s19 = sadd.s32 1, %s15
    $region7: #{distnn_forward.16} parent=1 // loop_footer_branch
      %14 = sbr.rel target = $region3
    $region8: #{distnn_forward.16} parent=1 // loop_exit
      _
    %2482 = vsyncpa [#allocation5], 1
    %s2483 = scalar_lea.sflag [#allocation5], 1
    %2484 = vsyncpa %s2483, 1

// kernel: distnn_forward.22
$region0: #{distnn_forward.22}
  #allocation0 [shape = 'u32[]', space=smem, size = 0x4, offset = 0x4, fixed_abs, tag = 'smem constant byte address 0x4 - core index']
  #allocation1 [shape = 'u32[72,128]{1,0:T(1,128)}', space=vmem, size = 0x9000, scoped, tag = 'internal scratch']
  %s0 = inlined_call_operand.vmem [shape: f32[8,257], index: 0, kind: input, shape index: {}]
  %s1 = inlined_call_operand.vmem [shape: f32[257,16], index: 1, kind: input, shape index: {}]
  %s2 = inlined_call_operand.vmem [shape: f32[1,16], index: 2, kind: input, shape index: {}]
  %s3 = inlined_call_operand.vmem [shape: f32[8,16], index: 3, kind: output, shape index: {}]
  %s4 = sld [smem:[#allocation0]]
  $region22: #{distnn_forward.22} parent=0
    _
  %s6 = ssub.s32 1, %s4
  %s7 = scalar_select 0, %s6, %s4
  // Predicated region
  $region2: #{distnn_forward.22} parent=0 // pred_check
    _
  $region3: #{distnn_forward.22} parent=0 // pred_check_branch
    %9 = sbr.rel (0) target = $region5
  $region4: #{distnn_forward.22} parent=0 // pred_region
    _
  $region5: #{distnn_forward.22} parent=0 // pred_fallthru
    _
  // Predicated region
  $region6: #{distnn_forward.22} parent=0 // pred_check
    _
  $region7: #{distnn_forward.22} parent=0 // pred_check_branch
    %11 = sbr.rel (0) target = $region9
  $region8: #{distnn_forward.22} parent=0 // pred_region
    _
  $region9: #{distnn_forward.22} parent=0 // pred_fallthru
    _
  // Predicated region
  $region10: #{distnn_forward.22} parent=0 // pred_check
    _
  $region11: #{distnn_forward.22} parent=0 // pred_check_branch
    %13 = sbr.rel (0) target = $region13
  $region12: #{distnn_forward.22} parent=0 // pred_region
    _
  $region13: #{distnn_forward.22} parent=0 // pred_fallthru
    _
  %v14 = vld [vmem:[%s0] sm:$0xff]
  %v15 = vld [vmem:[%s0 + $0x8] sm:$0xff]
  %v16 = vld [vmem:[%s0 + $0x10] sm:$0xff]
  %v17 = vld [vmem:[%s1] sm:$0xff]
  %v18 = vld [vmem:[%s1 + $0x8] sm:$0xff]
  %v19 = vld [vmem:[%s1 + $0x10] sm:$0xff]
  %v20 = vld [vmem:[%s1 + $0x18] sm:$0xff]
  %v21 = vld [vmem:[%s1 + $0x20] sm:$0xff]
  %v22 = vld [vmem:[%s1 + $0x28] sm:$0xff]
  %v23 = vld [vmem:[%s1 + $0x30] sm:$0xff]
  %v24 = vld [vmem:[%s1 + $0x38] sm:$0xff]
  %v25 = vld [vmem:[%s1 + $0x40] sm:$0xff]
  %v26 = vld [vmem:[%s1 + $0x48] sm:$0xff]
  %v27 = vld [vmem:[%s1 + $0x50] sm:$0xff]
  %v28 = vld [vmem:[%s1 + $0x58] sm:$0xff]
  %v29 = vld [vmem:[%s1 + $0x60] sm:$0xff]
  %v30 = vld [vmem:[%s1 + $0x68] sm:$0xff]
  %v31 = vld [vmem:[%s1 + $0x70] sm:$0xff]
  %v32 = vld [vmem:[%s1 + $0x78] sm:$0xff]
  %v33 = vld [vmem:[%s1 + $0x80] sm:$0xff]
  %v34 = vld [vmem:[%s1 + $0x88] sm:$0xff]
  %v35 = vld [vmem:[%s1 + $0x90] sm:$0xff]
  %v36 = vld [vmem:[%s1 + $0x98] sm:$0xff]
  %v37 = vld [vmem:[%s1 + $0xa0] sm:$0xff]
  %v38 = vld [vmem:[%s1 + $0xa8] sm:$0xff]
  %v39 = vld [vmem:[%s1 + $0xb0] sm:$0xff]
  %v40 = vld [vmem:[%s1 + $0xb8] sm:$0xff]
  %v41 = vld [vmem:[%s1 + $0xc0] sm:$0xff]
  %v42 = vld [vmem:[%s1 + $0xc8] sm:$0xff]
  %v43 = vld [vmem:[%s1 + $0xd0] sm:$0xff]
  %v44 = vld [vmem:[%s1 + $0xd8] sm:$0xff]
  %v45 = vld [vmem:[%s1 + $0xe0] sm:$0xff]
  %v46 = vld [vmem:[%s1 + $0xe8] sm:$0xff]
  %v47 = vld [vmem:[%s1 + $0xf0] sm:$0xff]
  %v48 = vld [vmem:[%s1 + $0xf8] sm:$0xff]
  %v49 = vld [vmem:[%s1 + $0x100] sm:$0x1]
  %v50 = vld [vmem:[%s2] sm:$0x1]
  %v52 = vperm.slane %v50, 0
  %vm54 = vcmask 7168
  %v56 = vsel %vm54, %v16, 0
  %vm58 = vcmask 1040384
  %v60 = vsel %vm58, %v49, 0
  %62 = vmatpush.msra.mxu0 %v32
  %63 = vmatpush.msra.mxu0 %v31
  %64 = vmatpush.msra.mxu0 %v30
  %65 = vmatpush.msra.mxu0 %v29
  %66 = vmatpush.msra.mxu0 %v28
  %67 = vmatpush.msra.mxu0 %v27
  %68 = vmatpush.msra.mxu0 %v26
  %69 = vmatpush.msra.mxu0 %v25
  %70 = vmatpush.msra.mxu0 %v24
  %71 = vmatpush.msra.mxu0 %v23
  %72 = vmatpush.msra.mxu0 %v22
  %73 = vmatpush.msra.mxu0 %v21
  %74 = vmatpush.msra.mxu0 %v20
  %75 = vmatpush.msra.mxu0 %v19
  %76 = vmatpush.msra.mxu0 %v18
  %77 = vmatpush.msra.mxu0 %v17
  %78 = vmatmul.f32.gmra.mxu0 %v14
  %v79 = vpop.f32.mrf.mxu0
  %v80 = vadd.f32 %v52, %v79
  %81 = vdwg.mxu0
  %82 = vmatpush.msra.mxu0 %v48
  %83 = vmatpush.msra.mxu0 %v47
  %84 = vmatpush.msra.mxu0 %v46
  %85 = vmatpush.msra.mxu0 %v45
  %86 = vmatpush.msra.mxu0 %v44
  %87 = vmatpush.msra.mxu0 %v43
  %88 = vmatpush.msra.mxu0 %v42
  %89 = vmatpush.msra.mxu0 %v41
  %90 = vmatpush.msra.mxu0 %v40
  %91 = vmatpush.msra.mxu0 %v39
  %92 = vmatpush.msra.mxu0 %v38
  %93 = vmatpush.msra.mxu0 %v37
  %94 = vmatpush.msra.mxu0 %v36
  %95 = vmatpush.msra.mxu0 %v35
  %96 = vmatpush.msra.mxu0 %v34
  %97 = vmatpush.msra.mxu0 %v33
  %98 = vmatmul.f32.gmra.mxu0 %v15
  %v99 = vpop.f32.mrf.mxu0
  %v100 = vadd.f32 %v80, %v99
  %101 = vdwg.mxu0
  %102 = vmatpush.msra.mxu0 0.0
  %103 = vmatpush.msra.mxu0 0.0
  %104 = vmatpush.msra.mxu0 0.0
  %105 = vmatpush.msra.mxu0 0.0
  %106 = vmatpush.msra.mxu0 0.0
  %107 = vmatpush.msra.mxu0 0.0
  %108 = vmatpush.msra.mxu0 0.0
  %109 = vmatpush.msra.mxu0 0.0
  %110 = vmatpush.msra.mxu0 0.0
  %111 = vmatpush.msra.mxu0 0.0
  %112 = vmatpush.msra.mxu0 0.0
  %113 = vmatpush.msra.mxu0 0.0
  %114 = vmatpush.msra.mxu0 0.0
  %115 = vmatpush.msra.mxu0 0.0
  %116 = vmatpush.msra.mxu0 0.0
  %117 = vmatpush.msra.mxu0 %v60
  %118 = vmatmul.f32.gmra.mxu0 %v56
  %v119 = vpop.f32.mrf.mxu0
  %v120 = vadd.f32 %v100, %v119
  %121 = vdwg.mxu0
  %v122 = vmax.f32 %v120, 0.0
  %vm123 = vcmask 130048
  %124 = vst.msk [vmem:[%s3] sm:$0xff] %vm123, %v122
  // Predicated region
  $region14: #{distnn_forward.22} parent=0 // pred_check
    _
  $region15: #{distnn_forward.22} parent=0 // pred_check_branch
    %126 = sbr.rel (0) target = $region17
  $region16: #{distnn_forward.22} parent=0 // pred_region
    _
  $region17: #{distnn_forward.22} parent=0 // pred_fallthru
    _
  // Predicated region
  $region18: #{distnn_forward.22} parent=0 // pred_check
    _
  $region19: #{distnn_forward.22} parent=0 // pred_check_branch
    %128 = sbr.rel (0) target = $region21
  $region20: #{distnn_forward.22} parent=0 // pred_region
    _
  $region21: #{distnn_forward.22} parent=0 // pred_fallthru
    _

// kernel: distnn_forward.23
$region0: #{distnn_forward.23}
  #allocation0 [shape = 'u32[]', space=smem, size = 0x4, offset = 0x4, fixed_abs, tag = 'smem constant byte address 0x4 - core index']
  #allocation1 [shape = 'u32[72,128]{1,0:T(1,128)}', space=vmem, size = 0x9000, scoped, tag = 'internal scratch']
  #allocation2 [shape = 'f32[1,1]{1,0:T(1,128)S(1)}', space=vmem, size = 0x200, scoped, tag = 'scoped memory for distnn_forward.23']
  %s0 = inlined_call_operand.vmem [shape: f32[8,16], index: 0, kind: input, shape index: {}]
  %s1 = inlined_call_operand.vmem [shape: f32[16,1], index: 1, kind: input, shape index: {}]
  %s2 = inlined_call_operand.<no memory space> [shape: f32[1,1], index: 2, kind: input, shape index: {}]
  %s3 = inlined_call_operand.vmem [shape: f32[8,1], index: 3, kind: output, shape index: {}]
  %s4 = sld [smem:[#allocation0]]
  $region22: #{distnn_forward.23} parent=0
    _
  %s6 = ssub.s32 1, %s4
  %s7 = scalar_select 0, %s6, %s4
  %v8 = vstv %s2
  %9 = vst [vmem:[#allocation2] sm:$0x1] %v8
  // Predicated region
  $region2: #{distnn_forward.23} parent=0 // pred_check
    _
  $region3: #{distnn_forward.23} parent=0 // pred_check_branch
    %11 = sbr.rel (0) target = $region5
  $region4: #{distnn_forward.23} parent=0 // pred_region
    _
  $region5: #{distnn_forward.23} parent=0 // pred_fallthru
    _
  // Predicated region
  $region6: #{distnn_forward.23} parent=0 // pred_check
    _
  $region7: #{distnn_forward.23} parent=0 // pred_check_branch
    %13 = sbr.rel (0) target = $region9
  $region8: #{distnn_forward.23} parent=0 // pred_region
    _
  $region9: #{distnn_forward.23} parent=0 // pred_fallthru
    _
  // Predicated region
  $region10: #{distnn_forward.23} parent=0 // pred_check
    _
  $region11: #{distnn_forward.23} parent=0 // pred_check_branch
    %15 = sbr.rel (0) target = $region13
  $region12: #{distnn_forward.23} parent=0 // pred_region
    _
  $region13: #{distnn_forward.23} parent=0 // pred_fallthru
    _
  %v16 = vld [vmem:[%s0] sm:$0xff]
  %v17 = vld [vmem:[%s1] sm:$0xff]
  %v18 = vld [vmem:[%s1 + $0x8] sm:$0xff]
  %v19 = vld [vmem:[#allocation2] sm:$0x1]
  %v21 = vperm.slane %v19, 0
  %vm23 = vcmask 130048
  %v25 = vsel %vm23, %v16, 0
  %27 = vmatpush.msra.mxu0 0.0
  %28 = vmatpush.msra.mxu0 0.0
  %29 = vmatpush.msra.mxu0 0.0
  %30 = vmatpush.msra.mxu0 0.0
  %31 = vmatpush.msra.mxu0 0.0
  %32 = vmatpush.msra.mxu0 0.0
  %33 = vmatpush.msra.mxu0 0.0
  %34 = vmatpush.msra.mxu0 0.0
  %35 = vmatpush.msra.mxu0 0.0
  %36 = vmatpush.msra.mxu0 0.0
  %37 = vmatpush.msra.mxu0 0.0
  %38 = vmatpush.msra.mxu0 0.0
  %39 = vmatpush.msra.mxu0 0.0
  %40 = vmatpush.msra.mxu0 0.0
  %41 = vmatpush.msra.mxu0 %v18
  %42 = vmatpush.msra.mxu0 %v17
  %43 = vmatmul.f32.gmra.mxu0 %v25
  %v44 = vpop.f32.mrf.mxu0
  %v45 = vadd.f32 %v21, %v44
  %46 = vdwg.mxu0
  %v47 = vmax.f32 %v45, 0.0
  %vm48 = vcmask 7168
  %49 = vst.msk [vmem:[%s3] sm:$0xff] %vm48, %v47
  // Predicated region
  $region14: #{distnn_forward.23} parent=0 // pred_check
    _
  $region15: #{distnn_forward.23} parent=0 // pred_check_branch
    %51 = sbr.rel (0) target = $region17
  $region16: #{distnn_forward.23} parent=0 // pred_region
    _
  $region17: #{distnn_forward.23} parent=0 // pred_fallthru
    _
  // Predicated region
  $region18: #{distnn_forward.23} parent=0 // pred_check
    _
  $region19: #{distnn_forward.23} parent=0 // pred_check_branch
    %53 = sbr.rel (0) target = $region21
  $region20: #{distnn_forward.23} parent=0 // pred_region
    _
  $region21: #{distnn_forward.23} parent=0 // pred_fallthru
    _

</llo_original>
